<compile_context>
chip_gen: v7x
topology: tpu7x:2x2x1
jax: 0.10.0
libtpu: 0.0.40
codegen_flags: <defaults>
</compile_context>

<pallas_src>
import functools

import jax
import jax.numpy as jnp
from jax import lax
from jax.experimental import pallas as pl
from jax.experimental.pallas import tpu as pltpu

GN_EPS = 1e-5          # torch.nn.GroupNorm default eps
NUM_GROUPS = 32        # nn.GroupNorm(32, c)


# ----------------------------- halo-scratch geometry -----------------------------

def _halo_top(W):
    """Zero rows above the activation block; >= W+1 and 16-aligned so the single
    scatter store of the activation lands on an aligned sublane offset."""
    return ((W + 1 + 15) // 16) * 16


def _halo_rows(H, W):
    """Total rows of the flat halo scratch (covers the largest 3x3 tap read)."""
    return 2 * _halo_top(W) + H * W


# ----------------------------- in-kernel helpers (traced inline) -----------------------------

def _gn_swish(x, gamma, beta, m, mt, cnt):
    """GroupNorm (affine) + Swish on a flat (HW, C) f32 block.

    Two-pass statistics: group mean via one-hot channel->group membership matmuls,
    then the variance from centered values (no E[x^2]-E[x]^2 cancellation). All f32.
    """
    s = jnp.sum(x, axis=0, keepdims=True)                                 # (1, C)
    gmean = jnp.dot(s, m, preferred_element_type=jnp.float32) / cnt       # (1, G)
    mean_c = jnp.dot(gmean, mt, preferred_element_type=jnp.float32)       # (1, C)
    xc = x - mean_c
    ss = jnp.sum(xc * xc, axis=0, keepdims=True)                          # (1, C)
    gvar = jnp.maximum(jnp.dot(ss, m, preferred_element_type=jnp.float32) / cnt, 0.0)
    var_c = jnp.dot(gvar, mt, preferred_element_type=jnp.float32)         # (1, C)
    y = xc * lax.rsqrt(var_c + GN_EPS) * gamma + beta
    return y * jax.nn.sigmoid(y)                                          # Swish (f32)


def _zero_halo_borders(apf_ref, H, W):
    """Zero ONLY the border rows of the halo scratch (the middle HW rows are fully
    overwritten by the activation scatter every step, so clearing them is waste)."""
    top = _halo_top(W)
    HW = H * W
    rows, cols = apf_ref.shape
    bot = rows - top - HW
    apf_ref[pl.ds(0, top), :] = jnp.zeros((top, cols), apf_ref.dtype)
    apf_ref[pl.ds(top + HW, bot), :] = jnp.zeros((bot, cols), apf_ref.dtype)


def _edge_masks(H, W):
    """In-kernel (HW, 1) f32 masks: 0 where the left / right 3x3 tap falls outside
    the image row.  Built from a 2-D iota -- no lane-padded HBM-streamed inputs."""
    col = lax.broadcasted_iota(jnp.int32, (H * W, 1), 0) % W
    ml = (col != 0).astype(jnp.float32)
    mr = (col != (W - 1)).astype(jnp.float32)
    return ml, mr


def _conv3x3_flat(a, apf_ref, w_ref, ml, mr, H, W, cout):
    """3x3 / stride-1 / pad-1 conv on a flat (H*W, Cin) f32 activation `a`.

    `a` is scattered ONCE into the row-padded flat VMEM scratch (whose border rows
    are pre-zeroed), so each of the 9 taps becomes a contiguous sublane-offset load
    that feeds the MXU directly -- no HBM-level padding, no per-tap strided-slice
    + reshape copies.  Left/right edge taps are corrected with the (HW,1) masks.
    MXU operands are bf16, accumulation is f32.
    """
    HW = H * W
    top = _halo_top(W)
    base = top - W - 1          # source flat index = out_index + base + dy*W + dx
    apf_ref[pl.ds(top, HW), :] = a
    acc = jnp.zeros((HW, cout), jnp.float32)
    for dy in range(3):
        for dx in range(3):
            patch = apf_ref[pl.ds(base + dy * W + dx, HW), :]
            if dx == 0:                       # source column x-1 invalid at x == 0
                patch = patch * ml
            elif dx == 2:                     # source column x+1 invalid at x == W-1
                patch = patch * mr
            acc = acc + jnp.dot(patch.astype(jnp.bfloat16), w_ref[dy, dx],
                                preferred_element_type=jnp.float32)
    return acc


# ----------------------------- fused Pallas kernel -----------------------------

def _fused_body(x_ref, g1_ref, be1_ref, m1_ref, m1t_ref, w1_ref, cb1_ref,
                g2_ref, be2_ref, m2_ref, m2t_ref, w2_ref, cb2_ref,
                apf1_ref, apf2_ref, H, W):
    """GN1+Swish+Conv1 -> GN2+Swish+Conv2 for one batch element; h1 never leaves
    VMEM.  Returns (x_f32, conv2_acc_f32) for the shortcut + residual add."""
    HW = H * W
    cin = x_ref.shape[2]
    cout = w1_ref.shape[3]
    G = m1_ref.shape[1]

    _zero_halo_borders(apf1_ref, H, W)
    _zero_halo_borders(apf2_ref, H, W)
    ml, mr = _edge_masks(H, W)

    x = x_ref[0]                                                     # (HW, Cin) f32
    a1 = _gn_swish(x, g1_ref[...], be1_ref[...], m1_ref[...], m1t_ref[...],
                   float(HW * (cin // G)))
    h1 = _conv3x3_flat(a1, apf1_ref, w1_ref, ml, mr, H, W, cout) + cb1_ref[...]
    a2 = _gn_swish(h1, g2_ref[...], be2_ref[...], m2_ref[...], m2t_ref[...],
                   float(HW * (cout // G)))
    acc = _conv3x3_flat(a2, apf2_ref, w2_ref, ml, mr, H, W, cout) + cb2_ref[...]
    return x, acc


def _fused_kernel_proj(x_ref, g1_ref, be1_ref, m1_ref, m1t_ref, w1_ref, cb1_ref,
                       g2_ref, be2_ref, m2_ref, m2t_ref, w2_ref, cb2_ref,
                       wsc_ref, bsc_ref, o_ref, apf1_ref, apf2_ref, *, H, W):
    """Fused block with a 1x1-conv shortcut (c_in != c_out)."""
    x, acc = _fused_body(x_ref, g1_ref, be1_ref, m1_ref, m1t_ref, w1_ref, cb1_ref,
                         g2_ref, be2_ref, m2_ref, m2t_ref, w2_ref, cb2_ref,
                         apf1_ref, apf2_ref, H, W)
    sc = jnp.dot(x.astype(jnp.bfloat16), wsc_ref[...],
                 preferred_element_type=jnp.float32) + bsc_ref[...]
    o_ref[0] = (acc + sc).astype(o_ref.dtype)


def _fused_kernel_id(x_ref, g1_ref, be1_ref, m1_ref, m1t_ref, w1_ref, cb1_ref,
                     g2_ref, be2_ref, m2_ref, m2t_ref, w2_ref, cb2_ref,
                     o_ref, apf1_ref, apf2_ref, *, H, W):
    """Fused block with an identity shortcut (c_in == c_out)."""
    x, acc = _fused_body(x_ref, g1_ref, be1_ref, m1_ref, m1t_ref, w1_ref, cb1_ref,
                         g2_ref, be2_ref, m2_ref, m2t_ref, w2_ref, cb2_ref,
                         apf1_ref, apf2_ref, H, W)
    o_ref[0] = (acc + x).astype(o_ref.dtype)


# ----------------------------- VMEM budget -----------------------------

def _round_up(x, m):
    return ((x + m - 1) // m) * m


def _padded_vmem_bytes(shape, dtype):
    """Approximate VMEM footprint of one buffer: last dim padded to 128 lanes,
    second-to-last padded to this dtype's sublane tile."""
    itemsize = jnp.dtype(dtype).itemsize
    dims = list(shape) if len(shape) >= 2 else [1] + list(shape)
    dims[-1] = _round_up(dims[-1], 128)
    dims[-2] = _round_up(dims[-2], 8 * max(1, 4 // itemsize))
    n = 1
    for d in dims:
        n *= d
    return n * itemsize


def _vmem_limit(block_shapes, scratch_shapes):
    """Scoped-VMEM request: double-buffered blocks + scratch, 2x headroom, clamped
    to 64 MiB so the request is valid on every generation (v7x physical = 64 MiB)."""
    blocks = sum(_padded_vmem_bytes(s, d) for s, d in block_shapes)
    scratch = sum(_padded_vmem_bytes(s, d) for s, d in scratch_shapes)
    est = 2 * blocks + scratch
    return int(min(max(2 * est, 16 * 1024 * 1024), 64 * 1024 * 1024))


# ----------------------------- pallas_call wrapper -----------------------------

def _fused_call(x, g1, be1, m1, m1t, w1, cb1, g2, be2, m2, m2t, w2, cb2,
                wsc, bsc, H, W):
    N, HW, Cin = x.shape
    Cout = w1.shape[3]
    G = m1.shape[1]
    conv_sc = wsc is not None
    kern = functools.partial(_fused_kernel_proj if conv_sc else _fused_kernel_id,
                             H=H, W=W)

    in_specs = [
        pl.BlockSpec((1, HW, Cin), lambda n: (n, 0, 0)),            # x
        pl.BlockSpec((1, Cin), lambda n: (0, 0)),                   # gn1 gamma
        pl.BlockSpec((1, Cin), lambda n: (0, 0)),                   # gn1 beta
        pl.BlockSpec((Cin, G), lambda n: (0, 0)),                   # group membership 1
        pl.BlockSpec((G, Cin), lambda n: (0, 0)),                   # its transpose
        pl.BlockSpec((3, 3, Cin, Cout), lambda n: (0, 0, 0, 0)),    # w1 (bf16)
        pl.BlockSpec((1, Cout), lambda n: (0, 0)),                  # b1
        pl.BlockSpec((1, Cout), lambda n: (0, 0)),                  # gn2 gamma
        pl.BlockSpec((1, Cout), lambda n: (0, 0)),                  # gn2 beta
        pl.BlockSpec((Cout, G), lambda n: (0, 0)),                  # group membership 2
        pl.BlockSpec((G, Cout), lambda n: (0, 0)),                  # its transpose
        pl.BlockSpec((3, 3, Cout, Cout), lambda n: (0, 0, 0, 0)),   # w2 (bf16)
        pl.BlockSpec((1, Cout), lambda n: (0, 0)),                  # b2
    ]
    args = [x, g1, be1, m1, m1t, w1, cb1, g2, be2, m2, m2t, w2, cb2]
    if conv_sc:
        in_specs += [pl.BlockSpec((Cin, Cout), lambda n: (0, 0)),   # 1x1 shortcut w (bf16)
                     pl.BlockSpec((1, Cout), lambda n: (0, 0))]     # shortcut bias
        args += [wsc, bsc]

    rows = _halo_rows(H, W)
    scratch_shapes_dtypes = [((rows, Cin), jnp.float32),            # conv1 halo scratch
                             ((rows, Cout), jnp.float32)]           # conv2 halo scratch
    vmem_limit = _vmem_limit(
        [((HW, Cin), jnp.float32), ((HW, Cout), jnp.float32),
         ((3, 3, Cin, Cout), jnp.bfloat16), ((3, 3, Cout, Cout), jnp.bfloat16),
         ((Cin, G), jnp.float32), ((G, Cin), jnp.float32),
         ((Cout, G), jnp.float32), ((G, Cout), jnp.float32),
         ((Cin, Cout), jnp.bfloat16)],
        scratch_shapes_dtypes)

    return pl.pallas_call(
        kern,
        out_shape=jax.ShapeDtypeStruct((N, HW, Cout), jnp.float32),
        grid=(N,),
        in_specs=in_specs,
        out_specs=pl.BlockSpec((1, HW, Cout), lambda n: (n, 0, 0)),
        scratch_shapes=[pltpu.VMEM(s, d) for s, d in scratch_shapes_dtypes],
        compiler_params=pltpu.CompilerParams(
            dimension_semantics=("parallel",),
            vmem_limit_bytes=vmem_limit),
    )(*args)


# ----------------------------- module forward -----------------------------

def _group_matrices(c, g):
    """One-hot channel->group membership matrix (c, g) and its transpose."""
    m = (jnp.arange(c)[:, None] // (c // g) == jnp.arange(g)[None, :]).astype(jnp.float32)
    return m, m.T


def init_params(key, c_in, c_out):
    """Deterministic synthetic parameters (PyTorch-style init, HWIO conv weights)."""
    ks = jax.random.split(key, 6)

    def conv_w(k, kh, kw, ci, co):
        bound = 1.0 / (ci * kh * kw) ** 0.5
        return jax.random.uniform(k, (kh, kw, ci, co), jnp.float32, -bound, bound)

    def conv_b(k, ci, kh, kw, co):
        bound = 1.0 / (ci * kh * kw) ** 0.5
        return jax.random.uniform(k, (1, co), jnp.float32, -bound, bound)

    params = {
        "gn1_gamma": jnp.ones((1, c_in), jnp.float32),
        "gn1_beta": jnp.zeros((1, c_in), jnp.float32),
        "w1": conv_w(ks[0], 3, 3, c_in, c_out),
        "b1": conv_b(ks[1], c_in, 3, 3, c_out),
        "gn2_gamma": jnp.ones((1, c_out), jnp.float32),
        "gn2_beta": jnp.zeros((1, c_out), jnp.float32),
        "w2": conv_w(ks[2], 3, 3, c_out, c_out),
        "b2": conv_b(ks[3], c_out, 3, 3, c_out),
    }
    if c_in != c_out:
        params["wsc"] = conv_w(ks[4], 1, 1, c_in, c_out).reshape(c_in, c_out)
        params["bsc"] = conv_b(ks[5], c_in, 1, 1, c_out)
    return params


def residual_block_forward(x_nchw, params, c_in, c_out, num_groups=NUM_GROUPS):
    """Exact forward of the PyTorch ResidualBlock. Input/output are NCHW."""
    N, C, H, W = x_nchw.shape
    # NCHW -> NHWC -> flat (N, HW, C); the reshape is free on the contiguous NHWC array.
    x = jnp.transpose(x_nchw, (0, 2, 3, 1)).astype(jnp.float32).reshape(N, H * W, c_in)

    m1, m1t = _group_matrices(c_in, num_groups)
    m2, m2t = _group_matrices(c_out, num_groups)

    w1 = params["w1"].astype(jnp.bfloat16)    # bf16 MXU operands (f32 accumulate)
    w2 = params["w2"].astype(jnp.bfloat16)
    if c_in != c_out:
        wsc = params["wsc"].astype(jnp.bfloat16)
        bsc = params["bsc"]
    else:
        wsc, bsc = None, None

    out = _fused_call(x, params["gn1_gamma"], params["gn1_beta"], m1, m1t, w1,
                      params["b1"], params["gn2_gamma"], params["gn2_beta"], m2, m2t,
                      w2, params["b2"], wsc, bsc, H, W)
    return jnp.transpose(out.reshape(N, H, W, c_out), (0, 3, 1, 2))   # -> NCHW


# ----------------------------- pure-JAX reference -----------------------------

def _reference_forward(x_nchw, params, c_in, c_out, num_groups=NUM_GROUPS):
    def gn(x, gamma, beta):
        n, c, h, w = x.shape
        g = num_groups
        xg = x.reshape(n, g, c // g, h, w)
        mean = xg.mean(axis=(2, 3, 4), keepdims=True)
        var = xg.var(axis=(2, 3, 4), keepdims=True)
        xn = ((xg - mean) / jnp.sqrt(var + GN_EPS)).reshape(n, c, h, w)
        return xn * gamma.reshape(1, c, 1, 1) + beta.reshape(1, c, 1, 1)

    def swish(x):
        return x * jax.nn.sigmoid(x)

    def conv(x, w_hwio, b, pad):
        y = lax.conv_general_dilated(x, w_hwio, (1, 1), [(pad, pad), (pad, pad)],
                                     dimension_numbers=("NCHW", "HWIO", "NCHW"))
        return y + b.reshape(1, -1, 1, 1)

    h = conv(swish(gn(x_nchw, params["gn1_gamma"], params["gn1_beta"])),
             params["w1"], params["b1"], 1)
    h = conv(swish(gn(h, params["gn2_gamma"], params["gn2_beta"])),
             params["w2"], params["b2"], 1)
    if c_in != c_out:
        sc = conv(x_nchw, params["wsc"].reshape(1, 1, c_in, c_out), params["bsc"], 0)
    else:
        sc = x_nchw
    return h + sc


# ----------------------------- main -----------------------------

if __name__ == "__main__":
    key = jax.random.PRNGKey(0)
    kx, kp, kx2, kp2 = jax.random.split(key, 4)

    # Case 1: c_in != c_out (1x1-conv shortcut). GroupNorm(32, C) needs C % 32 == 0.
    N, C_IN, C_OUT, H, W = 2, 32, 64, 8, 8
    x = jax.random.normal(kx, (N, C_IN, H, W), jnp.float32)
    params = init_params(kp, C_IN, C_OUT)
    fwd = jax.jit(functools.partial(residual_block_forward, c_in=C_IN, c_out=C_OUT))
    out = jax.block_until_ready(fwd(x, params))
    ref = _reference_forward(x, params, C_IN, C_OUT)
    assert out.shape == (N, C_OUT, H, W), out.shape
    err = float(jnp.max(jnp.abs(out - ref)))
    # bf16 MXU operands (f32 accumulation / f32 intermediates) => mixed-precision tolerance.
    assert jnp.allclose(out, ref, atol=2e-2, rtol=2e-2), f"proj path max abs err {err}"

    # Case 2: c_in == c_out (identity shortcut).
    x2 = jax.random.normal(kx2, (N, C_IN, H, W), jnp.float32)
    params2 = init_params(kp2, C_IN, C_IN)
    fwd2 = jax.jit(functools.partial(residual_block_forward, c_in=C_IN, c_out=C_IN))
    out2 = jax.block_until_ready(fwd2(x2, params2))
    ref2 = _reference_forward(x2, params2, C_IN, C_IN)
    err2 = float(jnp.max(jnp.abs(out2 - ref2)))
    assert jnp.allclose(out2, ref2, atol=2e-2, rtol=2e-2), f"identity path max abs err {err2}"

    print("KERNEL_OK")
</pallas_src>

<mosaic_0001>
module attributes {stable_mosaic.version = 11 : i64} {
  func.func @_fused_kernel_proj(%arg0: i32, %arg1: memref<1x64x32xf32, #tpu.memory_space<vmem>>, %arg2: memref<1x32xf32, #tpu.memory_space<vmem>>, %arg3: memref<1x32xf32, #tpu.memory_space<vmem>>, %arg4: memref<32x32xf32, #tpu.memory_space<vmem>>, %arg5: memref<32x32xf32, #tpu.memory_space<vmem>>, %arg6: memref<3x3x32x64xbf16, #tpu.memory_space<vmem>>, %arg7: memref<1x64xf32, #tpu.memory_space<vmem>>, %arg8: memref<1x64xf32, #tpu.memory_space<vmem>>, %arg9: memref<1x64xf32, #tpu.memory_space<vmem>>, %arg10: memref<64x32xf32, #tpu.memory_space<vmem>>, %arg11: memref<32x64xf32, #tpu.memory_space<vmem>>, %arg12: memref<3x3x64x64xbf16, #tpu.memory_space<vmem>>, %arg13: memref<1x64xf32, #tpu.memory_space<vmem>>, %arg14: memref<32x64xbf16, #tpu.memory_space<vmem>>, %arg15: memref<1x64xf32, #tpu.memory_space<vmem>>, %arg16: memref<1x64x64xf32, #tpu.memory_space<vmem>>, %arg17: memref<96x32xf32, #tpu.memory_space<vmem>>, %arg18: memref<96x64xf32, #tpu.memory_space<vmem>>) attributes {dimension_semantics = [#tpu.dimension_semantics<parallel>], iteration_bounds = array<i64: 2>, scalar_prefetch = 0 : i64, scratch_operands = 2 : i64, tpu.core_type = #tpu.core_type<tc>, window_params = [{transform_indices = @transform_0, window_bounds = array<i64: 1, 64, 32>}, {pipeline_mode = #tpu.pipeline_mode<synchronous>, transform_indices = @transform_1, window_bounds = array<i64: 1, 32>}, {pipeline_mode = #tpu.pipeline_mode<synchronous>, transform_indices = @transform_2, window_bounds = array<i64: 1, 32>}, {pipeline_mode = #tpu.pipeline_mode<synchronous>, transform_indices = @transform_3, window_bounds = array<i64: 32, 32>}, {pipeline_mode = #tpu.pipeline_mode<synchronous>, transform_indices = @transform_4, window_bounds = array<i64: 32, 32>}, {pipeline_mode = #tpu.pipeline_mode<synchronous>, transform_indices = @transform_5, window_bounds = array<i64: 3, 3, 32, 64>}, {pipeline_mode = #tpu.pipeline_mode<synchronous>, transform_indices = @transform_6, window_bounds = array<i64: 1, 64>}, {pipeline_mode = #tpu.pipeline_mode<synchronous>, transform_indices = @transform_7, window_bounds = array<i64: 1, 64>}, {pipeline_mode = #tpu.pipeline_mode<synchronous>, transform_indices = @transform_8, window_bounds = array<i64: 1, 64>}, {pipeline_mode = #tpu.pipeline_mode<synchronous>, transform_indices = @transform_9, window_bounds = array<i64: 64, 32>}, {pipeline_mode = #tpu.pipeline_mode<synchronous>, transform_indices = @transform_10, window_bounds = array<i64: 32, 64>}, {pipeline_mode = #tpu.pipeline_mode<synchronous>, transform_indices = @transform_11, window_bounds = array<i64: 3, 3, 64, 64>}, {pipeline_mode = #tpu.pipeline_mode<synchronous>, transform_indices = @transform_12, window_bounds = array<i64: 1, 64>}, {pipeline_mode = #tpu.pipeline_mode<synchronous>, transform_indices = @transform_13, window_bounds = array<i64: 32, 64>}, {pipeline_mode = #tpu.pipeline_mode<synchronous>, transform_indices = @transform_14, window_bounds = array<i64: 1, 64>}, {transform_indices = @transform_15, window_bounds = array<i64: 1, 64, 64>}]} {
    %cst = arith.constant 0.000000e+00 : f32
    %0 = vector.broadcast %cst : f32 to vector<16x32xf32>
    %c0 = arith.constant 0 : index
    %c0_0 = arith.constant 0 : index
    %1 = vector.load %arg17[%c0, %c0_0] : memref<96x32xf32, #tpu.memory_space<vmem>>, vector<16x32xf32>
    tpu.vector_store %arg17[%c0, %c0_0], %0 {strides = array<i32>} : memref<96x32xf32, #tpu.memory_space<vmem>>, vector<16x32xf32>,
    %cst_1 = arith.constant 0.000000e+00 : f32
    %2 = vector.broadcast %cst_1 : f32 to vector<16x32xf32>
    %c80 = arith.constant 80 : index
    %c0_2 = arith.constant 0 : index
    %3 = vector.load %arg17[%c80, %c0_2] : memref<96x32xf32, #tpu.memory_space<vmem>>, vector<16x32xf32>
    tpu.vector_store %arg17[%c80, %c0_2], %2 {strides = array<i32>} : memref<96x32xf32, #tpu.memory_space<vmem>>, vector<16x32xf32>,
    %cst_3 = arith.constant 0.000000e+00 : f32
    %4 = vector.broadcast %cst_3 : f32 to vector<16x64xf32>
    %c0_4 = arith.constant 0 : index
    %c0_5 = arith.constant 0 : index
    %5 = vector.load %arg18[%c0_4, %c0_5] : memref<96x64xf32, #tpu.memory_space<vmem>>, vector<16x64xf32>
    tpu.vector_store %arg18[%c0_4, %c0_5], %4 {strides = array<i32>} : memref<96x64xf32, #tpu.memory_space<vmem>>, vector<16x64xf32>,
    %cst_6 = arith.constant 0.000000e+00 : f32
    %6 = vector.broadcast %cst_6 : f32 to vector<16x64xf32>
    %c80_7 = arith.constant 80 : index
    %c0_8 = arith.constant 0 : index
    %7 = vector.load %arg18[%c80_7, %c0_8] : memref<96x64xf32, #tpu.memory_space<vmem>>, vector<16x64xf32>
    tpu.vector_store %arg18[%c80_7, %c0_8], %6 {strides = array<i32>} : memref<96x64xf32, #tpu.memory_space<vmem>>, vector<16x64xf32>,
    %8 = tpu.iota {dimensions = array<i32: 0>} : vector<64x1xi32>
    %c8_i32 = arith.constant 8 : i32
    %c0_i32 = arith.constant 0 : i32
    %9 = arith.cmpi eq, %c8_i32, %c0_i32 : i32
    %c1_i32 = arith.constant 1 : i32
    %10 = arith.select %9, %c1_i32, %c8_i32 : i32
    %11 = vector.broadcast %10 : i32 to vector<64x1xi32>
    %12 = arith.remsi %8, %11 : vector<64x1xi32>
    %c0_i32_9 = arith.constant 0 : i32
    %13 = vector.broadcast %c0_i32_9 : i32 to vector<64x1xi32>
    %14 = arith.cmpi ne, %12, %13 : vector<64x1xi32>
    %c0_i32_10 = arith.constant 0 : i32
    %15 = vector.broadcast %c0_i32_10 : i32 to vector<64x1xi32>
    %16 = arith.cmpi slt, %12, %15 : vector<64x1xi32>
    %c0_i32_11 = arith.constant 0 : i32
    %17 = arith.cmpi slt, %10, %c0_i32_11 : i32
    %18 = vector.broadcast %17 : i1 to vector<64x1xi1>
    %19 = vector.broadcast %18 : vector<64x1xi1> to vector<64x1xi1>
    %20 = arith.xori %16, %19 : vector<64x1xi1>
    %21 = arith.andi %20, %14 : vector<64x1xi1>
    %22 = vector.broadcast %10 : i32 to vector<64x1xi32>
    %23 = arith.addi %12, %22 : vector<64x1xi32>
    %24 = arith.select %21, %23, %12 : vector<64x1xi1>, vector<64x1xi32>
    %c0_i32_12 = arith.constant 0 : i32
    %25 = vector.broadcast %c0_i32_12 : i32 to vector<64x1xi32>
    %26 = arith.cmpi ne, %24, %25 : vector<64x1xi32>
    %27 = arith.extui %26 : vector<64x1xi1> to vector<64x1xi32>
    %28 = arith.sitofp %27 : vector<64x1xi32> to vector<64x1xf32>
    %c7_i32 = arith.constant 7 : i32
    %29 = vector.broadcast %c7_i32 : i32 to vector<64x1xi32>
    %30 = arith.cmpi ne, %24, %29 : vector<64x1xi32>
    %31 = arith.extui %30 : vector<64x1xi1> to vector<64x1xi32>
    %32 = arith.sitofp %31 : vector<64x1xi32> to vector<64x1xf32>
    %c0_13 = arith.constant 0 : index
    %c0_14 = arith.constant 0 : index
    %c0_15 = arith.constant 0 : index
    %33 = vector.load %arg1[%c0_13, %c0_14, %c0_15] : memref<1x64x32xf32, #tpu.memory_space<vmem>>, vector<1x64x32xf32>
    %34 = vector.shape_cast %33 : vector<1x64x32xf32> to vector<64x32xf32>
    %c0_16 = arith.constant 0 : index
    %c0_17 = arith.constant 0 : index
    %35 = vector.load %arg2[%c0_16, %c0_17] : memref<1x32xf32, #tpu.memory_space<vmem>>, vector<1x32xf32>
    %c0_18 = arith.constant 0 : index
    %c0_19 = arith.constant 0 : index
    %36 = vector.load %arg3[%c0_18, %c0_19] : memref<1x32xf32, #tpu.memory_space<vmem>>, vector<1x32xf32>
    %c0_20 = arith.constant 0 : index
    %c0_21 = arith.constant 0 : index
    %37 = vector.load %arg4[%c0_20, %c0_21] : memref<32x32xf32, #tpu.memory_space<vmem>>, vector<32x32xf32>
    %c0_22 = arith.constant 0 : index
    %c0_23 = arith.constant 0 : index
    %38 = vector.load %arg5[%c0_22, %c0_23] : memref<32x32xf32, #tpu.memory_space<vmem>>, vector<32x32xf32>
    %cst_24 = arith.constant dense<0.000000e+00> : vector<32xf32>
    %39 = vector.multi_reduction <add>, %34, %cst_24 [0] : vector<64x32xf32> to vector<32xf32>
    %40 = vector.shape_cast %39 : vector<32xf32> to vector<1x32xf32>
    %cst_25 = arith.constant dense<0.000000e+00> : vector<1x32xf32>
    %41 = tpu.matmul %40, %37, %cst_25 {dimension_numbers = #tpu.dot_dimension_numbers<[1], [0], [0], [1], [0, 0, 1, 1], [], []>} : vector<1x32xf32>, vector<32x32xf32>, vector<1x32xf32> -> vector<1x32xf32>
    %cst_26 = arith.constant 6.400000e+01 : f32
    %42 = vector.broadcast %cst_26 : f32 to vector<1x32xf32>
    %43 = arith.divf %41, %42 : vector<1x32xf32>
    %cst_27 = arith.constant dense<0.000000e+00> : vector<1x32xf32>
    %44 = tpu.matmul %43, %38, %cst_27 {dimension_numbers = #tpu.dot_dimension_numbers<[1], [0], [0], [1], [0, 0, 1, 1], [], []>} : vector<1x32xf32>, vector<32x32xf32>, vector<1x32xf32> -> vector<1x32xf32>
    %45 = vector.broadcast %44 : vector<1x32xf32> to vector<64x32xf32>
    %46 = arith.subf %34, %45 : vector<64x32xf32>
    %47 = arith.mulf %46, %46 : vector<64x32xf32>
    %cst_28 = arith.constant dense<0.000000e+00> : vector<32xf32>
    %48 = vector.multi_reduction <add>, %47, %cst_28 [0] : vector<64x32xf32> to vector<32xf32>
    %49 = vector.shape_cast %48 : vector<32xf32> to vector<1x32xf32>
    %cst_29 = arith.constant dense<0.000000e+00> : vector<1x32xf32>
    %50 = tpu.matmul %49, %37, %cst_29 {dimension_numbers = #tpu.dot_dimension_numbers<[1], [0], [0], [1], [0, 0, 1, 1], [], []>} : vector<1x32xf32>, vector<32x32xf32>, vector<1x32xf32> -> vector<1x32xf32>
    %cst_30 = arith.constant 6.400000e+01 : f32
    %51 = vector.broadcast %cst_30 : f32 to vector<1x32xf32>
    %52 = arith.divf %50, %51 : vector<1x32xf32>
    %cst_31 = arith.constant 0.000000e+00 : f32
    %53 = vector.broadcast %cst_31 : f32 to vector<1x32xf32>
    %54 = arith.maximumf %52, %53 : vector<1x32xf32>
    %cst_32 = arith.constant dense<0.000000e+00> : vector<1x32xf32>
    %55 = tpu.matmul %54, %38, %cst_32 {dimension_numbers = #tpu.dot_dimension_numbers<[1], [0], [0], [1], [0, 0, 1, 1], [], []>} : vector<1x32xf32>, vector<32x32xf32>, vector<1x32xf32> -> vector<1x32xf32>
    %cst_33 = arith.constant 9.99999974E-6 : f32
    %56 = vector.broadcast %cst_33 : f32 to vector<1x32xf32>
    %57 = arith.addf %55, %56 : vector<1x32xf32>
    %58 = math.rsqrt %57 : vector<1x32xf32>
    %59 = vector.broadcast %58 : vector<1x32xf32> to vector<64x32xf32>
    %60 = arith.mulf %46, %59 : vector<64x32xf32>
    %61 = vector.broadcast %35 : vector<1x32xf32> to vector<64x32xf32>
    %62 = arith.mulf %60, %61 : vector<64x32xf32>
    %63 = vector.broadcast %36 : vector<1x32xf32> to vector<64x32xf32>
    %64 = arith.addf %62, %63 : vector<64x32xf32>
    %65 = arith.negf %64 : vector<64x32xf32>
    %66 = math.exp %65 : vector<64x32xf32>
    %cst_34 = arith.constant 1.000000e+00 : f32
    %67 = vector.broadcast %cst_34 : f32 to vector<64x32xf32>
    %68 = arith.addf %67, %66 : vector<64x32xf32>
    %69 = arith.divf %67, %68 : vector<64x32xf32>
    %70 = arith.mulf %64, %69 : vector<64x32xf32>
    %c16 = arith.constant 16 : index
    %c0_35 = arith.constant 0 : index
    %71 = vector.load %arg17[%c16, %c0_35] : memref<96x32xf32, #tpu.memory_space<vmem>>, vector<64x32xf32>
    tpu.vector_store %arg17[%c16, %c0_35], %70 {strides = array<i32>} : memref<96x32xf32, #tpu.memory_space<vmem>>, vector<64x32xf32>,
    %cst_36 = arith.constant 0.000000e+00 : f32
    %72 = vector.broadcast %cst_36 : f32 to vector<64x64xf32>
    %c7 = arith.constant 7 : index
    %c0_37 = arith.constant 0 : index
    %73 = vector.load %arg17[%c7, %c0_37] : memref<96x32xf32, #tpu.memory_space<vmem>>, vector<64x32xf32>
    %74 = vector.broadcast %28 : vector<64x1xf32> to vector<64x32xf32>
    %75 = arith.mulf %73, %74 : vector<64x32xf32>
    %76 = arith.truncf %75 : vector<64x32xf32> to vector<64x32xbf16>
    %c0_38 = arith.constant 0 : index
    %c0_39 = arith.constant 0 : index
    %c0_40 = arith.constant 0 : index
    %c0_41 = arith.constant 0 : index
    %77 = vector.load %arg6[%c0_38, %c0_39, %c0_40, %c0_41] : memref<3x3x32x64xbf16, #tpu.memory_space<vmem>>, vector<1x1x32x64xbf16>
    %78 = vector.shape_cast %77 : vector<1x1x32x64xbf16> to vector<32x64xbf16>
    %cst_42 = arith.constant dense<0.000000e+00> : vector<64x64xf32>
    %79 = tpu.matmul %76, %78, %cst_42 {dimension_numbers = #tpu.dot_dimension_numbers<[1], [0], [0], [1], [0, 0, 1, 1], [], []>} : vector<64x32xbf16>, vector<32x64xbf16>, vector<64x64xf32> -> vector<64x64xf32>
    %80 = arith.addf %72, %79 : vector<64x64xf32>
    %c8 = arith.constant 8 : index
    %c0_43 = arith.constant 0 : index
    %81 = vector.load %arg17[%c8, %c0_43] : memref<96x32xf32, #tpu.memory_space<vmem>>, vector<64x32xf32>
    %82 = arith.truncf %81 : vector<64x32xf32> to vector<64x32xbf16>
    %c0_44 = arith.constant 0 : index
    %c1 = arith.constant 1 : index
    %c0_45 = arith.constant 0 : index
    %c0_46 = arith.constant 0 : index
    %83 = vector.load %arg6[%c0_44, %c1, %c0_45, %c0_46] : memref<3x3x32x64xbf16, #tpu.memory_space<vmem>>, vector<1x1x32x64xbf16>
    %84 = vector.shape_cast %83 : vector<1x1x32x64xbf16> to vector<32x64xbf16>
    %cst_47 = arith.constant dense<0.000000e+00> : vector<64x64xf32>
    %85 = tpu.matmul %82, %84, %cst_47 {dimension_numbers = #tpu.dot_dimension_numbers<[1], [0], [0], [1], [0, 0, 1, 1], [], []>} : vector<64x32xbf16>, vector<32x64xbf16>, vector<64x64xf32> -> vector<64x64xf32>
    %86 = arith.addf %80, %85 : vector<64x64xf32>
    %c9 = arith.constant 9 : index
    %c0_48 = arith.constant 0 : index
    %87 = vector.load %arg17[%c9, %c0_48] : memref<96x32xf32, #tpu.memory_space<vmem>>, vector<64x32xf32>
    %88 = vector.broadcast %32 : vector<64x1xf32> to vector<64x32xf32>
    %89 = arith.mulf %87, %88 : vector<64x32xf32>
    %90 = arith.truncf %89 : vector<64x32xf32> to vector<64x32xbf16>
    %c0_49 = arith.constant 0 : index
    %c2 = arith.constant 2 : index
    %c0_50 = arith.constant 0 : index
    %c0_51 = arith.constant 0 : index
    %91 = vector.load %arg6[%c0_49, %c2, %c0_50, %c0_51] : memref<3x3x32x64xbf16, #tpu.memory_space<vmem>>, vector<1x1x32x64xbf16>
    %92 = vector.shape_cast %91 : vector<1x1x32x64xbf16> to vector<32x64xbf16>
    %cst_52 = arith.constant dense<0.000000e+00> : vector<64x64xf32>
    %93 = tpu.matmul %90, %92, %cst_52 {dimension_numbers = #tpu.dot_dimension_numbers<[1], [0], [0], [1], [0, 0, 1, 1], [], []>} : vector<64x32xbf16>, vector<32x64xbf16>, vector<64x64xf32> -> vector<64x64xf32>
    %94 = arith.addf %86, %93 : vector<64x64xf32>
    %c15 = arith.constant 15 : index
    %c0_53 = arith.constant 0 : index
    %95 = vector.load %arg17[%c15, %c0_53] : memref<96x32xf32, #tpu.memory_space<vmem>>, vector<64x32xf32>
    %96 = vector.broadcast %28 : vector<64x1xf32> to vector<64x32xf32>
    %97 = arith.mulf %95, %96 : vector<64x32xf32>
    %98 = arith.truncf %97 : vector<64x32xf32> to vector<64x32xbf16>
    %c1_54 = arith.constant 1 : index
    %c0_55 = arith.constant 0 : index
    %c0_56 = arith.constant 0 : index
    %c0_57 = arith.constant 0 : index
    %99 = vector.load %arg6[%c1_54, %c0_55, %c0_56, %c0_57] : memref<3x3x32x64xbf16, #tpu.memory_space<vmem>>, vector<1x1x32x64xbf16>
    %100 = vector.shape_cast %99 : vector<1x1x32x64xbf16> to vector<32x64xbf16>
    %cst_58 = arith.constant dense<0.000000e+00> : vector<64x64xf32>
    %101 = tpu.matmul %98, %100, %cst_58 {dimension_numbers = #tpu.dot_dimension_numbers<[1], [0], [0], [1], [0, 0, 1, 1], [], []>} : vector<64x32xbf16>, vector<32x64xbf16>, vector<64x64xf32> -> vector<64x64xf32>
    %102 = arith.addf %94, %101 : vector<64x64xf32>
    %c16_59 = arith.constant 16 : index
    %c0_60 = arith.constant 0 : index
    %103 = vector.load %arg17[%c16_59, %c0_60] : memref<96x32xf32, #tpu.memory_space<vmem>>, vector<64x32xf32>
    %104 = arith.truncf %103 : vector<64x32xf32> to vector<64x32xbf16>
    %c1_61 = arith.constant 1 : index
    %c1_62 = arith.constant 1 : index
    %c0_63 = arith.constant 0 : index
    %c0_64 = arith.constant 0 : index
    %105 = vector.load %arg6[%c1_61, %c1_62, %c0_63, %c0_64] : memref<3x3x32x64xbf16, #tpu.memory_space<vmem>>, vector<1x1x32x64xbf16>
    %106 = vector.shape_cast %105 : vector<1x1x32x64xbf16> to vector<32x64xbf16>
    %cst_65 = arith.constant dense<0.000000e+00> : vector<64x64xf32>
    %107 = tpu.matmul %104, %106, %cst_65 {dimension_numbers = #tpu.dot_dimension_numbers<[1], [0], [0], [1], [0, 0, 1, 1], [], []>} : vector<64x32xbf16>, vector<32x64xbf16>, vector<64x64xf32> -> vector<64x64xf32>
    %108 = arith.addf %102, %107 : vector<64x64xf32>
    %c17 = arith.constant 17 : index
    %c0_66 = arith.constant 0 : index
    %109 = vector.load %arg17[%c17, %c0_66] : memref<96x32xf32, #tpu.memory_space<vmem>>, vector<64x32xf32>
    %110 = vector.broadcast %32 : vector<64x1xf32> to vector<64x32xf32>
    %111 = arith.mulf %109, %110 : vector<64x32xf32>
    %112 = arith.truncf %111 : vector<64x32xf32> to vector<64x32xbf16>
    %c1_67 = arith.constant 1 : index
    %c2_68 = arith.constant 2 : index
    %c0_69 = arith.constant 0 : index
    %c0_70 = arith.constant 0 : index
    %113 = vector.load %arg6[%c1_67, %c2_68, %c0_69, %c0_70] : memref<3x3x32x64xbf16, #tpu.memory_space<vmem>>, vector<1x1x32x64xbf16>
    %114 = vector.shape_cast %113 : vector<1x1x32x64xbf16> to vector<32x64xbf16>
    %cst_71 = arith.constant dense<0.000000e+00> : vector<64x64xf32>
    %115 = tpu.matmul %112, %114, %cst_71 {dimension_numbers = #tpu.dot_dimension_numbers<[1], [0], [0], [1], [0, 0, 1, 1], [], []>} : vector<64x32xbf16>, vector<32x64xbf16>, vector<64x64xf32> -> vector<64x64xf32>
    %116 = arith.addf %108, %115 : vector<64x64xf32>
    %c23 = arith.constant 23 : index
    %c0_72 = arith.constant 0 : index
    %117 = vector.load %arg17[%c23, %c0_72] : memref<96x32xf32, #tpu.memory_space<vmem>>, vector<64x32xf32>
    %118 = vector.broadcast %28 : vector<64x1xf32> to vector<64x32xf32>
    %119 = arith.mulf %117, %118 : vector<64x32xf32>
    %120 = arith.truncf %119 : vector<64x32xf32> to vector<64x32xbf16>
    %c2_73 = arith.constant 2 : index
    %c0_74 = arith.constant 0 : index
    %c0_75 = arith.constant 0 : index
    %c0_76 = arith.constant 0 : index
    %121 = vector.load %arg6[%c2_73, %c0_74, %c0_75, %c0_76] : memref<3x3x32x64xbf16, #tpu.memory_space<vmem>>, vector<1x1x32x64xbf16>
    %122 = vector.shape_cast %121 : vector<1x1x32x64xbf16> to vector<32x64xbf16>
    %cst_77 = arith.constant dense<0.000000e+00> : vector<64x64xf32>
    %123 = tpu.matmul %120, %122, %cst_77 {dimension_numbers = #tpu.dot_dimension_numbers<[1], [0], [0], [1], [0, 0, 1, 1], [], []>} : vector<64x32xbf16>, vector<32x64xbf16>, vector<64x64xf32> -> vector<64x64xf32>
    %124 = arith.addf %116, %123 : vector<64x64xf32>
    %c24 = arith.constant 24 : index
    %c0_78 = arith.constant 0 : index
    %125 = vector.load %arg17[%c24, %c0_78] : memref<96x32xf32, #tpu.memory_space<vmem>>, vector<64x32xf32>
    %126 = arith.truncf %125 : vector<64x32xf32> to vector<64x32xbf16>
    %c2_79 = arith.constant 2 : index
    %c1_80 = arith.constant 1 : index
    %c0_81 = arith.constant 0 : index
    %c0_82 = arith.constant 0 : index
    %127 = vector.load %arg6[%c2_79, %c1_80, %c0_81, %c0_82] : memref<3x3x32x64xbf16, #tpu.memory_space<vmem>>, vector<1x1x32x64xbf16>
    %128 = vector.shape_cast %127 : vector<1x1x32x64xbf16> to vector<32x64xbf16>
    %cst_83 = arith.constant dense<0.000000e+00> : vector<64x64xf32>
    %129 = tpu.matmul %126, %128, %cst_83 {dimension_numbers = #tpu.dot_dimension_numbers<[1], [0], [0], [1], [0, 0, 1, 1], [], []>} : vector<64x32xbf16>, vector<32x64xbf16>, vector<64x64xf32> -> vector<64x64xf32>
    %130 = arith.addf %124, %129 : vector<64x64xf32>
    %c25 = arith.constant 25 : index
    %c0_84 = arith.constant 0 : index
    %131 = vector.load %arg17[%c25, %c0_84] : memref<96x32xf32, #tpu.memory_space<vmem>>, vector<64x32xf32>
    %132 = vector.broadcast %32 : vector<64x1xf32> to vector<64x32xf32>
    %133 = arith.mulf %131, %132 : vector<64x32xf32>
    %134 = arith.truncf %133 : vector<64x32xf32> to vector<64x32xbf16>
    %c2_85 = arith.constant 2 : index
    %c2_86 = arith.constant 2 : index
    %c0_87 = arith.constant 0 : index
    %c0_88 = arith.constant 0 : index
    %135 = vector.load %arg6[%c2_85, %c2_86, %c0_87, %c0_88] : memref<3x3x32x64xbf16, #tpu.memory_space<vmem>>, vector<1x1x32x64xbf16>
    %136 = vector.shape_cast %135 : vector<1x1x32x64xbf16> to vector<32x64xbf16>
    %cst_89 = arith.constant dense<0.000000e+00> : vector<64x64xf32>
    %137 = tpu.matmul %134, %136, %cst_89 {dimension_numbers = #tpu.dot_dimension_numbers<[1], [0], [0], [1], [0, 0, 1, 1], [], []>} : vector<64x32xbf16>, vector<32x64xbf16>, vector<64x64xf32> -> vector<64x64xf32>
    %138 = arith.addf %130, %137 : vector<64x64xf32>
    %c0_90 = arith.constant 0 : index
    %c0_91 = arith.constant 0 : index
    %139 = vector.load %arg7[%c0_90, %c0_91] : memref<1x64xf32, #tpu.memory_space<vmem>>, vector<1x64xf32>
    %140 = vector.broadcast %139 : vector<1x64xf32> to vector<64x64xf32>
    %141 = arith.addf %138, %140 : vector<64x64xf32>
    %c0_92 = arith.constant 0 : index
    %c0_93 = arith.constant 0 : index
    %142 = vector.load %arg8[%c0_92, %c0_93] : memref<1x64xf32, #tpu.memory_space<vmem>>, vector<1x64xf32>
    %c0_94 = arith.constant 0 : index
    %c0_95 = arith.constant 0 : index
    %143 = vector.load %arg9[%c0_94, %c0_95] : memref<1x64xf32, #tpu.memory_space<vmem>>, vector<1x64xf32>
    %c0_96 = arith.constant 0 : index
    %c0_97 = arith.constant 0 : index
    %144 = vector.load %arg10[%c0_96, %c0_97] : memref<64x32xf32, #tpu.memory_space<vmem>>, vector<64x32xf32>
    %c0_98 = arith.constant 0 : index
    %c0_99 = arith.constant 0 : index
    %145 = vector.load %arg11[%c0_98, %c0_99] : memref<32x64xf32, #tpu.memory_space<vmem>>, vector<32x64xf32>
    %cst_100 = arith.constant dense<0.000000e+00> : vector<64xf32>
    %146 = vector.multi_reduction <add>, %141, %cst_100 [0] : vector<64x64xf32> to vector<64xf32>
    %147 = vector.shape_cast %146 : vector<64xf32> to vector<1x64xf32>
    %cst_101 = arith.constant dense<0.000000e+00> : vector<1x32xf32>
    %148 = tpu.matmul %147, %144, %cst_101 {dimension_numbers = #tpu.dot_dimension_numbers<[1], [0], [0], [1], [0, 0, 1, 1], [], []>} : vector<1x64xf32>, vector<64x32xf32>, vector<1x32xf32> -> vector<1x32xf32>
    %cst_102 = arith.constant 1.280000e+02 : f32
    %149 = vector.broadcast %cst_102 : f32 to vector<1x32xf32>
    %150 = arith.divf %148, %149 : vector<1x32xf32>
    %cst_103 = arith.constant dense<0.000000e+00> : vector<1x64xf32>
    %151 = tpu.matmul %150, %145, %cst_103 {dimension_numbers = #tpu.dot_dimension_numbers<[1], [0], [0], [1], [0, 0, 1, 1], [], []>} : vector<1x32xf32>, vector<32x64xf32>, vector<1x64xf32> -> vector<1x64xf32>
    %152 = vector.broadcast %151 : vector<1x64xf32> to vector<64x64xf32>
    %153 = arith.subf %141, %152 : vector<64x64xf32>
    %154 = arith.mulf %153, %153 : vector<64x64xf32>
    %cst_104 = arith.constant dense<0.000000e+00> : vector<64xf32>
    %155 = vector.multi_reduction <add>, %154, %cst_104 [0] : vector<64x64xf32> to vector<64xf32>
    %156 = vector.shape_cast %155 : vector<64xf32> to vector<1x64xf32>
    %cst_105 = arith.constant dense<0.000000e+00> : vector<1x32xf32>
    %157 = tpu.matmul %156, %144, %cst_105 {dimension_numbers = #tpu.dot_dimension_numbers<[1], [0], [0], [1], [0, 0, 1, 1], [], []>} : vector<1x64xf32>, vector<64x32xf32>, vector<1x32xf32> -> vector<1x32xf32>
    %cst_106 = arith.constant 1.280000e+02 : f32
    %158 = vector.broadcast %cst_106 : f32 to vector<1x32xf32>
    %159 = arith.divf %157, %158 : vector<1x32xf32>
    %cst_107 = arith.constant 0.000000e+00 : f32
    %160 = vector.broadcast %cst_107 : f32 to vector<1x32xf32>
    %161 = arith.maximumf %159, %160 : vector<1x32xf32>
    %cst_108 = arith.constant dense<0.000000e+00> : vector<1x64xf32>
    %162 = tpu.matmul %161, %145, %cst_108 {dimension_numbers = #tpu.dot_dimension_numbers<[1], [0], [0], [1], [0, 0, 1, 1], [], []>} : vector<1x32xf32>, vector<32x64xf32>, vector<1x64xf32> -> vector<1x64xf32>
    %cst_109 = arith.constant 9.99999974E-6 : f32
    %163 = vector.broadcast %cst_109 : f32 to vector<1x64xf32>
    %164 = arith.addf %162, %163 : vector<1x64xf32>
    %165 = math.rsqrt %164 : vector<1x64xf32>
    %166 = vector.broadcast %165 : vector<1x64xf32> to vector<64x64xf32>
    %167 = arith.mulf %153, %166 : vector<64x64xf32>
    %168 = vector.broadcast %142 : vector<1x64xf32> to vector<64x64xf32>
    %169 = arith.mulf %167, %168 : vector<64x64xf32>
    %170 = vector.broadcast %143 : vector<1x64xf32> to vector<64x64xf32>
    %171 = arith.addf %169, %170 : vector<64x64xf32>
    %172 = arith.negf %171 : vector<64x64xf32>
    %173 = math.exp %172 : vector<64x64xf32>
    %cst_110 = arith.constant 1.000000e+00 : f32
    %174 = vector.broadcast %cst_110 : f32 to vector<64x64xf32>
    %175 = arith.addf %174, %173 : vector<64x64xf32>
    %176 = arith.divf %174, %175 : vector<64x64xf32>
    %177 = arith.mulf %171, %176 : vector<64x64xf32>
    %c16_111 = arith.constant 16 : index
    %c0_112 = arith.constant 0 : index
    %178 = vector.load %arg18[%c16_111, %c0_112] : memref<96x64xf32, #tpu.memory_space<vmem>>, vector<64x64xf32>
    tpu.vector_store %arg18[%c16_111, %c0_112], %177 {strides = array<i32>} : memref<96x64xf32, #tpu.memory_space<vmem>>, vector<64x64xf32>,
    %cst_113 = arith.constant 0.000000e+00 : f32
    %179 = vector.broadcast %cst_113 : f32 to vector<64x64xf32>
    %c7_114 = arith.constant 7 : index
    %c0_115 = arith.constant 0 : index
    %180 = vector.load %arg18[%c7_114, %c0_115] : memref<96x64xf32, #tpu.memory_space<vmem>>, vector<64x64xf32>
    %181 = vector.broadcast %28 : vector<64x1xf32> to vector<64x64xf32>
    %182 = arith.mulf %180, %181 : vector<64x64xf32>
    %183 = arith.truncf %182 : vector<64x64xf32> to vector<64x64xbf16>
    %c0_116 = arith.constant 0 : index
    %c0_117 = arith.constant 0 : index
    %c0_118 = arith.constant 0 : index
    %c0_119 = arith.constant 0 : index
    %184 = vector.load %arg12[%c0_116, %c0_117, %c0_118, %c0_119] : memref<3x3x64x64xbf16, #tpu.memory_space<vmem>>, vector<1x1x64x64xbf16>
    %185 = vector.shape_cast %184 : vector<1x1x64x64xbf16> to vector<64x64xbf16>
    %cst_120 = arith.constant dense<0.000000e+00> : vector<64x64xf32>
    %186 = tpu.matmul %183, %185, %cst_120 {dimension_numbers = #tpu.dot_dimension_numbers<[1], [0], [0], [1], [0, 0, 1, 1], [], []>} : vector<64x64xbf16>, vector<64x64xbf16>, vector<64x64xf32> -> vector<64x64xf32>
    %187 = arith.addf %179, %186 : vector<64x64xf32>
    %c8_121 = arith.constant 8 : index
    %c0_122 = arith.constant 0 : index
    %188 = vector.load %arg18[%c8_121, %c0_122] : memref<96x64xf32, #tpu.memory_space<vmem>>, vector<64x64xf32>
    %189 = arith.truncf %188 : vector<64x64xf32> to vector<64x64xbf16>
    %c0_123 = arith.constant 0 : index
    %c1_124 = arith.constant 1 : index
    %c0_125 = arith.constant 0 : index
    %c0_126 = arith.constant 0 : index
    %190 = vector.load %arg12[%c0_123, %c1_124, %c0_125, %c0_126] : memref<3x3x64x64xbf16, #tpu.memory_space<vmem>>, vector<1x1x64x64xbf16>
    %191 = vector.shape_cast %190 : vector<1x1x64x64xbf16> to vector<64x64xbf16>
    %cst_127 = arith.constant dense<0.000000e+00> : vector<64x64xf32>
    %192 = tpu.matmul %189, %191, %cst_127 {dimension_numbers = #tpu.dot_dimension_numbers<[1], [0], [0], [1], [0, 0, 1, 1], [], []>} : vector<64x64xbf16>, vector<64x64xbf16>, vector<64x64xf32> -> vector<64x64xf32>
    %193 = arith.addf %187, %192 : vector<64x64xf32>
    %c9_128 = arith.constant 9 : index
    %c0_129 = arith.constant 0 : index
    %194 = vector.load %arg18[%c9_128, %c0_129] : memref<96x64xf32, #tpu.memory_space<vmem>>, vector<64x64xf32>
    %195 = vector.broadcast %32 : vector<64x1xf32> to vector<64x64xf32>
    %196 = arith.mulf %194, %195 : vector<64x64xf32>
    %197 = arith.truncf %196 : vector<64x64xf32> to vector<64x64xbf16>
    %c0_130 = arith.constant 0 : index
    %c2_131 = arith.constant 2 : index
    %c0_132 = arith.constant 0 : index
    %c0_133 = arith.constant 0 : index
    %198 = vector.load %arg12[%c0_130, %c2_131, %c0_132, %c0_133] : memref<3x3x64x64xbf16, #tpu.memory_space<vmem>>, vector<1x1x64x64xbf16>
    %199 = vector.shape_cast %198 : vector<1x1x64x64xbf16> to vector<64x64xbf16>
    %cst_134 = arith.constant dense<0.000000e+00> : vector<64x64xf32>
    %200 = tpu.matmul %197, %199, %cst_134 {dimension_numbers = #tpu.dot_dimension_numbers<[1], [0], [0], [1], [0, 0, 1, 1], [], []>} : vector<64x64xbf16>, vector<64x64xbf16>, vector<64x64xf32> -> vector<64x64xf32>
    %201 = arith.addf %193, %200 : vector<64x64xf32>
    %c15_135 = arith.constant 15 : index
    %c0_136 = arith.constant 0 : index
    %202 = vector.load %arg18[%c15_135, %c0_136] : memref<96x64xf32, #tpu.memory_space<vmem>>, vector<64x64xf32>
    %203 = vector.broadcast %28 : vector<64x1xf32> to vector<64x64xf32>
    %204 = arith.mulf %202, %203 : vector<64x64xf32>
    %205 = arith.truncf %204 : vector<64x64xf32> to vector<64x64xbf16>
    %c1_137 = arith.constant 1 : index
    %c0_138 = arith.constant 0 : index
    %c0_139 = arith.constant 0 : index
    %c0_140 = arith.constant 0 : index
    %206 = vector.load %arg12[%c1_137, %c0_138, %c0_139, %c0_140] : memref<3x3x64x64xbf16, #tpu.memory_space<vmem>>, vector<1x1x64x64xbf16>
    %207 = vector.shape_cast %206 : vector<1x1x64x64xbf16> to vector<64x64xbf16>
    %cst_141 = arith.constant dense<0.000000e+00> : vector<64x64xf32>
    %208 = tpu.matmul %205, %207, %cst_141 {dimension_numbers = #tpu.dot_dimension_numbers<[1], [0], [0], [1], [0, 0, 1, 1], [], []>} : vector<64x64xbf16>, vector<64x64xbf16>, vector<64x64xf32> -> vector<64x64xf32>
    %209 = arith.addf %201, %208 : vector<64x64xf32>
    %c16_142 = arith.constant 16 : index
    %c0_143 = arith.constant 0 : index
    %210 = vector.load %arg18[%c16_142, %c0_143] : memref<96x64xf32, #tpu.memory_space<vmem>>, vector<64x64xf32>
    %211 = arith.truncf %210 : vector<64x64xf32> to vector<64x64xbf16>
    %c1_144 = arith.constant 1 : index
    %c1_145 = arith.constant 1 : index
    %c0_146 = arith.constant 0 : index
    %c0_147 = arith.constant 0 : index
    %212 = vector.load %arg12[%c1_144, %c1_145, %c0_146, %c0_147] : memref<3x3x64x64xbf16, #tpu.memory_space<vmem>>, vector<1x1x64x64xbf16>
    %213 = vector.shape_cast %212 : vector<1x1x64x64xbf16> to vector<64x64xbf16>
    %cst_148 = arith.constant dense<0.000000e+00> : vector<64x64xf32>
    %214 = tpu.matmul %211, %213, %cst_148 {dimension_numbers = #tpu.dot_dimension_numbers<[1], [0], [0], [1], [0, 0, 1, 1], [], []>} : vector<64x64xbf16>, vector<64x64xbf16>, vector<64x64xf32> -> vector<64x64xf32>
    %215 = arith.addf %209, %214 : vector<64x64xf32>
    %c17_149 = arith.constant 17 : index
    %c0_150 = arith.constant 0 : index
    %216 = vector.load %arg18[%c17_149, %c0_150] : memref<96x64xf32, #tpu.memory_space<vmem>>, vector<64x64xf32>
    %217 = vector.broadcast %32 : vector<64x1xf32> to vector<64x64xf32>
    %218 = arith.mulf %216, %217 : vector<64x64xf32>
    %219 = arith.truncf %218 : vector<64x64xf32> to vector<64x64xbf16>
    %c1_151 = arith.constant 1 : index
    %c2_152 = arith.constant 2 : index
    %c0_153 = arith.constant 0 : index
    %c0_154 = arith.constant 0 : index
    %220 = vector.load %arg12[%c1_151, %c2_152, %c0_153, %c0_154] : memref<3x3x64x64xbf16, #tpu.memory_space<vmem>>, vector<1x1x64x64xbf16>
    %221 = vector.shape_cast %220 : vector<1x1x64x64xbf16> to vector<64x64xbf16>
    %cst_155 = arith.constant dense<0.000000e+00> : vector<64x64xf32>
    %222 = tpu.matmul %219, %221, %cst_155 {dimension_numbers = #tpu.dot_dimension_numbers<[1], [0], [0], [1], [0, 0, 1, 1], [], []>} : vector<64x64xbf16>, vector<64x64xbf16>, vector<64x64xf32> -> vector<64x64xf32>
    %223 = arith.addf %215, %222 : vector<64x64xf32>
    %c23_156 = arith.constant 23 : index
    %c0_157 = arith.constant 0 : index
    %224 = vector.load %arg18[%c23_156, %c0_157] : memref<96x64xf32, #tpu.memory_space<vmem>>, vector<64x64xf32>
    %225 = vector.broadcast %28 : vector<64x1xf32> to vector<64x64xf32>
    %226 = arith.mulf %224, %225 : vector<64x64xf32>
    %227 = arith.truncf %226 : vector<64x64xf32> to vector<64x64xbf16>
    %c2_158 = arith.constant 2 : index
    %c0_159 = arith.constant 0 : index
    %c0_160 = arith.constant 0 : index
    %c0_161 = arith.constant 0 : index
    %228 = vector.load %arg12[%c2_158, %c0_159, %c0_160, %c0_161] : memref<3x3x64x64xbf16, #tpu.memory_space<vmem>>, vector<1x1x64x64xbf16>
    %229 = vector.shape_cast %228 : vector<1x1x64x64xbf16> to vector<64x64xbf16>
    %cst_162 = arith.constant dense<0.000000e+00> : vector<64x64xf32>
    %230 = tpu.matmul %227, %229, %cst_162 {dimension_numbers = #tpu.dot_dimension_numbers<[1], [0], [0], [1], [0, 0, 1, 1], [], []>} : vector<64x64xbf16>, vector<64x64xbf16>, vector<64x64xf32> -> vector<64x64xf32>
    %231 = arith.addf %223, %230 : vector<64x64xf32>
    %c24_163 = arith.constant 24 : index
    %c0_164 = arith.constant 0 : index
    %232 = vector.load %arg18[%c24_163, %c0_164] : memref<96x64xf32, #tpu.memory_space<vmem>>, vector<64x64xf32>
    %233 = arith.truncf %232 : vector<64x64xf32> to vector<64x64xbf16>
    %c2_165 = arith.constant 2 : index
    %c1_166 = arith.constant 1 : index
    %c0_167 = arith.constant 0 : index
    %c0_168 = arith.constant 0 : index
    %234 = vector.load %arg12[%c2_165, %c1_166, %c0_167, %c0_168] : memref<3x3x64x64xbf16, #tpu.memory_space<vmem>>, vector<1x1x64x64xbf16>
    %235 = vector.shape_cast %234 : vector<1x1x64x64xbf16> to vector<64x64xbf16>
    %cst_169 = arith.constant dense<0.000000e+00> : vector<64x64xf32>
    %236 = tpu.matmul %233, %235, %cst_169 {dimension_numbers = #tpu.dot_dimension_numbers<[1], [0], [0], [1], [0, 0, 1, 1], [], []>} : vector<64x64xbf16>, vector<64x64xbf16>, vector<64x64xf32> -> vector<64x64xf32>
    %237 = arith.addf %231, %236 : vector<64x64xf32>
    %c25_170 = arith.constant 25 : index
    %c0_171 = arith.constant 0 : index
    %238 = vector.load %arg18[%c25_170, %c0_171] : memref<96x64xf32, #tpu.memory_space<vmem>>, vector<64x64xf32>
    %239 = vector.broadcast %32 : vector<64x1xf32> to vector<64x64xf32>
    %240 = arith.mulf %238, %239 : vector<64x64xf32>
    %241 = arith.truncf %240 : vector<64x64xf32> to vector<64x64xbf16>
    %c2_172 = arith.constant 2 : index
    %c2_173 = arith.constant 2 : index
    %c0_174 = arith.constant 0 : index
    %c0_175 = arith.constant 0 : index
    %242 = vector.load %arg12[%c2_172, %c2_173, %c0_174, %c0_175] : memref<3x3x64x64xbf16, #tpu.memory_space<vmem>>, vector<1x1x64x64xbf16>
    %243 = vector.shape_cast %242 : vector<1x1x64x64xbf16> to vector<64x64xbf16>
    %cst_176 = arith.constant dense<0.000000e+00> : vector<64x64xf32>
    %244 = tpu.matmul %241, %243, %cst_176 {dimension_numbers = #tpu.dot_dimension_numbers<[1], [0], [0], [1], [0, 0, 1, 1], [], []>} : vector<64x64xbf16>, vector<64x64xbf16>, vector<64x64xf32> -> vector<64x64xf32>
    %245 = arith.addf %237, %244 : vector<64x64xf32>
    %c0_177 = arith.constant 0 : index
    %c0_178 = arith.constant 0 : index
    %246 = vector.load %arg13[%c0_177, %c0_178] : memref<1x64xf32, #tpu.memory_space<vmem>>, vector<1x64xf32>
    %247 = vector.broadcast %246 : vector<1x64xf32> to vector<64x64xf32>
    %248 = arith.addf %245, %247 : vector<64x64xf32>
    %249 = arith.truncf %34 : vector<64x32xf32> to vector<64x32xbf16>
    %c0_179 = arith.constant 0 : index
    %c0_180 = arith.constant 0 : index
    %250 = vector.load %arg14[%c0_179, %c0_180] : memref<32x64xbf16, #tpu.memory_space<vmem>>, vector<32x64xbf16>
    %cst_181 = arith.constant dense<0.000000e+00> : vector<64x64xf32>
    %251 = tpu.matmul %249, %250, %cst_181 {dimension_numbers = #tpu.dot_dimension_numbers<[1], [0], [0], [1], [0, 0, 1, 1], [], []>} : vector<64x32xbf16>, vector<32x64xbf16>, vector<64x64xf32> -> vector<64x64xf32>
    %c0_182 = arith.constant 0 : index
    %c0_183 = arith.constant 0 : index
    %252 = vector.load %arg15[%c0_182, %c0_183] : memref<1x64xf32, #tpu.memory_space<vmem>>, vector<1x64xf32>
    %253 = vector.broadcast %252 : vector<1x64xf32> to vector<64x64xf32>
    %254 = arith.addf %251, %253 : vector<64x64xf32>
    %255 = arith.addf %248, %254 : vector<64x64xf32>
    %c0_184 = arith.constant 0 : index
    %c0_185 = arith.constant 0 : index
    %c0_186 = arith.constant 0 : index
    %256 = vector.load %arg16[%c0_184, %c0_185, %c0_186] : memref<1x64x64xf32, #tpu.memory_space<vmem>>, vector<1x64x64xf32>
    %257 = vector.shape_cast %256 : vector<1x64x64xf32> to vector<64x64xf32>
    %258 = vector.shape_cast %255 : vector<64x64xf32> to vector<1x64x64xf32>
    tpu.vector_store %arg16[%c0_184, %c0_185, %c0_186], %258 {strides = array<i32>} : memref<1x64x64xf32, #tpu.memory_space<vmem>>, vector<1x64x64xf32>,
    return
  }
  func.func @transform_0(%arg0: i32) -> (i32, i32, i32) {
    %c0_i32 = arith.constant 0 : i32
    %c0_i32_0 = arith.constant 0 : i32
    %c0_i32_1 = arith.constant 0 : i32
    return %arg0, %c0_i32, %c0_i32_0 : i32, i32, i32
  }
  func.func @transform_1(%arg0: i32) -> (i32, i32) {
    %c0_i32 = arith.constant 0 : i32
    %c0_i32_0 = arith.constant 0 : i32
    %c0_i32_1 = arith.constant 0 : i32
    return %c0_i32, %c0_i32_0 : i32, i32
  }
  func.func @transform_2(%arg0: i32) -> (i32, i32) {
    %c0_i32 = arith.constant 0 : i32
    %c0_i32_0 = arith.constant 0 : i32
    %c0_i32_1 = arith.constant 0 : i32
    return %c0_i32, %c0_i32_0 : i32, i32
  }
  func.func @transform_3(%arg0: i32) -> (i32, i32) {
    %c0_i32 = arith.constant 0 : i32
    %c0_i32_0 = arith.constant 0 : i32
    %c0_i32_1 = arith.constant 0 : i32
    return %c0_i32, %c0_i32_0 : i32, i32
  }
  func.func @transform_4(%arg0: i32) -> (i32, i32) {
    %c0_i32 = arith.constant 0 : i32
    %c0_i32_0 = arith.constant 0 : i32
    %c0_i32_1 = arith.constant 0 : i32
    return %c0_i32, %c0_i32_0 : i32, i32
  }
  func.func @transform_5(%arg0: i32) -> (i32, i32, i32, i32) {
    %c0_i32 = arith.constant 0 : i32
    %c0_i32_0 = arith.constant 0 : i32
    %c0_i32_1 = arith.constant 0 : i32
    %c0_i32_2 = arith.constant 0 : i32
    %c0_i32_3 = arith.constant 0 : i32
    return %c0_i32, %c0_i32_0, %c0_i32_1, %c0_i32_2 : i32, i32, i32, i32
  }
  func.func @transform_6(%arg0: i32) -> (i32, i32) {
    %c0_i32 = arith.constant 0 : i32
    %c0_i32_0 = arith.constant 0 : i32
    %c0_i32_1 = arith.constant 0 : i32
    return %c0_i32, %c0_i32_0 : i32, i32
  }
  func.func @transform_7(%arg0: i32) -> (i32, i32) {
    %c0_i32 = arith.constant 0 : i32
    %c0_i32_0 = arith.constant 0 : i32
    %c0_i32_1 = arith.constant 0 : i32
    return %c0_i32, %c0_i32_0 : i32, i32
  }
  func.func @transform_8(%arg0: i32) -> (i32, i32) {
    %c0_i32 = arith.constant 0 : i32
    %c0_i32_0 = arith.constant 0 : i32
    %c0_i32_1 = arith.constant 0 : i32
    return %c0_i32, %c0_i32_0 : i32, i32
  }
  func.func @transform_9(%arg0: i32) -> (i32, i32) {
    %c0_i32 = arith.constant 0 : i32
    %c0_i32_0 = arith.constant 0 : i32
    %c0_i32_1 = arith.constant 0 : i32
    return %c0_i32, %c0_i32_0 : i32, i32
  }
  func.func @transform_10(%arg0: i32) -> (i32, i32) {
    %c0_i32 = arith.constant 0 : i32
    %c0_i32_0 = arith.constant 0 : i32
    %c0_i32_1 = arith.constant 0 : i32
    return %c0_i32, %c0_i32_0 : i32, i32
  }
  func.func @transform_11(%arg0: i32) -> (i32, i32, i32, i32) {
    %c0_i32 = arith.constant 0 : i32
    %c0_i32_0 = arith.constant 0 : i32
    %c0_i32_1 = arith.constant 0 : i32
    %c0_i32_2 = arith.constant 0 : i32
    %c0_i32_3 = arith.constant 0 : i32
    return %c0_i32, %c0_i32_0, %c0_i32_1, %c0_i32_2 : i32, i32, i32, i32
  }
  func.func @transform_12(%arg0: i32) -> (i32, i32) {
    %c0_i32 = arith.constant 0 : i32
    %c0_i32_0 = arith.constant 0 : i32
    %c0_i32_1 = arith.constant 0 : i32
    return %c0_i32, %c0_i32_0 : i32, i32
  }
  func.func @transform_13(%arg0: i32) -> (i32, i32) {
    %c0_i32 = arith.constant 0 : i32
    %c0_i32_0 = arith.constant 0 : i32
    %c0_i32_1 = arith.constant 0 : i32
    return %c0_i32, %c0_i32_0 : i32, i32
  }
  func.func @transform_14(%arg0: i32) -> (i32, i32) {
    %c0_i32 = arith.constant 0 : i32
    %c0_i32_0 = arith.constant 0 : i32
    %c0_i32_1 = arith.constant 0 : i32
    return %c0_i32, %c0_i32_0 : i32, i32
  }
  func.func @transform_15(%arg0: i32) -> (i32, i32, i32) {
    %c0_i32 = arith.constant 0 : i32
    %c0_i32_0 = arith.constant 0 : i32
    %c0_i32_1 = arith.constant 0 : i32
    return %arg0, %c0_i32, %c0_i32_0 : i32, i32, i32
  }
}

</mosaic_0001>

<llo_original>
// kernel: residual_block_forward.1
$region0: #{residual_block_forward.1}
  #allocation0 [shape = 'u32[]', space=smem, size = 0x4, offset = 0x4, fixed_abs, tag = 'smem constant byte address 0x4 - core index']
  #allocation1 [shape = 'u32[144,128]{1,0:T(1,128)}', space=vmem, size = 0x12000, scoped, tag = 'internal scratch']
  #allocation2 [shape = 'f32[96,32]{1,0:T(8,128)}', space=vmem, size = 0xc000, scoped, tag = 'scratch operand']
  #allocation3 [shape = 'f32[96,64]{1,0:T(8,128)}', space=vmem, size = 0xc000, scoped, tag = 'scratch operand']
  %s0 = inlined_call_operand.vmem [shape: f32[2,64,32], index: 0, kind: input, shape index: {}]
  %s1 = inlined_call_operand.vmem [shape: f32[1,32], index: 1, kind: input, shape index: {}]
  %s2 = inlined_call_operand.vmem [shape: f32[1,32], index: 2, kind: input, shape index: {}]
  %s3 = inlined_call_operand.vmem [shape: f32[32,32], index: 3, kind: input, shape index: {}]
  %s4 = inlined_call_operand.vmem [shape: f32[32,32], index: 4, kind: input, shape index: {}]
  %s5 = inlined_call_operand.vmem [shape: bf16[3,3,32,64], index: 5, kind: input, shape index: {}]
  %s6 = inlined_call_operand.vmem [shape: f32[1,64], index: 6, kind: input, shape index: {}]
  %s7 = inlined_call_operand.vmem [shape: f32[1,64], index: 7, kind: input, shape index: {}]
  %s8 = inlined_call_operand.vmem [shape: f32[1,64], index: 8, kind: input, shape index: {}]
  %s9 = inlined_call_operand.vmem [shape: f32[64,32], index: 9, kind: input, shape index: {}]
  %s10 = inlined_call_operand.vmem [shape: f32[32,64], index: 10, kind: input, shape index: {}]
  %s11 = inlined_call_operand.vmem [shape: bf16[3,3,64,64], index: 11, kind: input, shape index: {}]
  %s12 = inlined_call_operand.vmem [shape: f32[1,64], index: 12, kind: input, shape index: {}]
  %s13 = inlined_call_operand.vmem [shape: bf16[32,64], index: 13, kind: input, shape index: {}]
  %s14 = inlined_call_operand.vmem [shape: f32[1,64], index: 14, kind: input, shape index: {}]
  %s15 = inlined_call_operand.hbm [shape: f32[2,64,64], index: 15, kind: output, shape index: {}]
  %s16 = sld [smem:[#allocation0]]
  $region93: #{residual_block_forward.1} parent=0
    _
  %s18 = ssub.s32 1, %s16
  %s19 = scalar_select 0, %s18, %s16
  $region1: #{residual_block_forward.1} parent=0
    #allocation4 [shape = 'u8[65536]{0}', space=vmem, size = 0x10000, scoped, tag = 'output window, operand 0']
    #allocation5 [shape = 's32[2]{0}', space=sflag, size = 0x8, scoped, tag = 'scoped memory for residual_block_forward.1']
    %20 = vsyncpa [#allocation5], 0
    %s21 = scalar_lea.sflag [#allocation5], 1
    %22 = vsyncpa %s21, 0
    loop: start=0, step=1, limit=4
    $region2: #{residual_block_forward.1} parent=1 // loop_pre_header
      _
    $region3: #{residual_block_forward.1} parent=1 // loop_header
      %s24 = sphi 0, %s28
      %p25 = scmp.ge.s32.totalorder %s24, 4
      %s34 = sphi 0, %s36
      %s37 = sphi 0, %s34
      %s38 = sphi 0, %s37
      %s54 = sphi 0, %s38
      %s58 = sphi 0, %s58
      %s60 = sphi 0, %s58
      %s61 = sphi 0, %s60
      %s75 = sphi 0, %s61
      %s79 = sphi 0, %s79
      %s81 = sphi 0, %s79
      %s82 = sphi 0, %s81
      %s96 = sphi 0, %s82
      %s100 = sphi 0, %s100
      %s102 = sphi 0, %s100
      %s103 = sphi 0, %s102
      %s117 = sphi 0, %s103
      %s121 = sphi 0, %s121
      %s123 = sphi 0, %s121
      %s124 = sphi 0, %s123
      %s138 = sphi 0, %s124
      %s142 = sphi 0, %s142
      %s144 = sphi 0, %s142
      %s145 = sphi 0, %s144
      %s159 = sphi 0, %s145
      %s163 = sphi 0, %s163
      %s165 = sphi 0, %s163
      %s166 = sphi 0, %s165
      %s180 = sphi 0, %s166
      %s184 = sphi 0, %s184
      %s186 = sphi 0, %s184
      %s187 = sphi 0, %s186
      %s201 = sphi 0, %s187
      %s205 = sphi 0, %s205
      %s207 = sphi 0, %s205
      %s208 = sphi 0, %s207
      %s222 = sphi 0, %s208
      %s226 = sphi 0, %s226
      %s228 = sphi 0, %s226
      %s229 = sphi 0, %s228
      %s243 = sphi 0, %s229
      %s247 = sphi 0, %s247
      %s249 = sphi 0, %s247
      %s250 = sphi 0, %s249
      %s264 = sphi 0, %s250
      %s268 = sphi 0, %s268
      %s270 = sphi 0, %s268
      %s271 = sphi 0, %s270
      %s285 = sphi 0, %s271
      %s289 = sphi 0, %s289
      %s291 = sphi 0, %s289
      %s292 = sphi 0, %s291
      %s306 = sphi 0, %s292
      %s310 = sphi 0, %s310
      %s312 = sphi 0, %s310
      %s313 = sphi 0, %s312
      %s327 = sphi 0, %s313
      %s331 = sphi 0, %s331
      %s333 = sphi 0, %s331
      %s334 = sphi 0, %s333
      %s348 = sphi 0, %s334
      %s354 = sphi 0, %s356
      %s357 = sphi 0, %s354
      %s358 = sphi 0, %s357
      %s374 = sphi 0, %s358
    $region4: #{residual_block_forward.1} parent=1 // loop_header_branch
      %27 = sbr.rel (%p25) target = $region8
    $region5: #{residual_block_forward.1} parent=1 // loop_body
      %s29 = ssub.s32 %s24, 1
      %s30 = ssub.s32 %s24, 2
      %s31 = sadd.s32 %s24, 1
      %s32 = ssub.s32 %s24, %s31
      %p33 = scmp.eq.s32.totalorder %s32, 0
      %s35 = sadd.s32 %s34, 1
      %s36 = scalar_select %p33, %s34, %s35
      %p39 = pneg %p33
      %p40 = scmp.eq.s32.totalorder %s24, 1
      %p41 = por %p39, %p40
      %p42 = scmp.ne.s32.totalorder %s34, %s37
      %p43 = scmp.eq.s32.totalorder %s24, 0
      %p44 = por %p42, %p43
      %p45 = scmp.ne.s32.totalorder %s34, %s37
      %p46 = scmp.eq.s32.totalorder %s29, 1
      %p47 = por %p45, %p46
      %p48 = scmp.ne.s32.totalorder %s37, %s38
      %p49 = scmp.eq.s32.totalorder %s29, 0
      %p50 = por %p48, %p49
      %p51 = scmp.ne.s32.totalorder %s37, %s38
      %p52 = scmp.eq.s32.totalorder %s30, 1
      %p53 = por %p51, %p52
      %p55 = scmp.ne.s32.totalorder %s38, %s54
      %p56 = scmp.eq.s32.totalorder %s30, 0
      %p57 = por %p55, %p56
      %s59 = sadd.s32 %s58, 1
      %p62 = scmp.eq.s32.totalorder %s24, 1
      %p63 = scmp.ne.s32.totalorder %s58, %s60
      %p64 = scmp.eq.s32.totalorder %s24, 0
      %p65 = por %p63, %p64
      %p66 = scmp.ne.s32.totalorder %s58, %s60
      %p67 = scmp.eq.s32.totalorder %s29, 1
      %p68 = por %p66, %p67
      %p69 = scmp.ne.s32.totalorder %s60, %s61
      %p70 = scmp.eq.s32.totalorder %s29, 0
      %p71 = por %p69, %p70
      %p72 = scmp.ne.s32.totalorder %s60, %s61
      %p73 = scmp.eq.s32.totalorder %s30, 1
      %p74 = por %p72, %p73
      %p76 = scmp.ne.s32.totalorder %s61, %s75
      %p77 = scmp.eq.s32.totalorder %s30, 0
      %p78 = por %p76, %p77
      %s80 = sadd.s32 %s79, 1
      %p83 = scmp.eq.s32.totalorder %s24, 1
      %p84 = scmp.ne.s32.totalorder %s79, %s81
      %p85 = scmp.eq.s32.totalorder %s24, 0
      %p86 = por %p84, %p85
      %p87 = scmp.ne.s32.totalorder %s79, %s81
      %p88 = scmp.eq.s32.totalorder %s29, 1
      %p89 = por %p87, %p88
      %p90 = scmp.ne.s32.totalorder %s81, %s82
      %p91 = scmp.eq.s32.totalorder %s29, 0
      %p92 = por %p90, %p91
      %p93 = scmp.ne.s32.totalorder %s81, %s82
      %p94 = scmp.eq.s32.totalorder %s30, 1
      %p95 = por %p93, %p94
      %p97 = scmp.ne.s32.totalorder %s82, %s96
      %p98 = scmp.eq.s32.totalorder %s30, 0
      %p99 = por %p97, %p98
      %s101 = sadd.s32 %s100, 1
      %p104 = scmp.eq.s32.totalorder %s24, 1
      %p105 = scmp.ne.s32.totalorder %s100, %s102
      %p106 = scmp.eq.s32.totalorder %s24, 0
      %p107 = por %p105, %p106
      %p108 = scmp.ne.s32.totalorder %s100, %s102
      %p109 = scmp.eq.s32.totalorder %s29, 1
      %p110 = por %p108, %p109
      %p111 = scmp.ne.s32.totalorder %s102, %s103
      %p112 = scmp.eq.s32.totalorder %s29, 0
      %p113 = por %p111, %p112
      %p114 = scmp.ne.s32.totalorder %s102, %s103
      %p115 = scmp.eq.s32.totalorder %s30, 1
      %p116 = por %p114, %p115
      %p118 = scmp.ne.s32.totalorder %s103, %s117
      %p119 = scmp.eq.s32.totalorder %s30, 0
      %p120 = por %p118, %p119
      %s122 = sadd.s32 %s121, 1
      %p125 = scmp.eq.s32.totalorder %s24, 1
      %p126 = scmp.ne.s32.totalorder %s121, %s123
      %p127 = scmp.eq.s32.totalorder %s24, 0
      %p128 = por %p126, %p127
      %p129 = scmp.ne.s32.totalorder %s121, %s123
      %p130 = scmp.eq.s32.totalorder %s29, 1
      %p131 = por %p129, %p130
      %p132 = scmp.ne.s32.totalorder %s123, %s124
      %p133 = scmp.eq.s32.totalorder %s29, 0
      %p134 = por %p132, %p133
      %p135 = scmp.ne.s32.totalorder %s123, %s124
      %p136 = scmp.eq.s32.totalorder %s30, 1
      %p137 = por %p135, %p136
      %p139 = scmp.ne.s32.totalorder %s124, %s138
      %p140 = scmp.eq.s32.totalorder %s30, 0
      %p141 = por %p139, %p140
      %s143 = sadd.s32 %s142, 1
      %p146 = scmp.eq.s32.totalorder %s24, 1
      %p147 = scmp.ne.s32.totalorder %s142, %s144
      %p148 = scmp.eq.s32.totalorder %s24, 0
      %p149 = por %p147, %p148
      %p150 = scmp.ne.s32.totalorder %s142, %s144
      %p151 = scmp.eq.s32.totalorder %s29, 1
      %p152 = por %p150, %p151
      %p153 = scmp.ne.s32.totalorder %s144, %s145
      %p154 = scmp.eq.s32.totalorder %s29, 0
      %p155 = por %p153, %p154
      %p156 = scmp.ne.s32.totalorder %s144, %s145
      %p157 = scmp.eq.s32.totalorder %s30, 1
      %p158 = por %p156, %p157
      %p160 = scmp.ne.s32.totalorder %s145, %s159
      %p161 = scmp.eq.s32.totalorder %s30, 0
      %p162 = por %p160, %p161
      %s164 = sadd.s32 %s163, 1
      %p167 = scmp.eq.s32.totalorder %s24, 1
      %p168 = scmp.ne.s32.totalorder %s163, %s165
      %p169 = scmp.eq.s32.totalorder %s24, 0
      %p170 = por %p168, %p169
      %p171 = scmp.ne.s32.totalorder %s163, %s165
      %p172 = scmp.eq.s32.totalorder %s29, 1
      %p173 = por %p171, %p172
      %p174 = scmp.ne.s32.totalorder %s165, %s166
      %p175 = scmp.eq.s32.totalorder %s29, 0
      %p176 = por %p174, %p175
      %p177 = scmp.ne.s32.totalorder %s165, %s166
      %p178 = scmp.eq.s32.totalorder %s30, 1
      %p179 = por %p177, %p178
      %p181 = scmp.ne.s32.totalorder %s166, %s180
      %p182 = scmp.eq.s32.totalorder %s30, 0
      %p183 = por %p181, %p182
      %s185 = sadd.s32 %s184, 1
      %p188 = scmp.eq.s32.totalorder %s24, 1
      %p189 = scmp.ne.s32.totalorder %s184, %s186
      %p190 = scmp.eq.s32.totalorder %s24, 0
      %p191 = por %p189, %p190
      %p192 = scmp.ne.s32.totalorder %s184, %s186
      %p193 = scmp.eq.s32.totalorder %s29, 1
      %p194 = por %p192, %p193
      %p195 = scmp.ne.s32.totalorder %s186, %s187
      %p196 = scmp.eq.s32.totalorder %s29, 0
      %p197 = por %p195, %p196
      %p198 = scmp.ne.s32.totalorder %s186, %s187
      %p199 = scmp.eq.s32.totalorder %s30, 1
      %p200 = por %p198, %p199
      %p202 = scmp.ne.s32.totalorder %s187, %s201
      %p203 = scmp.eq.s32.totalorder %s30, 0
      %p204 = por %p202, %p203
      %s206 = sadd.s32 %s205, 1
      %p209 = scmp.eq.s32.totalorder %s24, 1
      %p210 = scmp.ne.s32.totalorder %s205, %s207
      %p211 = scmp.eq.s32.totalorder %s24, 0
      %p212 = por %p210, %p211
      %p213 = scmp.ne.s32.totalorder %s205, %s207
      %p214 = scmp.eq.s32.totalorder %s29, 1
      %p215 = por %p213, %p214
      %p216 = scmp.ne.s32.totalorder %s207, %s208
      %p217 = scmp.eq.s32.totalorder %s29, 0
      %p218 = por %p216, %p217
      %p219 = scmp.ne.s32.totalorder %s207, %s208
      %p220 = scmp.eq.s32.totalorder %s30, 1
      %p221 = por %p219, %p220
      %p223 = scmp.ne.s32.totalorder %s208, %s222
      %p224 = scmp.eq.s32.totalorder %s30, 0
      %p225 = por %p223, %p224
      %s227 = sadd.s32 %s226, 1
      %p230 = scmp.eq.s32.totalorder %s24, 1
      %p231 = scmp.ne.s32.totalorder %s226, %s228
      %p232 = scmp.eq.s32.totalorder %s24, 0
      %p233 = por %p231, %p232
      %p234 = scmp.ne.s32.totalorder %s226, %s228
      %p235 = scmp.eq.s32.totalorder %s29, 1
      %p236 = por %p234, %p235
      %p237 = scmp.ne.s32.totalorder %s228, %s229
      %p238 = scmp.eq.s32.totalorder %s29, 0
      %p239 = por %p237, %p238
      %p240 = scmp.ne.s32.totalorder %s228, %s229
      %p241 = scmp.eq.s32.totalorder %s30, 1
      %p242 = por %p240, %p241
      %p244 = scmp.ne.s32.totalorder %s229, %s243
      %p245 = scmp.eq.s32.totalorder %s30, 0
      %p246 = por %p244, %p245
      %s248 = sadd.s32 %s247, 1
      %p251 = scmp.eq.s32.totalorder %s24, 1
      %p252 = scmp.ne.s32.totalorder %s247, %s249
      %p253 = scmp.eq.s32.totalorder %s24, 0
      %p254 = por %p252, %p253
      %p255 = scmp.ne.s32.totalorder %s247, %s249
      %p256 = scmp.eq.s32.totalorder %s29, 1
      %p257 = por %p255, %p256
      %p258 = scmp.ne.s32.totalorder %s249, %s250
      %p259 = scmp.eq.s32.totalorder %s29, 0
      %p260 = por %p258, %p259
      %p261 = scmp.ne.s32.totalorder %s249, %s250
      %p262 = scmp.eq.s32.totalorder %s30, 1
      %p263 = por %p261, %p262
      %p265 = scmp.ne.s32.totalorder %s250, %s264
      %p266 = scmp.eq.s32.totalorder %s30, 0
      %p267 = por %p265, %p266
      %s269 = sadd.s32 %s268, 1
      %p272 = scmp.eq.s32.totalorder %s24, 1
      %p273 = scmp.ne.s32.totalorder %s268, %s270
      %p274 = scmp.eq.s32.totalorder %s24, 0
      %p275 = por %p273, %p274
      %p276 = scmp.ne.s32.totalorder %s268, %s270
      %p277 = scmp.eq.s32.totalorder %s29, 1
      %p278 = por %p276, %p277
      %p279 = scmp.ne.s32.totalorder %s270, %s271
      %p280 = scmp.eq.s32.totalorder %s29, 0
      %p281 = por %p279, %p280
      %p282 = scmp.ne.s32.totalorder %s270, %s271
      %p283 = scmp.eq.s32.totalorder %s30, 1
      %p284 = por %p282, %p283
      %p286 = scmp.ne.s32.totalorder %s271, %s285
      %p287 = scmp.eq.s32.totalorder %s30, 0
      %p288 = por %p286, %p287
      %s290 = sadd.s32 %s289, 1
      %p293 = scmp.eq.s32.totalorder %s24, 1
      %p294 = scmp.ne.s32.totalorder %s289, %s291
      %p295 = scmp.eq.s32.totalorder %s24, 0
      %p296 = por %p294, %p295
      %p297 = scmp.ne.s32.totalorder %s289, %s291
      %p298 = scmp.eq.s32.totalorder %s29, 1
      %p299 = por %p297, %p298
      %p300 = scmp.ne.s32.totalorder %s291, %s292
      %p301 = scmp.eq.s32.totalorder %s29, 0
      %p302 = por %p300, %p301
      %p303 = scmp.ne.s32.totalorder %s291, %s292
      %p304 = scmp.eq.s32.totalorder %s30, 1
      %p305 = por %p303, %p304
      %p307 = scmp.ne.s32.totalorder %s292, %s306
      %p308 = scmp.eq.s32.totalorder %s30, 0
      %p309 = por %p307, %p308
      %s311 = sadd.s32 %s310, 1
      %p314 = scmp.eq.s32.totalorder %s24, 1
      %p315 = scmp.ne.s32.totalorder %s310, %s312
      %p316 = scmp.eq.s32.totalorder %s24, 0
      %p317 = por %p315, %p316
      %p318 = scmp.ne.s32.totalorder %s310, %s312
      %p319 = scmp.eq.s32.totalorder %s29, 1
      %p320 = por %p318, %p319
      %p321 = scmp.ne.s32.totalorder %s312, %s313
      %p322 = scmp.eq.s32.totalorder %s29, 0
      %p323 = por %p321, %p322
      %p324 = scmp.ne.s32.totalorder %s312, %s313
      %p325 = scmp.eq.s32.totalorder %s30, 1
      %p326 = por %p324, %p325
      %p328 = scmp.ne.s32.totalorder %s313, %s327
      %p329 = scmp.eq.s32.totalorder %s30, 0
      %p330 = por %p328, %p329
      %s332 = sadd.s32 %s331, 1
      %p335 = scmp.eq.s32.totalorder %s24, 1
      %p336 = scmp.ne.s32.totalorder %s331, %s333
      %p337 = scmp.eq.s32.totalorder %s24, 0
      %p338 = por %p336, %p337
      %p339 = scmp.ne.s32.totalorder %s331, %s333
      %p340 = scmp.eq.s32.totalorder %s29, 1
      %p341 = por %p339, %p340
      %p342 = scmp.ne.s32.totalorder %s333, %s334
      %p343 = scmp.eq.s32.totalorder %s29, 0
      %p344 = por %p342, %p343
      %p345 = scmp.ne.s32.totalorder %s333, %s334
      %p346 = scmp.eq.s32.totalorder %s30, 1
      %p347 = por %p345, %p346
      %p349 = scmp.ne.s32.totalorder %s334, %s348
      %p350 = scmp.eq.s32.totalorder %s30, 0
      %p351 = por %p349, %p350
      %s352 = ssub.s32 %s24, %s31
      %p353 = scmp.eq.s32.totalorder %s352, 0
      %s355 = sadd.s32 %s354, 1
      %s356 = scalar_select %p353, %s354, %s355
      %p359 = pneg %p353
      %p360 = scmp.eq.s32.totalorder %s24, 1
      %p361 = por %p359, %p360
      %p362 = scmp.ne.s32.totalorder %s354, %s357
      %p363 = scmp.eq.s32.totalorder %s24, 0
      %p364 = por %p362, %p363
      %p365 = scmp.ne.s32.totalorder %s354, %s357
      %p366 = scmp.eq.s32.totalorder %s29, 1
      %p367 = por %p365, %p366
      %p368 = scmp.ne.s32.totalorder %s357, %s358
      %p369 = scmp.eq.s32.totalorder %s29, 0
      %p370 = por %p368, %p369
      %p371 = scmp.ne.s32.totalorder %s357, %s358
      %p372 = scmp.eq.s32.totalorder %s30, 1
      %p373 = por %p371, %p372
      %p375 = scmp.ne.s32.totalorder %s358, %s374
      %p376 = scmp.eq.s32.totalorder %s30, 0
      %p377 = por %p375, %p376
      %p378 = scmp.le.s32.totalorder 1, %s24
      %p379 = scmp.lt.s32.totalorder %s24, 3
      %p380 = pnand %p378, %p379
      %p381 = pneg %p380
      // Predicated region
      $region9: #{residual_block_forward.1} parent=5 // pred_check
        _
      $region10: #{residual_block_forward.1} parent=5 // pred_check_branch
        %383 = sbr.rel (%p380) target = $region12
      $region11: #{residual_block_forward.1} parent=5 // pred_region
        %s384 = ssub.s32 %s24, 1
        // Predicated region
        $region13: #{residual_block_forward.1} parent=11 // pred_check
          %p385 = pneg %p71
        $region14: #{residual_block_forward.1} parent=11 // pred_check_branch
          %387 = sbr.rel (%p385) target = $region16
        $region15: #{residual_block_forward.1} parent=11 // pred_region
          _
        $region16: #{residual_block_forward.1} parent=11 // pred_fallthru
          _
        // Predicated region
        $region17: #{residual_block_forward.1} parent=11 // pred_check
          %p388 = pneg %p92
        $region18: #{residual_block_forward.1} parent=11 // pred_check_branch
          %390 = sbr.rel (%p388) target = $region20
        $region19: #{residual_block_forward.1} parent=11 // pred_region
          _
        $region20: #{residual_block_forward.1} parent=11 // pred_fallthru
          _
        // Predicated region
        $region21: #{residual_block_forward.1} parent=11 // pred_check
          %p391 = pneg %p113
        $region22: #{residual_block_forward.1} parent=11 // pred_check_branch
          %393 = sbr.rel (%p391) target = $region24
        $region23: #{residual_block_forward.1} parent=11 // pred_region
          _
        $region24: #{residual_block_forward.1} parent=11 // pred_fallthru
          _
        // Predicated region
        $region25: #{residual_block_forward.1} parent=11 // pred_check
          %p394 = pneg %p134
        $region26: #{residual_block_forward.1} parent=11 // pred_check_branch
          %396 = sbr.rel (%p394) target = $region28
        $region27: #{residual_block_forward.1} parent=11 // pred_region
          _
        $region28: #{residual_block_forward.1} parent=11 // pred_fallthru
          _
        // Predicated region
        $region29: #{residual_block_forward.1} parent=11 // pred_check
          %p397 = pneg %p155
        $region30: #{residual_block_forward.1} parent=11 // pred_check_branch
          %399 = sbr.rel (%p397) target = $region32
        $region31: #{residual_block_forward.1} parent=11 // pred_region
          _
        $region32: #{residual_block_forward.1} parent=11 // pred_fallthru
          _
        // Predicated region
        $region33: #{residual_block_forward.1} parent=11 // pred_check
          %p400 = pneg %p176
        $region34: #{residual_block_forward.1} parent=11 // pred_check_branch
          %402 = sbr.rel (%p400) target = $region36
        $region35: #{residual_block_forward.1} parent=11 // pred_region
          _
        $region36: #{residual_block_forward.1} parent=11 // pred_fallthru
          _
        // Predicated region
        $region37: #{residual_block_forward.1} parent=11 // pred_check
          %p403 = pneg %p197
        $region38: #{residual_block_forward.1} parent=11 // pred_check_branch
          %405 = sbr.rel (%p403) target = $region40
        $region39: #{residual_block_forward.1} parent=11 // pred_region
          _
        $region40: #{residual_block_forward.1} parent=11 // pred_fallthru
          _
        // Predicated region
        $region41: #{residual_block_forward.1} parent=11 // pred_check
          %p406 = pneg %p218
        $region42: #{residual_block_forward.1} parent=11 // pred_check_branch
          %408 = sbr.rel (%p406) target = $region44
        $region43: #{residual_block_forward.1} parent=11 // pred_region
          _
        $region44: #{residual_block_forward.1} parent=11 // pred_fallthru
          _
        // Predicated region
        $region45: #{residual_block_forward.1} parent=11 // pred_check
          %p409 = pneg %p239
        $region46: #{residual_block_forward.1} parent=11 // pred_check_branch
          %411 = sbr.rel (%p409) target = $region48
        $region47: #{residual_block_forward.1} parent=11 // pred_region
          _
        $region48: #{residual_block_forward.1} parent=11 // pred_fallthru
          _
        // Predicated region
        $region49: #{residual_block_forward.1} parent=11 // pred_check
          %p412 = pneg %p260
        $region50: #{residual_block_forward.1} parent=11 // pred_check_branch
          %414 = sbr.rel (%p412) target = $region52
        $region51: #{residual_block_forward.1} parent=11 // pred_region
          _
        $region52: #{residual_block_forward.1} parent=11 // pred_fallthru
          _
        // Predicated region
        $region53: #{residual_block_forward.1} parent=11 // pred_check
          %p415 = pneg %p281
        $region54: #{residual_block_forward.1} parent=11 // pred_check_branch
          %417 = sbr.rel (%p415) target = $region56
        $region55: #{residual_block_forward.1} parent=11 // pred_region
          _
        $region56: #{residual_block_forward.1} parent=11 // pred_fallthru
          _
        // Predicated region
        $region57: #{residual_block_forward.1} parent=11 // pred_check
          %p418 = pneg %p302
        $region58: #{residual_block_forward.1} parent=11 // pred_check_branch
          %420 = sbr.rel (%p418) target = $region60
        $region59: #{residual_block_forward.1} parent=11 // pred_region
          _
        $region60: #{residual_block_forward.1} parent=11 // pred_fallthru
          _
        // Predicated region
        $region61: #{residual_block_forward.1} parent=11 // pred_check
          %p421 = pneg %p323
        $region62: #{residual_block_forward.1} parent=11 // pred_check_branch
          %423 = sbr.rel (%p421) target = $region64
        $region63: #{residual_block_forward.1} parent=11 // pred_region
          _
        $region64: #{residual_block_forward.1} parent=11 // pred_fallthru
          _
        // Predicated region
        $region65: #{residual_block_forward.1} parent=11 // pred_check
          %p424 = pneg %p344
        $region66: #{residual_block_forward.1} parent=11 // pred_check_branch
          %426 = sbr.rel (%p424) target = $region68
        $region67: #{residual_block_forward.1} parent=11 // pred_region
          _
        $region68: #{residual_block_forward.1} parent=11 // pred_fallthru
          _
      $region12: #{residual_block_forward.1} parent=5 // pred_fallthru
        _
      %p427 = scmp.lt.s32.totalorder %s24, 2
      // Predicated region
      $region69: #{residual_block_forward.1} parent=5 // pred_check
        %p428 = pneg %p427
      $region70: #{residual_block_forward.1} parent=5 // pred_check_branch
        %430 = sbr.rel (%p428) target = $region72
      $region71: #{residual_block_forward.1} parent=5 // pred_region
        // Predicated region
        $region73: #{residual_block_forward.1} parent=71 // pred_check
          %p431 = pneg %p44
        $region74: #{residual_block_forward.1} parent=71 // pred_check_branch
          %433 = sbr.rel (%p431) target = $region76
        $region75: #{residual_block_forward.1} parent=71 // pred_region
          %p434 = scmp.lt.s32.totalorder %s24, 1
          %s435 = scalar_select %p434, %s24, 1
          %s436 = smul.addr %s435, 8
          %s437 = smul.addr %s436, 8
          %s438 = scalar_lea.vmem %s0, %s437
        $region76: #{residual_block_forward.1} parent=71 // pred_fallthru
          _
      $region72: #{residual_block_forward.1} parent=5 // pred_fallthru
        _
      %p439 = scmp.le.s32.totalorder 1, %s24
      %p440 = scmp.lt.s32.totalorder %s24, 3
      %p441 = pnand %p439, %p440
      %p442 = pneg %p441
      // Predicated region
      $region77: #{residual_block_forward.1} parent=5 // pred_check
        _
      $region78: #{residual_block_forward.1} parent=5 // pred_check_branch
        %444 = sbr.rel (%p441) target = $region80
      $region79: #{residual_block_forward.1} parent=5 // pred_region
        %s445 = ssub.s32 %s24, 1
        %p446 = scmp.lt.s32.totalorder %s29, 1
        %s447 = scalar_select %p446, %s29, 1
        %s448 = smul.addr %s447, 8
        %s449 = smul.addr %s448, 8
        %s450 = scalar_lea.vmem %s0, %s449
        %p451 = pneg %p50
        %p452 = pneg %p47
        %p453 = pneg %p71
        %p454 = pneg %p68
        %p455 = pneg %p92
        %p456 = pneg %p89
        %p457 = pneg %p113
        %p458 = pneg %p110
        %p459 = pneg %p134
        %p460 = pneg %p131
        %p461 = pneg %p155
        %p462 = pneg %p152
        %p463 = pneg %p176
        %p464 = pneg %p173
        %p465 = pneg %p197
        %p466 = pneg %p194
        %p467 = pneg %p218
        %p468 = pneg %p215
        %p469 = pneg %p239
        %p470 = pneg %p236
        %p471 = pneg %p260
        %p472 = pneg %p257
        %p473 = pneg %p281
        %p474 = pneg %p278
        %p475 = pneg %p302
        %p476 = pneg %p299
        %p477 = pneg %p323
        %p478 = pneg %p320
        %p479 = pneg %p344
        %p480 = pneg %p341
        %p481 = pneg %p370
        %p482 = pneg %p367
        %s483 = sand.u32 %s357, 1
        %s484 = scalar_lea.sflag [#allocation5], %s483
        %s485 = sand.u32 %s357, 1
        %s486 = smul.addr %s485, 64
        %s487 = scalar_lea.vmem [#allocation4], %s486
        %p488 = scmp.lt.s32.totalorder %s29, 1
        %s489 = scalar_select %p488, %s29, 1
        %s490 = smul.addr %s489, 8
        %s491 = smul.addr %s490, 8
        %s492 = scalar_lea.vmem %s0, %s491
        %vm494 = vcmask 261120
        %495 = vst.msk [vmem:[#allocation2] sm:$0xff] %vm494, 0.0
        %496 = vst.msk [vmem:[#allocation2 + $0x8] sm:$0xff] %vm494, 0.0
        %497 = vst.msk [vmem:[#allocation2 + $0x50] sm:$0xff] %vm494, 0.0
        %498 = vst.msk [vmem:[#allocation2 + $0x58] sm:$0xff] %vm494, 0.0
        %vm499 = vcmask 523264
        %500 = vst.msk [vmem:[#allocation3] sm:$0xff] %vm499, 0.0
        %501 = vst.msk [vmem:[#allocation3 + $0x8] sm:$0xff] %vm499, 0.0
        %502 = vst.msk [vmem:[#allocation3 + $0x50] sm:$0xff] %vm499, 0.0
        %503 = vst.msk [vmem:[#allocation3 + $0x58] sm:$0xff] %vm499, 0.0
        %v504 = vlaneseq
        %v505 = vshrl.u32 %v504, 7
        %v506 = vadd.s32 %v505, 8
        %v507 = vadd.s32 %v505, 16
        %v508 = vadd.s32 %v505, 24
        %v509 = vadd.s32 %v505, 32
        %v510 = vadd.s32 %v505, 40
        %v511 = vadd.s32 %v505, 48
        %v512 = vadd.s32 %v505, 56
        %vm513 = vcmp.lt.s32.totalorder %v505, 0
        %v514 = vsub.s32 0, %v505
        %v515 = vsel %vm513, %v514, %v505
        %v516 = vshrl.u32 %v515, 3
        %v517 = vand.u32 %v515, 7
        %v518 = vsub.s32 0, %v517
        %v519 = vsel %vm513, %v518, %v517
        %vm520 = vcmp.lt.s32.totalorder %v506, 0
        %v521 = vsub.s32 0, %v506
        %v522 = vsel %vm520, %v521, %v506
        %v523 = vshrl.u32 %v522, 3
        %v524 = vand.u32 %v522, 7
        %v525 = vsub.s32 0, %v524
        %v526 = vsel %vm520, %v525, %v524
        %vm527 = vcmp.lt.s32.totalorder %v507, 0
        %v528 = vsub.s32 0, %v507
        %v529 = vsel %vm527, %v528, %v507
        %v530 = vshrl.u32 %v529, 3
        %v531 = vand.u32 %v529, 7
        %v532 = vsub.s32 0, %v531
        %v533 = vsel %vm527, %v532, %v531
        %vm534 = vcmp.lt.s32.totalorder %v508, 0
        %v535 = vsub.s32 0, %v508
        %v536 = vsel %vm534, %v535, %v508
        %v537 = vshrl.u32 %v536, 3
        %v538 = vand.u32 %v536, 7
        %v539 = vsub.s32 0, %v538
        %v540 = vsel %vm534, %v539, %v538
        %vm541 = vcmp.lt.s32.totalorder %v509, 0
        %v542 = vsub.s32 0, %v509
        %v543 = vsel %vm541, %v542, %v509
        %v544 = vshrl.u32 %v543, 3
        %v545 = vand.u32 %v543, 7
        %v546 = vsub.s32 0, %v545
        %v547 = vsel %vm541, %v546, %v545
        %vm548 = vcmp.lt.s32.totalorder %v510, 0
        %v549 = vsub.s32 0, %v510
        %v550 = vsel %vm548, %v549, %v510
        %v551 = vshrl.u32 %v550, 3
        %v552 = vand.u32 %v550, 7
        %v553 = vsub.s32 0, %v552
        %v554 = vsel %vm548, %v553, %v552
        %vm555 = vcmp.lt.s32.totalorder %v511, 0
        %v556 = vsub.s32 0, %v511
        %v557 = vsel %vm555, %v556, %v511
        %v558 = vshrl.u32 %v557, 3
        %v559 = vand.u32 %v557, 7
        %v560 = vsub.s32 0, %v559
        %v561 = vsel %vm555, %v560, %v559
        %vm562 = vcmp.lt.s32.totalorder %v512, 0
        %v563 = vsub.s32 0, %v512
        %v564 = vsel %vm562, %v563, %v512
        %v565 = vshrl.u32 %v564, 3
        %v566 = vand.u32 %v564, 7
        %v567 = vsub.s32 0, %v566
        %v568 = vsel %vm562, %v567, %v566
        %vm569 = vcmp.ne.s32.totalorder %v519, 0
        %vm570 = vcmp.ne.s32.totalorder %v526, 0
        %vm571 = vcmp.ne.s32.totalorder %v533, 0
        %vm572 = vcmp.ne.s32.totalorder %v540, 0
        %vm573 = vcmp.ne.s32.totalorder %v547, 0
        %vm574 = vcmp.ne.s32.totalorder %v554, 0
        %vm575 = vcmp.ne.s32.totalorder %v561, 0
        %vm576 = vcmp.ne.s32.totalorder %v568, 0
        %vm577 = vcmp.lt.s32.totalorder %v519, 0
        %vm578 = vcmp.lt.s32.totalorder %v526, 0
        %vm579 = vcmp.lt.s32.totalorder %v533, 0
        %vm580 = vcmp.lt.s32.totalorder %v540, 0
        %vm581 = vcmp.lt.s32.totalorder %v547, 0
        %vm582 = vcmp.lt.s32.totalorder %v554, 0
        %vm583 = vcmp.lt.s32.totalorder %v561, 0
        %vm584 = vcmp.lt.s32.totalorder %v568, 0
        %vm585 = vmand %vm577, %vm569
        %vm586 = vmand %vm578, %vm570
        %vm587 = vmand %vm579, %vm571
        %vm588 = vmand %vm580, %vm572
        %vm589 = vmand %vm581, %vm573
        %vm590 = vmand %vm582, %vm574
        %vm591 = vmand %vm583, %vm575
        %vm592 = vmand %vm584, %vm576
        %v593 = vadd.s32 %v519, 8
        %v594 = vadd.s32 %v526, 8
        %v595 = vadd.s32 %v533, 8
        %v596 = vadd.s32 %v540, 8
        %v597 = vadd.s32 %v547, 8
        %v598 = vadd.s32 %v554, 8
        %v599 = vadd.s32 %v561, 8
        %v600 = vadd.s32 %v568, 8
        %v601 = vsel %vm585, %v593, %v519
        %v602 = vsel %vm586, %v594, %v526
        %v603 = vsel %vm587, %v595, %v533
        %v604 = vsel %vm588, %v596, %v540
        %v605 = vsel %vm589, %v597, %v547
        %v606 = vsel %vm590, %v598, %v554
        %v607 = vsel %vm591, %v599, %v561
        %v608 = vsel %vm592, %v600, %v568
        %vm609 = vcmp.ne.s32.totalorder %v601, 0
        %vm610 = vcmp.ne.s32.totalorder %v602, 0
        %vm611 = vcmp.ne.s32.totalorder %v603, 0
        %vm612 = vcmp.ne.s32.totalorder %v604, 0
        %vm613 = vcmp.ne.s32.totalorder %v605, 0
        %vm614 = vcmp.ne.s32.totalorder %v606, 0
        %vm615 = vcmp.ne.s32.totalorder %v607, 0
        %vm616 = vcmp.ne.s32.totalorder %v608, 0
        %v617 = vsel %vm609, 1, 0
        %v618 = vsel %vm610, 1, 0
        %v619 = vsel %vm611, 1, 0
        %v620 = vsel %vm612, 1, 0
        %v621 = vsel %vm613, 1, 0
        %v622 = vsel %vm614, 1, 0
        %v623 = vsel %vm615, 1, 0
        %v624 = vsel %vm616, 1, 0
        %v625 = vcvt.s32.f32 %v617
        %v626 = vcvt.s32.f32 %v618
        %v627 = vcvt.s32.f32 %v619
        %v628 = vcvt.s32.f32 %v620
        %v629 = vcvt.s32.f32 %v621
        %v630 = vcvt.s32.f32 %v622
        %v631 = vcvt.s32.f32 %v623
        %v632 = vcvt.s32.f32 %v624
        %vm633 = vcmp.ne.s32.totalorder %v601, 7
        %vm634 = vcmp.ne.s32.totalorder %v602, 7
        %vm635 = vcmp.ne.s32.totalorder %v603, 7
        %vm636 = vcmp.ne.s32.totalorder %v604, 7
        %vm637 = vcmp.ne.s32.totalorder %v605, 7
        %vm638 = vcmp.ne.s32.totalorder %v606, 7
        %vm639 = vcmp.ne.s32.totalorder %v607, 7
        %vm640 = vcmp.ne.s32.totalorder %v608, 7
        %v641 = vsel %vm633, 1, 0
        %v642 = vsel %vm634, 1, 0
        %v643 = vsel %vm635, 1, 0
        %v644 = vsel %vm636, 1, 0
        %v645 = vsel %vm637, 1, 0
        %v646 = vsel %vm638, 1, 0
        %v647 = vsel %vm639, 1, 0
        %v648 = vsel %vm640, 1, 0
        %v649 = vcvt.s32.f32 %v641
        %v650 = vcvt.s32.f32 %v642
        %v651 = vcvt.s32.f32 %v643
        %v652 = vcvt.s32.f32 %v644
        %v653 = vcvt.s32.f32 %v645
        %v654 = vcvt.s32.f32 %v646
        %v655 = vcvt.s32.f32 %v647
        %v656 = vcvt.s32.f32 %v648
        %v657 = vld [vmem:[%s492] sm:$0xff]
        %v658 = vld [vmem:[%s492 + $0x8] sm:$0xff]
        %v659 = vld [vmem:[%s492 + $0x10] sm:$0xff]
        %v660 = vld [vmem:[%s492 + $0x18] sm:$0xff]
        %v661 = vld [vmem:[%s492 + $0x20] sm:$0xff]
        %v662 = vld [vmem:[%s492 + $0x28] sm:$0xff]
        %v663 = vld [vmem:[%s492 + $0x30] sm:$0xff]
        %v664 = vld [vmem:[%s492 + $0x38] sm:$0xff]
        %v665 = vld [vmem:[%s1] sm:$0x1]
        %v666 = vld [vmem:[%s2] sm:$0x1]
        %v667 = vld [vmem:[%s3] sm:$0xff]
        %v668 = vld [vmem:[%s3 + $0x8] sm:$0xff]
        %v669 = vld [vmem:[%s3 + $0x10] sm:$0xff]
        %v670 = vld [vmem:[%s3 + $0x18] sm:$0xff]
        %v671 = vld [vmem:[%s4] sm:$0xff]
        %v672 = vld [vmem:[%s4 + $0x8] sm:$0xff]
        %v673 = vld [vmem:[%s4 + $0x10] sm:$0xff]
        %v674 = vld [vmem:[%s4 + $0x18] sm:$0xff]
        %v675 = vsel %vm494, %v657, 0.0
        %v676 = vsel %vm494, %v658, 0.0
        %v677 = vadd.f32 %v675, %v676
        %v678 = vsel %vm494, %v659, 0.0
        %v679 = vadd.f32 %v677, %v678
        %v680 = vsel %vm494, %v660, 0.0
        %v681 = vadd.f32 %v679, %v680
        %v682 = vsel %vm494, %v661, 0.0
        %v683 = vadd.f32 %v681, %v682
        %v684 = vsel %vm494, %v662, 0.0
        %v685 = vadd.f32 %v683, %v684
        %v686 = vsel %vm494, %v663, 0.0
        %v687 = vadd.f32 %v685, %v686
        %v688 = vsel %vm494, %v664, 0.0
        %v689 = vadd.f32 %v687, %v688
        %v690 = vrot.slane %v689, 4
        %v691 = vadd.f32 %v689, %v690
        %v692 = vrot.slane %v691, 2
        %v693 = vadd.f32 %v691, %v692
        %v694 = vrot.slane %v693, 1
        %v695 = vadd.f32 %v693, %v694
        %v697 = vsel %vm494, %v695, 0
        %699 = vmatprep.subr.mxu0 0.0
        %700 = vmatpush1.msra.mxu0 %v667
        %701 = vmatprep.subr.mxu0 0.0
        %702 = vmatpush1.msra.mxu0 %v668
        %703 = vmatprep.subr.mxu0 0.0
        %704 = vmatpush1.msra.mxu0 %v669
        %705 = vmatprep.subr.mxu0 0.0
        %706 = vmatpush1.msra.mxu0 %v670
        %707 = vmatprep.subr.mxu0 0.0
        %708 = vmatpush1.msra.mxu0 0.0
        %709 = vmatprep.subr.mxu0 0.0
        %710 = vmatpush1.msra.mxu0 0.0
        %711 = vmatprep.subr.mxu0 0.0
        %712 = vmatpush1.msra.mxu0 0.0
        %713 = vmatprep.subr.mxu0 0.0
        %714 = vmatpush1.msra.mxu0 0.0
        %715 = vmatprep.subr.mxu0 0.0
        %716 = vmatpush1.msra.mxu0 0.0
        %717 = vmatprep.subr.mxu0 0.0
        %718 = vmatpush1.msra.mxu0 0.0
        %719 = vmatprep.subr.mxu0 0.0
        %720 = vmatpush1.msra.mxu0 0.0
        %721 = vmatprep.subr.mxu0 0.0
        %722 = vmatpush1.msra.mxu0 0.0
        %723 = vmatprep.subr.mxu0 0.0
        %724 = vmatpush1.msra.mxu0 0.0
        %725 = vmatprep.subr.mxu0 0.0
        %726 = vmatpush1.msra.mxu0 0.0
        %727 = vmatprep.subr.mxu0 0.0
        %728 = vmatpush1.msra.mxu0 0.0
        %729 = vmatprep.subr.mxu0 0.0
        %730 = vmatpush1.msra.mxu0 0.0
        %731 = vmatprep.subr.mxu0 0.0
        %732 = vmatpush1.msra.mxu0 0.0
        %733 = vmatprep.subr.mxu0 0.0
        %734 = vmatpush1.msra.mxu0 0.0
        %735 = vmatprep.subr.mxu0 0.0
        %736 = vmatpush1.msra.mxu0 0.0
        %737 = vmatprep.subr.mxu0 0.0
        %738 = vmatpush1.msra.mxu0 0.0
        %739 = vmatprep.subr.mxu0 0.0
        %740 = vmatpush1.msra.mxu0 0.0
        %741 = vmatprep.subr.mxu0 0.0
        %742 = vmatpush1.msra.mxu0 0.0
        %743 = vmatprep.subr.mxu0 0.0
        %744 = vmatpush1.msra.mxu0 0.0
        %745 = vmatprep.subr.mxu0 0.0
        %746 = vmatpush1.msra.mxu0 0.0
        %747 = vmatprep.subr.mxu0 0.0
        %748 = vmatpush1.msra.mxu0 0.0
        %749 = vmatprep.subr.mxu0 0.0
        %750 = vmatpush1.msra.mxu0 0.0
        %751 = vmatprep.subr.mxu0 0.0
        %752 = vmatpush1.msra.mxu0 0.0
        %753 = vmatprep.subr.mxu0 0.0
        %754 = vmatpush1.msra.mxu0 0.0
        %755 = vmatprep.subr.mxu0 0.0
        %756 = vmatpush1.msra.mxu0 0.0
        %757 = vmatprep.subr.mxu0 0.0
        %758 = vmatpush1.msra.mxu0 0.0
        %759 = vmatprep.subr.mxu0 0.0
        %760 = vmatpush1.msra.mxu0 0.0
        %761 = vmatprep.subr.mxu0 0.0
        %762 = vmatpush1.msra.mxu0 0.0
        %763 = vmatprep.mubr.f32.mxu0 0.0
        %764 = vmatmul.mubr.f32.gmra.mrb[0].mxu0 %v697
        %v765 = vpop.f32.mrb[0].mxu0
        %v766 = vadd.f32 0.0, %v765
        %v767 = vpop.f32.mrb[0].mxu0
        %768 = vdwg.mxu0
        %v769 = vrcp.pop 64.0
        %v770 = vmul.f32 %v766, %v769
        %v772 = vsel %vm494, %v770, 0
        %774 = vmatprep.subr.mxu0 0.0
        %775 = vmatpush1.msra.mxu0 %v671
        %776 = vmatprep.subr.mxu0 0.0
        %777 = vmatpush1.msra.mxu0 %v672
        %778 = vmatprep.subr.mxu0 0.0
        %779 = vmatpush1.msra.mxu0 %v673
        %780 = vmatprep.subr.mxu0 0.0
        %781 = vmatpush1.msra.mxu0 %v674
        %782 = vmatprep.subr.mxu0 0.0
        %783 = vmatpush1.msra.mxu0 0.0
        %784 = vmatprep.subr.mxu0 0.0
        %785 = vmatpush1.msra.mxu0 0.0
        %786 = vmatprep.subr.mxu0 0.0
        %787 = vmatpush1.msra.mxu0 0.0
        %788 = vmatprep.subr.mxu0 0.0
        %789 = vmatpush1.msra.mxu0 0.0
        %790 = vmatprep.subr.mxu0 0.0
        %791 = vmatpush1.msra.mxu0 0.0
        %792 = vmatprep.subr.mxu0 0.0
        %793 = vmatpush1.msra.mxu0 0.0
        %794 = vmatprep.subr.mxu0 0.0
        %795 = vmatpush1.msra.mxu0 0.0
        %796 = vmatprep.subr.mxu0 0.0
        %797 = vmatpush1.msra.mxu0 0.0
        %798 = vmatprep.subr.mxu0 0.0
        %799 = vmatpush1.msra.mxu0 0.0
        %800 = vmatprep.subr.mxu0 0.0
        %801 = vmatpush1.msra.mxu0 0.0
        %802 = vmatprep.subr.mxu0 0.0
        %803 = vmatpush1.msra.mxu0 0.0
        %804 = vmatprep.subr.mxu0 0.0
        %805 = vmatpush1.msra.mxu0 0.0
        %806 = vmatprep.subr.mxu0 0.0
        %807 = vmatpush1.msra.mxu0 0.0
        %808 = vmatprep.subr.mxu0 0.0
        %809 = vmatpush1.msra.mxu0 0.0
        %810 = vmatprep.subr.mxu0 0.0
        %811 = vmatpush1.msra.mxu0 0.0
        %812 = vmatprep.subr.mxu0 0.0
        %813 = vmatpush1.msra.mxu0 0.0
        %814 = vmatprep.subr.mxu0 0.0
        %815 = vmatpush1.msra.mxu0 0.0
        %816 = vmatprep.subr.mxu0 0.0
        %817 = vmatpush1.msra.mxu0 0.0
        %818 = vmatprep.subr.mxu0 0.0
        %819 = vmatpush1.msra.mxu0 0.0
        %820 = vmatprep.subr.mxu0 0.0
        %821 = vmatpush1.msra.mxu0 0.0
        %822 = vmatprep.subr.mxu0 0.0
        %823 = vmatpush1.msra.mxu0 0.0
        %824 = vmatprep.subr.mxu0 0.0
        %825 = vmatpush1.msra.mxu0 0.0
        %826 = vmatprep.subr.mxu0 0.0
        %827 = vmatpush1.msra.mxu0 0.0
        %828 = vmatprep.subr.mxu0 0.0
        %829 = vmatpush1.msra.mxu0 0.0
        %830 = vmatprep.subr.mxu0 0.0
        %831 = vmatpush1.msra.mxu0 0.0
        %832 = vmatprep.subr.mxu0 0.0
        %833 = vmatpush1.msra.mxu0 0.0
        %834 = vmatprep.subr.mxu0 0.0
        %835 = vmatpush1.msra.mxu0 0.0
        %836 = vmatprep.subr.mxu0 0.0
        %837 = vmatpush1.msra.mxu0 0.0
        %838 = vmatprep.mubr.f32.mxu0 0.0
        %839 = vmatmul.mubr.f32.gmra.mrb[0].mxu0 %v772
        %v840 = vpop.f32.mrb[0].mxu0
        %v841 = vadd.f32 0.0, %v840
        %v842 = vpop.f32.mrb[0].mxu0
        %843 = vdwg.mxu0
        %v844 = vlaneseq
        %v845 = vshrl.u32 %v844, 7
        %v846 = vsub.s32 0, %v845
        %v847 = vrot.slane %v841, %v846
        %v848 = vsub.f32 %v657, %v847
        %v849 = vsub.f32 %v658, %v847
        %v850 = vsub.f32 %v659, %v847
        %v851 = vsub.f32 %v660, %v847
        %v852 = vsub.f32 %v661, %v847
        %v853 = vsub.f32 %v662, %v847
        %v854 = vsub.f32 %v663, %v847
        %v855 = vsub.f32 %v664, %v847
        %v856 = vmul.f32 %v848, %v848
        %v857 = vmul.f32 %v849, %v849
        %v858 = vmul.f32 %v850, %v850
        %v859 = vmul.f32 %v851, %v851
        %v860 = vmul.f32 %v852, %v852
        %v861 = vmul.f32 %v853, %v853
        %v862 = vmul.f32 %v854, %v854
        %v863 = vmul.f32 %v855, %v855
        %v864 = vsel %vm494, %v856, 0.0
        %v865 = vsel %vm494, %v857, 0.0
        %v866 = vadd.f32 %v864, %v865
        %v867 = vsel %vm494, %v858, 0.0
        %v868 = vadd.f32 %v866, %v867
        %v869 = vsel %vm494, %v859, 0.0
        %v870 = vadd.f32 %v868, %v869
        %v871 = vsel %vm494, %v860, 0.0
        %v872 = vadd.f32 %v870, %v871
        %v873 = vsel %vm494, %v861, 0.0
        %v874 = vadd.f32 %v872, %v873
        %v875 = vsel %vm494, %v862, 0.0
        %v876 = vadd.f32 %v874, %v875
        %v877 = vsel %vm494, %v863, 0.0
        %v878 = vadd.f32 %v876, %v877
        %v879 = vrot.slane %v878, 4
        %v880 = vadd.f32 %v878, %v879
        %v881 = vrot.slane %v880, 2
        %v882 = vadd.f32 %v880, %v881
        %v883 = vrot.slane %v882, 1
        %v884 = vadd.f32 %v882, %v883
        %v886 = vsel %vm494, %v884, 0
        %888 = vmatprep.subr.mxu0 0.0
        %889 = vmatpush1.msra.mxu0 %v667
        %890 = vmatprep.subr.mxu0 0.0
        %891 = vmatpush1.msra.mxu0 %v668
        %892 = vmatprep.subr.mxu0 0.0
        %893 = vmatpush1.msra.mxu0 %v669
        %894 = vmatprep.subr.mxu0 0.0
        %895 = vmatpush1.msra.mxu0 %v670
        %896 = vmatprep.subr.mxu0 0.0
        %897 = vmatpush1.msra.mxu0 0.0
        %898 = vmatprep.subr.mxu0 0.0
        %899 = vmatpush1.msra.mxu0 0.0
        %900 = vmatprep.subr.mxu0 0.0
        %901 = vmatpush1.msra.mxu0 0.0
        %902 = vmatprep.subr.mxu0 0.0
        %903 = vmatpush1.msra.mxu0 0.0
        %904 = vmatprep.subr.mxu0 0.0
        %905 = vmatpush1.msra.mxu0 0.0
        %906 = vmatprep.subr.mxu0 0.0
        %907 = vmatpush1.msra.mxu0 0.0
        %908 = vmatprep.subr.mxu0 0.0
        %909 = vmatpush1.msra.mxu0 0.0
        %910 = vmatprep.subr.mxu0 0.0
        %911 = vmatpush1.msra.mxu0 0.0
        %912 = vmatprep.subr.mxu0 0.0
        %913 = vmatpush1.msra.mxu0 0.0
        %914 = vmatprep.subr.mxu0 0.0
        %915 = vmatpush1.msra.mxu0 0.0
        %916 = vmatprep.subr.mxu0 0.0
        %917 = vmatpush1.msra.mxu0 0.0
        %918 = vmatprep.subr.mxu0 0.0
        %919 = vmatpush1.msra.mxu0 0.0
        %920 = vmatprep.subr.mxu0 0.0
        %921 = vmatpush1.msra.mxu0 0.0
        %922 = vmatprep.subr.mxu0 0.0
        %923 = vmatpush1.msra.mxu0 0.0
        %924 = vmatprep.subr.mxu0 0.0
        %925 = vmatpush1.msra.mxu0 0.0
        %926 = vmatprep.subr.mxu0 0.0
        %927 = vmatpush1.msra.mxu0 0.0
        %928 = vmatprep.subr.mxu0 0.0
        %929 = vmatpush1.msra.mxu0 0.0
        %930 = vmatprep.subr.mxu0 0.0
        %931 = vmatpush1.msra.mxu0 0.0
        %932 = vmatprep.subr.mxu0 0.0
        %933 = vmatpush1.msra.mxu0 0.0
        %934 = vmatprep.subr.mxu0 0.0
        %935 = vmatpush1.msra.mxu0 0.0
        %936 = vmatprep.subr.mxu0 0.0
        %937 = vmatpush1.msra.mxu0 0.0
        %938 = vmatprep.subr.mxu0 0.0
        %939 = vmatpush1.msra.mxu0 0.0
        %940 = vmatprep.subr.mxu0 0.0
        %941 = vmatpush1.msra.mxu0 0.0
        %942 = vmatprep.subr.mxu0 0.0
        %943 = vmatpush1.msra.mxu0 0.0
        %944 = vmatprep.subr.mxu0 0.0
        %945 = vmatpush1.msra.mxu0 0.0
        %946 = vmatprep.subr.mxu0 0.0
        %947 = vmatpush1.msra.mxu0 0.0
        %948 = vmatprep.subr.mxu0 0.0
        %949 = vmatpush1.msra.mxu0 0.0
        %950 = vmatprep.subr.mxu0 0.0
        %951 = vmatpush1.msra.mxu0 0.0
        %952 = vmatprep.mubr.f32.mxu0 0.0
        %953 = vmatmul.mubr.f32.gmra.mrb[0].mxu0 %v886
        %v954 = vpop.f32.mrb[0].mxu0
        %v955 = vadd.f32 0.0, %v954
        %v956 = vpop.f32.mrb[0].mxu0
        %957 = vdwg.mxu0
        %v958 = vmul.f32 %v955, %v769
        %v959 = vmax.f32 %v958, 0.0
        %v961 = vsel %vm494, %v959, 0
        %963 = vmatprep.subr.mxu0 0.0
        %964 = vmatpush1.msra.mxu0 %v671
        %965 = vmatprep.subr.mxu0 0.0
        %966 = vmatpush1.msra.mxu0 %v672
        %967 = vmatprep.subr.mxu0 0.0
        %968 = vmatpush1.msra.mxu0 %v673
        %969 = vmatprep.subr.mxu0 0.0
        %970 = vmatpush1.msra.mxu0 %v674
        %971 = vmatprep.subr.mxu0 0.0
        %972 = vmatpush1.msra.mxu0 0.0
        %973 = vmatprep.subr.mxu0 0.0
        %974 = vmatpush1.msra.mxu0 0.0
        %975 = vmatprep.subr.mxu0 0.0
        %976 = vmatpush1.msra.mxu0 0.0
        %977 = vmatprep.subr.mxu0 0.0
        %978 = vmatpush1.msra.mxu0 0.0
        %979 = vmatprep.subr.mxu0 0.0
        %980 = vmatpush1.msra.mxu0 0.0
        %981 = vmatprep.subr.mxu0 0.0
        %982 = vmatpush1.msra.mxu0 0.0
        %983 = vmatprep.subr.mxu0 0.0
        %984 = vmatpush1.msra.mxu0 0.0
        %985 = vmatprep.subr.mxu0 0.0
        %986 = vmatpush1.msra.mxu0 0.0
        %987 = vmatprep.subr.mxu0 0.0
        %988 = vmatpush1.msra.mxu0 0.0
        %989 = vmatprep.subr.mxu0 0.0
        %990 = vmatpush1.msra.mxu0 0.0
        %991 = vmatprep.subr.mxu0 0.0
        %992 = vmatpush1.msra.mxu0 0.0
        %993 = vmatprep.subr.mxu0 0.0
        %994 = vmatpush1.msra.mxu0 0.0
        %995 = vmatprep.subr.mxu0 0.0
        %996 = vmatpush1.msra.mxu0 0.0
        %997 = vmatprep.subr.mxu0 0.0
        %998 = vmatpush1.msra.mxu0 0.0
        %999 = vmatprep.subr.mxu0 0.0
        %1000 = vmatpush1.msra.mxu0 0.0
        %1001 = vmatprep.subr.mxu0 0.0
        %1002 = vmatpush1.msra.mxu0 0.0
        %1003 = vmatprep.subr.mxu0 0.0
        %1004 = vmatpush1.msra.mxu0 0.0
        %1005 = vmatprep.subr.mxu0 0.0
        %1006 = vmatpush1.msra.mxu0 0.0
        %1007 = vmatprep.subr.mxu0 0.0
        %1008 = vmatpush1.msra.mxu0 0.0
        %1009 = vmatprep.subr.mxu0 0.0
        %1010 = vmatpush1.msra.mxu0 0.0
        %1011 = vmatprep.subr.mxu0 0.0
        %1012 = vmatpush1.msra.mxu0 0.0
        %1013 = vmatprep.subr.mxu0 0.0
        %1014 = vmatpush1.msra.mxu0 0.0
        %1015 = vmatprep.subr.mxu0 0.0
        %1016 = vmatpush1.msra.mxu0 0.0
        %1017 = vmatprep.subr.mxu0 0.0
        %1018 = vmatpush1.msra.mxu0 0.0
        %1019 = vmatprep.subr.mxu0 0.0
        %1020 = vmatpush1.msra.mxu0 0.0
        %1021 = vmatprep.subr.mxu0 0.0
        %1022 = vmatpush1.msra.mxu0 0.0
        %1023 = vmatprep.subr.mxu0 0.0
        %1024 = vmatpush1.msra.mxu0 0.0
        %1025 = vmatprep.subr.mxu0 0.0
        %1026 = vmatpush1.msra.mxu0 0.0
        %1027 = vmatprep.mubr.f32.mxu0 0.0
        %1028 = vmatmul.mubr.f32.gmra.mrb[0].mxu0 %v961
        %v1029 = vpop.f32.mrb[0].mxu0
        %v1030 = vadd.f32 1e-05, %v1029
        %v1031 = vpop.f32.mrb[0].mxu0
        %1032 = vdwg.mxu0
        %v1033 = vrsqrt.pop %v1030
        %v1034 = vlaneseq
        %v1035 = vshrl.u32 %v1034, 7
        %v1036 = vsub.s32 0, %v1035
        %v1037 = vrot.slane %v1033, %v1036
        %v1038 = vmul.f32 %v848, %v1037
        %v1039 = vmul.f32 %v849, %v1037
        %v1040 = vmul.f32 %v850, %v1037
        %v1041 = vmul.f32 %v851, %v1037
        %v1042 = vmul.f32 %v852, %v1037
        %v1043 = vmul.f32 %v853, %v1037
        %v1044 = vmul.f32 %v854, %v1037
        %v1045 = vmul.f32 %v855, %v1037
        %v1047 = vlaneseq
        %v1048 = vshrl.u32 %v1047, 7
        %v1049 = vsub.s32 0, %v1048
        %v1050 = vrot.slane %v665, %v1049
        %v1052 = vmul.f32 %v1038, %v1050
        %v1053 = vmul.f32 %v1039, %v1050
        %v1054 = vmul.f32 %v1040, %v1050
        %v1055 = vmul.f32 %v1041, %v1050
        %v1056 = vmul.f32 %v1042, %v1050
        %v1057 = vmul.f32 %v1043, %v1050
        %v1058 = vmul.f32 %v1044, %v1050
        %v1059 = vmul.f32 %v1045, %v1050
        %v1061 = vlaneseq
        %v1062 = vshrl.u32 %v1061, 7
        %v1063 = vsub.s32 0, %v1062
        %v1064 = vrot.slane %v666, %v1063
        %v1066 = vadd.f32 %v1052, %v1064
        %v1067 = vadd.f32 %v1053, %v1064
        %v1068 = vadd.f32 %v1054, %v1064
        %v1069 = vadd.f32 %v1055, %v1064
        %v1070 = vadd.f32 %v1056, %v1064
        %v1071 = vadd.f32 %v1057, %v1064
        %v1072 = vadd.f32 %v1058, %v1064
        %v1073 = vadd.f32 %v1059, %v1064
        %v1074 = vxor.u32 %v1066, 2147483648
        %v1075 = vxor.u32 %v1067, 2147483648
        %v1076 = vxor.u32 %v1068, 2147483648
        %v1077 = vxor.u32 %v1069, 2147483648
        %v1078 = vxor.u32 %v1070, 2147483648
        %v1079 = vxor.u32 %v1071, 2147483648
        %v1080 = vxor.u32 %v1072, 2147483648
        %v1081 = vxor.u32 %v1073, 2147483648
        %v1082 = vmul.f32 %v1074, 1.442695
        %v1083 = vpow.pop %v1082
        %v1084 = vmul.f32 %v1075, 1.442695
        %v1085 = vpow.pop %v1084
        %v1086 = vmul.f32 %v1076, 1.442695
        %v1087 = vpow.pop %v1086
        %v1088 = vmul.f32 %v1077, 1.442695
        %v1089 = vpow.pop %v1088
        %v1090 = vmul.f32 %v1078, 1.442695
        %v1091 = vpow.pop %v1090
        %v1092 = vmul.f32 %v1079, 1.442695
        %v1093 = vpow.pop %v1092
        %v1094 = vmul.f32 %v1080, 1.442695
        %v1095 = vpow.pop %v1094
        %v1096 = vmul.f32 %v1081, 1.442695
        %v1097 = vpow.pop %v1096
        %v1098 = vadd.f32 %v1083, 1.0
        %v1099 = vadd.f32 %v1085, 1.0
        %v1100 = vadd.f32 %v1087, 1.0
        %v1101 = vadd.f32 %v1089, 1.0
        %v1102 = vadd.f32 %v1091, 1.0
        %v1103 = vadd.f32 %v1093, 1.0
        %v1104 = vadd.f32 %v1095, 1.0
        %v1105 = vadd.f32 %v1097, 1.0
        %v1106 = vrcp.pop %v1098
        %v1107 = vmul.f32 1.0, %v1106
        %v1108 = vrcp.pop %v1099
        %v1109 = vmul.f32 1.0, %v1108
        %v1110 = vrcp.pop %v1100
        %v1111 = vmul.f32 1.0, %v1110
        %v1112 = vrcp.pop %v1101
        %v1113 = vmul.f32 1.0, %v1112
        %v1114 = vrcp.pop %v1102
        %v1115 = vmul.f32 1.0, %v1114
        %v1116 = vrcp.pop %v1103
        %v1117 = vmul.f32 1.0, %v1116
        %v1118 = vrcp.pop %v1104
        %v1119 = vmul.f32 1.0, %v1118
        %v1120 = vrcp.pop %v1105
        %v1121 = vmul.f32 1.0, %v1120
        %v1122 = vmul.f32 %v1066, %v1107
        %v1123 = vmul.f32 %v1067, %v1109
        %v1124 = vmul.f32 %v1068, %v1111
        %v1125 = vmul.f32 %v1069, %v1113
        %v1126 = vmul.f32 %v1070, %v1115
        %v1127 = vmul.f32 %v1071, %v1117
        %v1128 = vmul.f32 %v1072, %v1119
        %v1129 = vmul.f32 %v1073, %v1121
        %1130 = vst.msk [vmem:[#allocation2 + $0x10] sm:$0xff] %vm494, %v1122
        %1131 = vst.msk [vmem:[#allocation2 + $0x18] sm:$0xff] %vm494, %v1123
        %1132 = vst.msk [vmem:[#allocation2 + $0x20] sm:$0xff] %vm494, %v1124
        %1133 = vst.msk [vmem:[#allocation2 + $0x28] sm:$0xff] %vm494, %v1125
        %1134 = vst.msk [vmem:[#allocation2 + $0x30] sm:$0xff] %vm494, %v1126
        %1135 = vst.msk [vmem:[#allocation2 + $0x38] sm:$0xff] %vm494, %v1127
        %1136 = vst.msk [vmem:[#allocation2 + $0x40] sm:$0xff] %vm494, %v1128
        %1137 = vst.msk [vmem:[#allocation2 + $0x48] sm:$0xff] %vm494, %v1129
        %v1138 = vld [vmem:[#allocation2 + $0x7] sm:$0xff]
        %v1139 = vld [vmem:[#allocation2 + $0xf] sm:$0xff]
        %v1140 = vld [vmem:[#allocation2 + $0x17] sm:$0xff]
        %v1141 = vld [vmem:[#allocation2 + $0x1f] sm:$0xff]
        %v1142 = vld [vmem:[#allocation2 + $0x27] sm:$0xff]
        %v1143 = vld [vmem:[#allocation2 + $0x2f] sm:$0xff]
        %v1144 = vld [vmem:[#allocation2 + $0x37] sm:$0xff]
        %v1145 = vld [vmem:[#allocation2 + $0x3f] sm:$0xff]
        %v1146 = vmul.f32 %v1138, %v625
        %v1147 = vmul.f32 %v1139, %v626
        %v1148 = vmul.f32 %v1140, %v627
        %v1149 = vmul.f32 %v1141, %v628
        %v1150 = vmul.f32 %v1142, %v629
        %v1151 = vmul.f32 %v1143, %v630
        %v1152 = vmul.f32 %v1144, %v631
        %v1153 = vmul.f32 %v1145, %v632
        %v1154 = vpack.c.bf16 %v1147, %v1146
        %v1155 = vpack.c.bf16 %v1149, %v1148
        %v1156 = vpack.c.bf16 %v1151, %v1150
        %v1157 = vpack.c.bf16 %v1153, %v1152
        %v1158 = vld [vmem:[%s5] sm:$0xf]
        %v1159 = vld [vmem:[%s5 + $0x4] sm:$0xf]
        %v1160 = vld [vmem:[%s5 + $0x8] sm:$0xf]
        %v1161 = vld [vmem:[%s5 + $0xc] sm:$0xf]
        %v1162 = vld [vmem:[#allocation2 + $0x8] sm:$0xff]
        %v1163 = vld [vmem:[#allocation2 + $0x10] sm:$0xff]
        %v1164 = vld [vmem:[#allocation2 + $0x18] sm:$0xff]
        %v1165 = vld [vmem:[#allocation2 + $0x20] sm:$0xff]
        %v1166 = vld [vmem:[#allocation2 + $0x28] sm:$0xff]
        %v1167 = vld [vmem:[#allocation2 + $0x30] sm:$0xff]
        %v1168 = vld [vmem:[#allocation2 + $0x38] sm:$0xff]
        %v1169 = vld [vmem:[#allocation2 + $0x40] sm:$0xff]
        %v1170 = vpack.c.bf16 %v1163, %v1162
        %v1171 = vpack.c.bf16 %v1165, %v1164
        %v1172 = vpack.c.bf16 %v1167, %v1166
        %v1173 = vpack.c.bf16 %v1169, %v1168
        %s1174 = scalar_lea.vmem %s5, 16
        %v1175 = vld [vmem:[%s1174] sm:$0xf]
        %v1176 = vld [vmem:[%s1174 + $0x4] sm:$0xf]
        %v1177 = vld [vmem:[%s1174 + $0x8] sm:$0xf]
        %v1178 = vld [vmem:[%s1174 + $0xc] sm:$0xf]
        %v1183 = vunpack.c.l.b16 %v1175
        %v1184 = vunpack.c.l.b16 %v1176
        %v1185 = vunpack.c.l.b16 %v1177
        %v1186 = vunpack.c.l.b16 %v1178
        %v1187 = vpack.c.b16 %v1184, %v1183
        %v1188 = vpack.c.b16 %v1186, %v1185
        %v1192 = vsel %vm494, %v1170, 0
        %v1195 = vsel %vm494, %v1171, 0
        %v1198 = vsel %vm494, %v1172, 0
        %v1201 = vsel %vm494, %v1173, 0
        %1203 = vmatprep.subr.bf16.mxu0 0
        %1204 = vmatpush1.bf16.msra.mxu0 %v1187
        %1205 = vmatprep.subr.bf16.mxu0 0
        %1206 = vmatpush1.bf16.msra.mxu0 %v1188
        %1207 = vmatprep.subr.bf16.mxu0 0
        %1208 = vmatpush1.bf16.msra.mxu0 0
        %1209 = vmatprep.subr.bf16.mxu0 0
        %1210 = vmatpush1.bf16.msra.mxu0 0
        %1211 = vmatprep.subr.bf16.mxu0 0
        %1212 = vmatpush1.bf16.msra.mxu0 0
        %1213 = vmatprep.subr.bf16.mxu0 0
        %1214 = vmatpush1.bf16.msra.mxu0 0
        %1215 = vmatprep.subr.bf16.mxu0 0
        %1216 = vmatpush1.bf16.msra.mxu0 0
        %1217 = vmatprep.subr.bf16.mxu0 0
        %1218 = vmatpush1.bf16.msra.mxu0 0
        %1219 = vmatprep.subr.bf16.mxu0 0
        %1220 = vmatpush1.bf16.msra.mxu0 0
        %1221 = vmatprep.subr.bf16.mxu0 0
        %1222 = vmatpush1.bf16.msra.mxu0 0
        %1223 = vmatprep.subr.bf16.mxu0 0
        %1224 = vmatpush1.bf16.msra.mxu0 0
        %1225 = vmatprep.subr.bf16.mxu0 0
        %1226 = vmatpush1.bf16.msra.mxu0 0
        %1227 = vmatprep.subr.bf16.mxu0 0
        %1228 = vmatpush1.bf16.msra.mxu0 0
        %1229 = vmatprep.subr.bf16.mxu0 0
        %1230 = vmatpush1.bf16.msra.mxu0 0
        %1231 = vmatprep.subr.bf16.mxu0 0
        %1232 = vmatpush1.bf16.msra.mxu0 0
        %1233 = vmatprep.subr.bf16.mxu0 0
        %1234 = vmatpush1.bf16.msra.mxu0 0
        %1235 = vmatprep.mubr.bf16.mxu0 0
        %1236 = vmatmul.mubr.bf16.gmra.mrb[0].mxu0 %v1192
        %v1237 = vpop.f32.mrb[0].mxu0
        %v1238 = vadd.f32 0.0, %v1237
        %v1239 = vpop.f32.mrb[0].mxu0
        %v1240 = vpop.f32.mrb[0].mxu0
        %v1241 = vadd.f32 0.0, %v1240
        %v1242 = vpop.f32.mrb[0].mxu0
        %1243 = vmatprep.mubr.bf16.mxu0 0
        %1244 = vmatmul.mubr.bf16.gmra.mrb[0].mxu0 %v1195
        %v1245 = vpop.f32.mrb[0].mxu0
        %v1246 = vadd.f32 0.0, %v1245
        %v1247 = vpop.f32.mrb[0].mxu0
        %v1248 = vpop.f32.mrb[0].mxu0
        %v1249 = vadd.f32 0.0, %v1248
        %v1250 = vpop.f32.mrb[0].mxu0
        %1251 = vmatprep.mubr.bf16.mxu0 0
        %1252 = vmatmul.mubr.bf16.gmra.mrb[0].mxu0 %v1198
        %v1253 = vpop.f32.mrb[0].mxu0
        %v1254 = vadd.f32 0.0, %v1253
        %v1255 = vpop.f32.mrb[0].mxu0
        %v1256 = vpop.f32.mrb[0].mxu0
        %v1257 = vadd.f32 0.0, %v1256
        %v1258 = vpop.f32.mrb[0].mxu0
        %1259 = vmatprep.mubr.bf16.mxu0 0
        %1260 = vmatmul.mubr.bf16.gmra.mrb[0].mxu0 %v1201
        %v1261 = vpop.f32.mrb[0].mxu0
        %v1262 = vadd.f32 0.0, %v1261
        %v1263 = vpop.f32.mrb[0].mxu0
        %v1264 = vpop.f32.mrb[0].mxu0
        %v1265 = vadd.f32 0.0, %v1264
        %v1266 = vpop.f32.mrb[0].mxu0
        %1267 = vdwg.mxu0
        %v1272 = vunpack.c.l.b16 %v1158
        %v1273 = vunpack.c.l.b16 %v1159
        %v1274 = vunpack.c.l.b16 %v1160
        %v1275 = vunpack.c.l.b16 %v1161
        %v1276 = vpack.c.b16 %v1273, %v1272
        %v1277 = vpack.c.b16 %v1275, %v1274
        %v1281 = vsel %vm494, %v1154, 0
        %v1284 = vsel %vm494, %v1155, 0
        %v1287 = vsel %vm494, %v1156, 0
        %v1290 = vsel %vm494, %v1157, 0
        %1292 = vmatprep.subr.bf16.mxu0 0
        %1293 = vmatpush1.bf16.msra.mxu0 %v1276
        %1294 = vmatprep.subr.bf16.mxu0 0
        %1295 = vmatpush1.bf16.msra.mxu0 %v1277
        %1296 = vmatprep.subr.bf16.mxu0 0
        %1297 = vmatpush1.bf16.msra.mxu0 0
        %1298 = vmatprep.subr.bf16.mxu0 0
        %1299 = vmatpush1.bf16.msra.mxu0 0
        %1300 = vmatprep.subr.bf16.mxu0 0
        %1301 = vmatpush1.bf16.msra.mxu0 0
        %1302 = vmatprep.subr.bf16.mxu0 0
        %1303 = vmatpush1.bf16.msra.mxu0 0
        %1304 = vmatprep.subr.bf16.mxu0 0
        %1305 = vmatpush1.bf16.msra.mxu0 0
        %1306 = vmatprep.subr.bf16.mxu0 0
        %1307 = vmatpush1.bf16.msra.mxu0 0
        %1308 = vmatprep.subr.bf16.mxu0 0
        %1309 = vmatpush1.bf16.msra.mxu0 0
        %1310 = vmatprep.subr.bf16.mxu0 0
        %1311 = vmatpush1.bf16.msra.mxu0 0
        %1312 = vmatprep.subr.bf16.mxu0 0
        %1313 = vmatpush1.bf16.msra.mxu0 0
        %1314 = vmatprep.subr.bf16.mxu0 0
        %1315 = vmatpush1.bf16.msra.mxu0 0
        %1316 = vmatprep.subr.bf16.mxu0 0
        %1317 = vmatpush1.bf16.msra.mxu0 0
        %1318 = vmatprep.subr.bf16.mxu0 0
        %1319 = vmatpush1.bf16.msra.mxu0 0
        %1320 = vmatprep.subr.bf16.mxu0 0
        %1321 = vmatpush1.bf16.msra.mxu0 0
        %1322 = vmatprep.subr.bf16.mxu0 0
        %1323 = vmatpush1.bf16.msra.mxu0 0
        %1324 = vmatprep.mubr.bf16.mxu0 0
        %1325 = vmatmul.mubr.bf16.gmra.mrb[0].mxu0 %v1281
        %v1326 = vpop.f32.mrb[0].mxu0
        %v1327 = vadd.f32 %v1238, %v1326
        %v1328 = vpop.f32.mrb[0].mxu0
        %v1329 = vpop.f32.mrb[0].mxu0
        %v1330 = vadd.f32 %v1241, %v1329
        %v1331 = vpop.f32.mrb[0].mxu0
        %1332 = vmatprep.mubr.bf16.mxu0 0
        %1333 = vmatmul.mubr.bf16.gmra.mrb[0].mxu0 %v1284
        %v1334 = vpop.f32.mrb[0].mxu0
        %v1335 = vadd.f32 %v1246, %v1334
        %v1336 = vpop.f32.mrb[0].mxu0
        %v1337 = vpop.f32.mrb[0].mxu0
        %v1338 = vadd.f32 %v1249, %v1337
        %v1339 = vpop.f32.mrb[0].mxu0
        %1340 = vmatprep.mubr.bf16.mxu0 0
        %1341 = vmatmul.mubr.bf16.gmra.mrb[0].mxu0 %v1287
        %v1342 = vpop.f32.mrb[0].mxu0
        %v1343 = vadd.f32 %v1254, %v1342
        %v1344 = vpop.f32.mrb[0].mxu0
        %v1345 = vpop.f32.mrb[0].mxu0
        %v1346 = vadd.f32 %v1257, %v1345
        %v1347 = vpop.f32.mrb[0].mxu0
        %1348 = vmatprep.mubr.bf16.mxu0 0
        %1349 = vmatmul.mubr.bf16.gmra.mrb[0].mxu0 %v1290
        %v1350 = vpop.f32.mrb[0].mxu0
        %v1351 = vadd.f32 %v1262, %v1350
        %v1352 = vpop.f32.mrb[0].mxu0
        %v1353 = vpop.f32.mrb[0].mxu0
        %v1354 = vadd.f32 %v1265, %v1353
        %v1355 = vpop.f32.mrb[0].mxu0
        %1356 = vdwg.mxu0
        %v1357 = vld [vmem:[#allocation2 + $0x9] sm:$0xff]
        %v1358 = vld [vmem:[#allocation2 + $0x11] sm:$0xff]
        %v1359 = vld [vmem:[#allocation2 + $0x19] sm:$0xff]
        %v1360 = vld [vmem:[#allocation2 + $0x21] sm:$0xff]
        %v1361 = vld [vmem:[#allocation2 + $0x29] sm:$0xff]
        %v1362 = vld [vmem:[#allocation2 + $0x31] sm:$0xff]
        %v1363 = vld [vmem:[#allocation2 + $0x39] sm:$0xff]
        %v1364 = vld [vmem:[#allocation2 + $0x41] sm:$0xff]
        %v1365 = vmul.f32 %v1357, %v649
        %v1366 = vmul.f32 %v1358, %v650
        %v1367 = vmul.f32 %v1359, %v651
        %v1368 = vmul.f32 %v1360, %v652
        %v1369 = vmul.f32 %v1361, %v653
        %v1370 = vmul.f32 %v1362, %v654
        %v1371 = vmul.f32 %v1363, %v655
        %v1372 = vmul.f32 %v1364, %v656
        %v1373 = vpack.c.bf16 %v1366, %v1365
        %v1374 = vpack.c.bf16 %v1368, %v1367
        %v1375 = vpack.c.bf16 %v1370, %v1369
        %v1376 = vpack.c.bf16 %v1372, %v1371
        %s1377 = scalar_lea.vmem %s5, 32
        %v1378 = vld [vmem:[%s1377] sm:$0xf]
        %v1379 = vld [vmem:[%s1377 + $0x4] sm:$0xf]
        %v1380 = vld [vmem:[%s1377 + $0x8] sm:$0xf]
        %v1381 = vld [vmem:[%s1377 + $0xc] sm:$0xf]
        %v1386 = vunpack.c.l.b16 %v1378
        %v1387 = vunpack.c.l.b16 %v1379
        %v1388 = vunpack.c.l.b16 %v1380
        %v1389 = vunpack.c.l.b16 %v1381
        %v1390 = vpack.c.b16 %v1387, %v1386
        %v1391 = vpack.c.b16 %v1389, %v1388
        %v1395 = vsel %vm494, %v1373, 0
        %v1398 = vsel %vm494, %v1374, 0
        %v1401 = vsel %vm494, %v1375, 0
        %v1404 = vsel %vm494, %v1376, 0
        %1406 = vmatprep.subr.bf16.mxu0 0
        %1407 = vmatpush1.bf16.msra.mxu0 %v1390
        %1408 = vmatprep.subr.bf16.mxu0 0
        %1409 = vmatpush1.bf16.msra.mxu0 %v1391
        %1410 = vmatprep.subr.bf16.mxu0 0
        %1411 = vmatpush1.bf16.msra.mxu0 0
        %1412 = vmatprep.subr.bf16.mxu0 0
        %1413 = vmatpush1.bf16.msra.mxu0 0
        %1414 = vmatprep.subr.bf16.mxu0 0
        %1415 = vmatpush1.bf16.msra.mxu0 0
        %1416 = vmatprep.subr.bf16.mxu0 0
        %1417 = vmatpush1.bf16.msra.mxu0 0
        %1418 = vmatprep.subr.bf16.mxu0 0
        %1419 = vmatpush1.bf16.msra.mxu0 0
        %1420 = vmatprep.subr.bf16.mxu0 0
        %1421 = vmatpush1.bf16.msra.mxu0 0
        %1422 = vmatprep.subr.bf16.mxu0 0
        %1423 = vmatpush1.bf16.msra.mxu0 0
        %1424 = vmatprep.subr.bf16.mxu0 0
        %1425 = vmatpush1.bf16.msra.mxu0 0
        %1426 = vmatprep.subr.bf16.mxu0 0
        %1427 = vmatpush1.bf16.msra.mxu0 0
        %1428 = vmatprep.subr.bf16.mxu0 0
        %1429 = vmatpush1.bf16.msra.mxu0 0
        %1430 = vmatprep.subr.bf16.mxu0 0
        %1431 = vmatpush1.bf16.msra.mxu0 0
        %1432 = vmatprep.subr.bf16.mxu0 0
        %1433 = vmatpush1.bf16.msra.mxu0 0
        %1434 = vmatprep.subr.bf16.mxu0 0
        %1435 = vmatpush1.bf16.msra.mxu0 0
        %1436 = vmatprep.subr.bf16.mxu0 0
        %1437 = vmatpush1.bf16.msra.mxu0 0
        %1438 = vmatprep.mubr.bf16.mxu0 0
        %1439 = vmatmul.mubr.bf16.gmra.mrb[0].mxu0 %v1395
        %v1440 = vpop.f32.mrb[0].mxu0
        %v1441 = vadd.f32 0.0, %v1440
        %v1442 = vpop.f32.mrb[0].mxu0
        %v1443 = vpop.f32.mrb[0].mxu0
        %v1444 = vadd.f32 0.0, %v1443
        %v1445 = vpop.f32.mrb[0].mxu0
        %1446 = vmatprep.mubr.bf16.mxu0 0
        %1447 = vmatmul.mubr.bf16.gmra.mrb[0].mxu0 %v1398
        %v1448 = vpop.f32.mrb[0].mxu0
        %v1449 = vadd.f32 0.0, %v1448
        %v1450 = vpop.f32.mrb[0].mxu0
        %v1451 = vpop.f32.mrb[0].mxu0
        %v1452 = vadd.f32 0.0, %v1451
        %v1453 = vpop.f32.mrb[0].mxu0
        %1454 = vmatprep.mubr.bf16.mxu0 0
        %1455 = vmatmul.mubr.bf16.gmra.mrb[0].mxu0 %v1401
        %v1456 = vpop.f32.mrb[0].mxu0
        %v1457 = vadd.f32 0.0, %v1456
        %v1458 = vpop.f32.mrb[0].mxu0
        %v1459 = vpop.f32.mrb[0].mxu0
        %v1460 = vadd.f32 0.0, %v1459
        %v1461 = vpop.f32.mrb[0].mxu0
        %1462 = vmatprep.mubr.bf16.mxu0 0
        %1463 = vmatmul.mubr.bf16.gmra.mrb[0].mxu0 %v1404
        %v1464 = vpop.f32.mrb[0].mxu0
        %v1465 = vadd.f32 0.0, %v1464
        %v1466 = vpop.f32.mrb[0].mxu0
        %v1467 = vpop.f32.mrb[0].mxu0
        %v1468 = vadd.f32 0.0, %v1467
        %v1469 = vpop.f32.mrb[0].mxu0
        %1470 = vdwg.mxu0
        %v1471 = vadd.f32 %v1327, %v1441
        %v1472 = vadd.f32 %v1330, %v1444
        %v1473 = vadd.f32 %v1335, %v1449
        %v1474 = vadd.f32 %v1338, %v1452
        %v1475 = vadd.f32 %v1343, %v1457
        %v1476 = vadd.f32 %v1346, %v1460
        %v1477 = vadd.f32 %v1351, %v1465
        %v1478 = vadd.f32 %v1354, %v1468
        %v1479 = vld [vmem:[#allocation2 + $0xf] sm:$0xff]
        %v1480 = vld [vmem:[#allocation2 + $0x17] sm:$0xff]
        %v1481 = vld [vmem:[#allocation2 + $0x1f] sm:$0xff]
        %v1482 = vld [vmem:[#allocation2 + $0x27] sm:$0xff]
        %v1483 = vld [vmem:[#allocation2 + $0x2f] sm:$0xff]
        %v1484 = vld [vmem:[#allocation2 + $0x37] sm:$0xff]
        %v1485 = vld [vmem:[#allocation2 + $0x3f] sm:$0xff]
        %v1486 = vld [vmem:[#allocation2 + $0x47] sm:$0xff]
        %v1487 = vmul.f32 %v1479, %v625
        %v1488 = vmul.f32 %v1480, %v626
        %v1489 = vmul.f32 %v1481, %v627
        %v1490 = vmul.f32 %v1482, %v628
        %v1491 = vmul.f32 %v1483, %v629
        %v1492 = vmul.f32 %v1484, %v630
        %v1493 = vmul.f32 %v1485, %v631
        %v1494 = vmul.f32 %v1486, %v632
        %v1495 = vpack.c.bf16 %v1488, %v1487
        %v1496 = vpack.c.bf16 %v1490, %v1489
        %v1497 = vpack.c.bf16 %v1492, %v1491
        %v1498 = vpack.c.bf16 %v1494, %v1493
        %s1499 = scalar_lea.vmem %s5, 48
        %v1500 = vld [vmem:[%s1499] sm:$0xf]
        %v1501 = vld [vmem:[%s1499 + $0x4] sm:$0xf]
        %v1502 = vld [vmem:[%s1499 + $0x8] sm:$0xf]
        %v1503 = vld [vmem:[%s1499 + $0xc] sm:$0xf]
        %v1508 = vunpack.c.l.b16 %v1500
        %v1509 = vunpack.c.l.b16 %v1501
        %v1510 = vunpack.c.l.b16 %v1502
        %v1511 = vunpack.c.l.b16 %v1503
        %v1512 = vpack.c.b16 %v1509, %v1508
        %v1513 = vpack.c.b16 %v1511, %v1510
        %v1517 = vsel %vm494, %v1495, 0
        %v1520 = vsel %vm494, %v1496, 0
        %v1523 = vsel %vm494, %v1497, 0
        %v1526 = vsel %vm494, %v1498, 0
        %1528 = vmatprep.subr.bf16.mxu0 0
        %1529 = vmatpush1.bf16.msra.mxu0 %v1512
        %1530 = vmatprep.subr.bf16.mxu0 0
        %1531 = vmatpush1.bf16.msra.mxu0 %v1513
        %1532 = vmatprep.subr.bf16.mxu0 0
        %1533 = vmatpush1.bf16.msra.mxu0 0
        %1534 = vmatprep.subr.bf16.mxu0 0
        %1535 = vmatpush1.bf16.msra.mxu0 0
        %1536 = vmatprep.subr.bf16.mxu0 0
        %1537 = vmatpush1.bf16.msra.mxu0 0
        %1538 = vmatprep.subr.bf16.mxu0 0
        %1539 = vmatpush1.bf16.msra.mxu0 0
        %1540 = vmatprep.subr.bf16.mxu0 0
        %1541 = vmatpush1.bf16.msra.mxu0 0
        %1542 = vmatprep.subr.bf16.mxu0 0
        %1543 = vmatpush1.bf16.msra.mxu0 0
        %1544 = vmatprep.subr.bf16.mxu0 0
        %1545 = vmatpush1.bf16.msra.mxu0 0
        %1546 = vmatprep.subr.bf16.mxu0 0
        %1547 = vmatpush1.bf16.msra.mxu0 0
        %1548 = vmatprep.subr.bf16.mxu0 0
        %1549 = vmatpush1.bf16.msra.mxu0 0
        %1550 = vmatprep.subr.bf16.mxu0 0
        %1551 = vmatpush1.bf16.msra.mxu0 0
        %1552 = vmatprep.subr.bf16.mxu0 0
        %1553 = vmatpush1.bf16.msra.mxu0 0
        %1554 = vmatprep.subr.bf16.mxu0 0
        %1555 = vmatpush1.bf16.msra.mxu0 0
        %1556 = vmatprep.subr.bf16.mxu0 0
        %1557 = vmatpush1.bf16.msra.mxu0 0
        %1558 = vmatprep.subr.bf16.mxu0 0
        %1559 = vmatpush1.bf16.msra.mxu0 0
        %1560 = vmatprep.mubr.bf16.mxu0 0
        %1561 = vmatmul.mubr.bf16.gmra.mrb[0].mxu0 %v1517
        %v1562 = vpop.f32.mrb[0].mxu0
        %v1563 = vadd.f32 0.0, %v1562
        %v1564 = vpop.f32.mrb[0].mxu0
        %v1565 = vpop.f32.mrb[0].mxu0
        %v1566 = vadd.f32 0.0, %v1565
        %v1567 = vpop.f32.mrb[0].mxu0
        %1568 = vmatprep.mubr.bf16.mxu0 0
        %1569 = vmatmul.mubr.bf16.gmra.mrb[0].mxu0 %v1520
        %v1570 = vpop.f32.mrb[0].mxu0
        %v1571 = vadd.f32 0.0, %v1570
        %v1572 = vpop.f32.mrb[0].mxu0
        %v1573 = vpop.f32.mrb[0].mxu0
        %v1574 = vadd.f32 0.0, %v1573
        %v1575 = vpop.f32.mrb[0].mxu0
        %1576 = vmatprep.mubr.bf16.mxu0 0
        %1577 = vmatmul.mubr.bf16.gmra.mrb[0].mxu0 %v1523
        %v1578 = vpop.f32.mrb[0].mxu0
        %v1579 = vadd.f32 0.0, %v1578
        %v1580 = vpop.f32.mrb[0].mxu0
        %v1581 = vpop.f32.mrb[0].mxu0
        %v1582 = vadd.f32 0.0, %v1581
        %v1583 = vpop.f32.mrb[0].mxu0
        %1584 = vmatprep.mubr.bf16.mxu0 0
        %1585 = vmatmul.mubr.bf16.gmra.mrb[0].mxu0 %v1526
        %v1586 = vpop.f32.mrb[0].mxu0
        %v1587 = vadd.f32 0.0, %v1586
        %v1588 = vpop.f32.mrb[0].mxu0
        %v1589 = vpop.f32.mrb[0].mxu0
        %v1590 = vadd.f32 0.0, %v1589
        %v1591 = vpop.f32.mrb[0].mxu0
        %1592 = vdwg.mxu0
        %v1593 = vadd.f32 %v1471, %v1563
        %v1594 = vadd.f32 %v1472, %v1566
        %v1595 = vadd.f32 %v1473, %v1571
        %v1596 = vadd.f32 %v1474, %v1574
        %v1597 = vadd.f32 %v1475, %v1579
        %v1598 = vadd.f32 %v1476, %v1582
        %v1599 = vadd.f32 %v1477, %v1587
        %v1600 = vadd.f32 %v1478, %v1590
        %v1601 = vld [vmem:[#allocation2 + $0x10] sm:$0xff]
        %v1602 = vld [vmem:[#allocation2 + $0x18] sm:$0xff]
        %v1603 = vld [vmem:[#allocation2 + $0x20] sm:$0xff]
        %v1604 = vld [vmem:[#allocation2 + $0x28] sm:$0xff]
        %v1605 = vld [vmem:[#allocation2 + $0x30] sm:$0xff]
        %v1606 = vld [vmem:[#allocation2 + $0x38] sm:$0xff]
        %v1607 = vld [vmem:[#allocation2 + $0x40] sm:$0xff]
        %v1608 = vld [vmem:[#allocation2 + $0x48] sm:$0xff]
        %v1609 = vpack.c.bf16 %v1602, %v1601
        %v1610 = vpack.c.bf16 %v1604, %v1603
        %v1611 = vpack.c.bf16 %v1606, %v1605
        %v1612 = vpack.c.bf16 %v1608, %v1607
        %s1613 = scalar_lea.vmem %s5, 64
        %v1614 = vld [vmem:[%s1613] sm:$0xf]
        %v1615 = vld [vmem:[%s1613 + $0x4] sm:$0xf]
        %v1616 = vld [vmem:[%s1613 + $0x8] sm:$0xf]
        %v1617 = vld [vmem:[%s1613 + $0xc] sm:$0xf]
        %v1622 = vunpack.c.l.b16 %v1614
        %v1623 = vunpack.c.l.b16 %v1615
        %v1624 = vunpack.c.l.b16 %v1616
        %v1625 = vunpack.c.l.b16 %v1617
        %v1626 = vpack.c.b16 %v1623, %v1622
        %v1627 = vpack.c.b16 %v1625, %v1624
        %v1631 = vsel %vm494, %v1609, 0
        %v1634 = vsel %vm494, %v1610, 0
        %v1637 = vsel %vm494, %v1611, 0
        %v1640 = vsel %vm494, %v1612, 0
        %1642 = vmatprep.subr.bf16.mxu0 0
        %1643 = vmatpush1.bf16.msra.mxu0 %v1626
        %1644 = vmatprep.subr.bf16.mxu0 0
        %1645 = vmatpush1.bf16.msra.mxu0 %v1627
        %1646 = vmatprep.subr.bf16.mxu0 0
        %1647 = vmatpush1.bf16.msra.mxu0 0
        %1648 = vmatprep.subr.bf16.mxu0 0
        %1649 = vmatpush1.bf16.msra.mxu0 0
        %1650 = vmatprep.subr.bf16.mxu0 0
        %1651 = vmatpush1.bf16.msra.mxu0 0
        %1652 = vmatprep.subr.bf16.mxu0 0
        %1653 = vmatpush1.bf16.msra.mxu0 0
        %1654 = vmatprep.subr.bf16.mxu0 0
        %1655 = vmatpush1.bf16.msra.mxu0 0
        %1656 = vmatprep.subr.bf16.mxu0 0
        %1657 = vmatpush1.bf16.msra.mxu0 0
        %1658 = vmatprep.subr.bf16.mxu0 0
        %1659 = vmatpush1.bf16.msra.mxu0 0
        %1660 = vmatprep.subr.bf16.mxu0 0
        %1661 = vmatpush1.bf16.msra.mxu0 0
        %1662 = vmatprep.subr.bf16.mxu0 0
        %1663 = vmatpush1.bf16.msra.mxu0 0
        %1664 = vmatprep.subr.bf16.mxu0 0
        %1665 = vmatpush1.bf16.msra.mxu0 0
        %1666 = vmatprep.subr.bf16.mxu0 0
        %1667 = vmatpush1.bf16.msra.mxu0 0
        %1668 = vmatprep.subr.bf16.mxu0 0
        %1669 = vmatpush1.bf16.msra.mxu0 0
        %1670 = vmatprep.subr.bf16.mxu0 0
        %1671 = vmatpush1.bf16.msra.mxu0 0
        %1672 = vmatprep.subr.bf16.mxu0 0
        %1673 = vmatpush1.bf16.msra.mxu0 0
        %1674 = vmatprep.mubr.bf16.mxu0 0
        %1675 = vmatmul.mubr.bf16.gmra.mrb[0].mxu0 %v1631
        %v1676 = vpop.f32.mrb[0].mxu0
        %v1677 = vadd.f32 0.0, %v1676
        %v1678 = vpop.f32.mrb[0].mxu0
        %v1679 = vpop.f32.mrb[0].mxu0
        %v1680 = vadd.f32 0.0, %v1679
        %v1681 = vpop.f32.mrb[0].mxu0
        %1682 = vmatprep.mubr.bf16.mxu0 0
        %1683 = vmatmul.mubr.bf16.gmra.mrb[0].mxu0 %v1634
        %v1684 = vpop.f32.mrb[0].mxu0
        %v1685 = vadd.f32 0.0, %v1684
        %v1686 = vpop.f32.mrb[0].mxu0
        %v1687 = vpop.f32.mrb[0].mxu0
        %v1688 = vadd.f32 0.0, %v1687
        %v1689 = vpop.f32.mrb[0].mxu0
        %1690 = vmatprep.mubr.bf16.mxu0 0
        %1691 = vmatmul.mubr.bf16.gmra.mrb[0].mxu0 %v1637
        %v1692 = vpop.f32.mrb[0].mxu0
        %v1693 = vadd.f32 0.0, %v1692
        %v1694 = vpop.f32.mrb[0].mxu0
        %v1695 = vpop.f32.mrb[0].mxu0
        %v1696 = vadd.f32 0.0, %v1695
        %v1697 = vpop.f32.mrb[0].mxu0
        %1698 = vmatprep.mubr.bf16.mxu0 0
        %1699 = vmatmul.mubr.bf16.gmra.mrb[0].mxu0 %v1640
        %v1700 = vpop.f32.mrb[0].mxu0
        %v1701 = vadd.f32 0.0, %v1700
        %v1702 = vpop.f32.mrb[0].mxu0
        %v1703 = vpop.f32.mrb[0].mxu0
        %v1704 = vadd.f32 0.0, %v1703
        %v1705 = vpop.f32.mrb[0].mxu0
        %1706 = vdwg.mxu0
        %v1707 = vadd.f32 %v1593, %v1677
        %v1708 = vadd.f32 %v1594, %v1680
        %v1709 = vadd.f32 %v1595, %v1685
        %v1710 = vadd.f32 %v1596, %v1688
        %v1711 = vadd.f32 %v1597, %v1693
        %v1712 = vadd.f32 %v1598, %v1696
        %v1713 = vadd.f32 %v1599, %v1701
        %v1714 = vadd.f32 %v1600, %v1704
        %v1715 = vld [vmem:[#allocation2 + $0x11] sm:$0xff]
        %v1716 = vld [vmem:[#allocation2 + $0x19] sm:$0xff]
        %v1717 = vld [vmem:[#allocation2 + $0x21] sm:$0xff]
        %v1718 = vld [vmem:[#allocation2 + $0x29] sm:$0xff]
        %v1719 = vld [vmem:[#allocation2 + $0x31] sm:$0xff]
        %v1720 = vld [vmem:[#allocation2 + $0x39] sm:$0xff]
        %v1721 = vld [vmem:[#allocation2 + $0x41] sm:$0xff]
        %v1722 = vld [vmem:[#allocation2 + $0x49] sm:$0xff]
        %v1723 = vmul.f32 %v1715, %v649
        %v1724 = vmul.f32 %v1716, %v650
        %v1725 = vmul.f32 %v1717, %v651
        %v1726 = vmul.f32 %v1718, %v652
        %v1727 = vmul.f32 %v1719, %v653
        %v1728 = vmul.f32 %v1720, %v654
        %v1729 = vmul.f32 %v1721, %v655
        %v1730 = vmul.f32 %v1722, %v656
        %v1731 = vpack.c.bf16 %v1724, %v1723
        %v1732 = vpack.c.bf16 %v1726, %v1725
        %v1733 = vpack.c.bf16 %v1728, %v1727
        %v1734 = vpack.c.bf16 %v1730, %v1729
        %s1735 = scalar_lea.vmem %s5, 80
        %v1736 = vld [vmem:[%s1735] sm:$0xf]
        %v1737 = vld [vmem:[%s1735 + $0x4] sm:$0xf]
        %v1738 = vld [vmem:[%s1735 + $0x8] sm:$0xf]
        %v1739 = vld [vmem:[%s1735 + $0xc] sm:$0xf]
        %v1744 = vunpack.c.l.b16 %v1736
        %v1745 = vunpack.c.l.b16 %v1737
        %v1746 = vunpack.c.l.b16 %v1738
        %v1747 = vunpack.c.l.b16 %v1739
        %v1748 = vpack.c.b16 %v1745, %v1744
        %v1749 = vpack.c.b16 %v1747, %v1746
        %v1753 = vsel %vm494, %v1731, 0
        %v1756 = vsel %vm494, %v1732, 0
        %v1759 = vsel %vm494, %v1733, 0
        %v1762 = vsel %vm494, %v1734, 0
        %1764 = vmatprep.subr.bf16.mxu0 0
        %1765 = vmatpush1.bf16.msra.mxu0 %v1748
        %1766 = vmatprep.subr.bf16.mxu0 0
        %1767 = vmatpush1.bf16.msra.mxu0 %v1749
        %1768 = vmatprep.subr.bf16.mxu0 0
        %1769 = vmatpush1.bf16.msra.mxu0 0
        %1770 = vmatprep.subr.bf16.mxu0 0
        %1771 = vmatpush1.bf16.msra.mxu0 0
        %1772 = vmatprep.subr.bf16.mxu0 0
        %1773 = vmatpush1.bf16.msra.mxu0 0
        %1774 = vmatprep.subr.bf16.mxu0 0
        %1775 = vmatpush1.bf16.msra.mxu0 0
        %1776 = vmatprep.subr.bf16.mxu0 0
        %1777 = vmatpush1.bf16.msra.mxu0 0
        %1778 = vmatprep.subr.bf16.mxu0 0
        %1779 = vmatpush1.bf16.msra.mxu0 0
        %1780 = vmatprep.subr.bf16.mxu0 0
        %1781 = vmatpush1.bf16.msra.mxu0 0
        %1782 = vmatprep.subr.bf16.mxu0 0
        %1783 = vmatpush1.bf16.msra.mxu0 0
        %1784 = vmatprep.subr.bf16.mxu0 0
        %1785 = vmatpush1.bf16.msra.mxu0 0
        %1786 = vmatprep.subr.bf16.mxu0 0
        %1787 = vmatpush1.bf16.msra.mxu0 0
        %1788 = vmatprep.subr.bf16.mxu0 0
        %1789 = vmatpush1.bf16.msra.mxu0 0
        %1790 = vmatprep.subr.bf16.mxu0 0
        %1791 = vmatpush1.bf16.msra.mxu0 0
        %1792 = vmatprep.subr.bf16.mxu0 0
        %1793 = vmatpush1.bf16.msra.mxu0 0
        %1794 = vmatprep.subr.bf16.mxu0 0
        %1795 = vmatpush1.bf16.msra.mxu0 0
        %1796 = vmatprep.mubr.bf16.mxu0 0
        %1797 = vmatmul.mubr.bf16.gmra.mrb[0].mxu0 %v1753
        %v1798 = vpop.f32.mrb[0].mxu0
        %v1799 = vadd.f32 0.0, %v1798
        %v1800 = vpop.f32.mrb[0].mxu0
        %v1801 = vpop.f32.mrb[0].mxu0
        %v1802 = vadd.f32 0.0, %v1801
        %v1803 = vpop.f32.mrb[0].mxu0
        %1804 = vmatprep.mubr.bf16.mxu0 0
        %1805 = vmatmul.mubr.bf16.gmra.mrb[0].mxu0 %v1756
        %v1806 = vpop.f32.mrb[0].mxu0
        %v1807 = vadd.f32 0.0, %v1806
        %v1808 = vpop.f32.mrb[0].mxu0
        %v1809 = vpop.f32.mrb[0].mxu0
        %v1810 = vadd.f32 0.0, %v1809
        %v1811 = vpop.f32.mrb[0].mxu0
        %1812 = vmatprep.mubr.bf16.mxu0 0
        %1813 = vmatmul.mubr.bf16.gmra.mrb[0].mxu0 %v1759
        %v1814 = vpop.f32.mrb[0].mxu0
        %v1815 = vadd.f32 0.0, %v1814
        %v1816 = vpop.f32.mrb[0].mxu0
        %v1817 = vpop.f32.mrb[0].mxu0
        %v1818 = vadd.f32 0.0, %v1817
        %v1819 = vpop.f32.mrb[0].mxu0
        %1820 = vmatprep.mubr.bf16.mxu0 0
        %1821 = vmatmul.mubr.bf16.gmra.mrb[0].mxu0 %v1762
        %v1822 = vpop.f32.mrb[0].mxu0
        %v1823 = vadd.f32 0.0, %v1822
        %v1824 = vpop.f32.mrb[0].mxu0
        %v1825 = vpop.f32.mrb[0].mxu0
        %v1826 = vadd.f32 0.0, %v1825
        %v1827 = vpop.f32.mrb[0].mxu0
        %1828 = vdwg.mxu0
        %v1829 = vadd.f32 %v1707, %v1799
        %v1830 = vadd.f32 %v1708, %v1802
        %v1831 = vadd.f32 %v1709, %v1807
        %v1832 = vadd.f32 %v1710, %v1810
        %v1833 = vadd.f32 %v1711, %v1815
        %v1834 = vadd.f32 %v1712, %v1818
        %v1835 = vadd.f32 %v1713, %v1823
        %v1836 = vadd.f32 %v1714, %v1826
        %v1837 = vld [vmem:[#allocation2 + $0x17] sm:$0xff]
        %v1838 = vld [vmem:[#allocation2 + $0x1f] sm:$0xff]
        %v1839 = vld [vmem:[#allocation2 + $0x27] sm:$0xff]
        %v1840 = vld [vmem:[#allocation2 + $0x2f] sm:$0xff]
        %v1841 = vld [vmem:[#allocation2 + $0x37] sm:$0xff]
        %v1842 = vld [vmem:[#allocation2 + $0x3f] sm:$0xff]
        %v1843 = vld [vmem:[#allocation2 + $0x47] sm:$0xff]
        %v1844 = vld [vmem:[#allocation2 + $0x4f] sm:$0xff]
        %v1845 = vmul.f32 %v1837, %v625
        %v1846 = vmul.f32 %v1838, %v626
        %v1847 = vmul.f32 %v1839, %v627
        %v1848 = vmul.f32 %v1840, %v628
        %v1849 = vmul.f32 %v1841, %v629
        %v1850 = vmul.f32 %v1842, %v630
        %v1851 = vmul.f32 %v1843, %v631
        %v1852 = vmul.f32 %v1844, %v632
        %v1853 = vpack.c.bf16 %v1846, %v1845
        %v1854 = vpack.c.bf16 %v1848, %v1847
        %v1855 = vpack.c.bf16 %v1850, %v1849
        %v1856 = vpack.c.bf16 %v1852, %v1851
        %s1857 = scalar_lea.vmem %s5, 96
        %v1858 = vld [vmem:[%s1857] sm:$0xf]
        %v1859 = vld [vmem:[%s1857 + $0x4] sm:$0xf]
        %v1860 = vld [vmem:[%s1857 + $0x8] sm:$0xf]
        %v1861 = vld [vmem:[%s1857 + $0xc] sm:$0xf]
        %v1866 = vunpack.c.l.b16 %v1858
        %v1867 = vunpack.c.l.b16 %v1859
        %v1868 = vunpack.c.l.b16 %v1860
        %v1869 = vunpack.c.l.b16 %v1861
        %v1870 = vpack.c.b16 %v1867, %v1866
        %v1871 = vpack.c.b16 %v1869, %v1868
        %v1875 = vsel %vm494, %v1853, 0
        %v1878 = vsel %vm494, %v1854, 0
        %v1881 = vsel %vm494, %v1855, 0
        %v1884 = vsel %vm494, %v1856, 0
        %1886 = vmatprep.subr.bf16.mxu0 0
        %1887 = vmatpush1.bf16.msra.mxu0 %v1870
        %1888 = vmatprep.subr.bf16.mxu0 0
        %1889 = vmatpush1.bf16.msra.mxu0 %v1871
        %1890 = vmatprep.subr.bf16.mxu0 0
        %1891 = vmatpush1.bf16.msra.mxu0 0
        %1892 = vmatprep.subr.bf16.mxu0 0
        %1893 = vmatpush1.bf16.msra.mxu0 0
        %1894 = vmatprep.subr.bf16.mxu0 0
        %1895 = vmatpush1.bf16.msra.mxu0 0
        %1896 = vmatprep.subr.bf16.mxu0 0
        %1897 = vmatpush1.bf16.msra.mxu0 0
        %1898 = vmatprep.subr.bf16.mxu0 0
        %1899 = vmatpush1.bf16.msra.mxu0 0
        %1900 = vmatprep.subr.bf16.mxu0 0
        %1901 = vmatpush1.bf16.msra.mxu0 0
        %1902 = vmatprep.subr.bf16.mxu0 0
        %1903 = vmatpush1.bf16.msra.mxu0 0
        %1904 = vmatprep.subr.bf16.mxu0 0
        %1905 = vmatpush1.bf16.msra.mxu0 0
        %1906 = vmatprep.subr.bf16.mxu0 0
        %1907 = vmatpush1.bf16.msra.mxu0 0
        %1908 = vmatprep.subr.bf16.mxu0 0
        %1909 = vmatpush1.bf16.msra.mxu0 0
        %1910 = vmatprep.subr.bf16.mxu0 0
        %1911 = vmatpush1.bf16.msra.mxu0 0
        %1912 = vmatprep.subr.bf16.mxu0 0
        %1913 = vmatpush1.bf16.msra.mxu0 0
        %1914 = vmatprep.subr.bf16.mxu0 0
        %1915 = vmatpush1.bf16.msra.mxu0 0
        %1916 = vmatprep.subr.bf16.mxu0 0
        %1917 = vmatpush1.bf16.msra.mxu0 0
        %1918 = vmatprep.mubr.bf16.mxu0 0
        %1919 = vmatmul.mubr.bf16.gmra.mrb[0].mxu0 %v1875
        %v1920 = vpop.f32.mrb[0].mxu0
        %v1921 = vadd.f32 0.0, %v1920
        %v1922 = vpop.f32.mrb[0].mxu0
        %v1923 = vpop.f32.mrb[0].mxu0
        %v1924 = vadd.f32 0.0, %v1923
        %v1925 = vpop.f32.mrb[0].mxu0
        %1926 = vmatprep.mubr.bf16.mxu0 0
        %1927 = vmatmul.mubr.bf16.gmra.mrb[0].mxu0 %v1878
        %v1928 = vpop.f32.mrb[0].mxu0
        %v1929 = vadd.f32 0.0, %v1928
        %v1930 = vpop.f32.mrb[0].mxu0
        %v1931 = vpop.f32.mrb[0].mxu0
        %v1932 = vadd.f32 0.0, %v1931
        %v1933 = vpop.f32.mrb[0].mxu0
        %1934 = vmatprep.mubr.bf16.mxu0 0
        %1935 = vmatmul.mubr.bf16.gmra.mrb[0].mxu0 %v1881
        %v1936 = vpop.f32.mrb[0].mxu0
        %v1937 = vadd.f32 0.0, %v1936
        %v1938 = vpop.f32.mrb[0].mxu0
        %v1939 = vpop.f32.mrb[0].mxu0
        %v1940 = vadd.f32 0.0, %v1939
        %v1941 = vpop.f32.mrb[0].mxu0
        %1942 = vmatprep.mubr.bf16.mxu0 0
        %1943 = vmatmul.mubr.bf16.gmra.mrb[0].mxu0 %v1884
        %v1944 = vpop.f32.mrb[0].mxu0
        %v1945 = vadd.f32 0.0, %v1944
        %v1946 = vpop.f32.mrb[0].mxu0
        %v1947 = vpop.f32.mrb[0].mxu0
        %v1948 = vadd.f32 0.0, %v1947
        %v1949 = vpop.f32.mrb[0].mxu0
        %1950 = vdwg.mxu0
        %v1951 = vadd.f32 %v1829, %v1921
        %v1952 = vadd.f32 %v1830, %v1924
        %v1953 = vadd.f32 %v1831, %v1929
        %v1954 = vadd.f32 %v1832, %v1932
        %v1955 = vadd.f32 %v1833, %v1937
        %v1956 = vadd.f32 %v1834, %v1940
        %v1957 = vadd.f32 %v1835, %v1945
        %v1958 = vadd.f32 %v1836, %v1948
        %v1959 = vld [vmem:[#allocation2 + $0x18] sm:$0xff]
        %v1960 = vld [vmem:[#allocation2 + $0x20] sm:$0xff]
        %v1961 = vld [vmem:[#allocation2 + $0x28] sm:$0xff]
        %v1962 = vld [vmem:[#allocation2 + $0x30] sm:$0xff]
        %v1963 = vld [vmem:[#allocation2 + $0x38] sm:$0xff]
        %v1964 = vld [vmem:[#allocation2 + $0x40] sm:$0xff]
        %v1965 = vld [vmem:[#allocation2 + $0x48] sm:$0xff]
        %v1966 = vld [vmem:[#allocation2 + $0x50] sm:$0xff]
        %v1967 = vpack.c.bf16 %v1960, %v1959
        %v1968 = vpack.c.bf16 %v1962, %v1961
        %v1969 = vpack.c.bf16 %v1964, %v1963
        %v1970 = vpack.c.bf16 %v1966, %v1965
        %s1971 = scalar_lea.vmem %s5, 112
        %v1972 = vld [vmem:[%s1971] sm:$0xf]
        %v1973 = vld [vmem:[%s1971 + $0x4] sm:$0xf]
        %v1974 = vld [vmem:[%s1971 + $0x8] sm:$0xf]
        %v1975 = vld [vmem:[%s1971 + $0xc] sm:$0xf]
        %v1980 = vunpack.c.l.b16 %v1972
        %v1981 = vunpack.c.l.b16 %v1973
        %v1982 = vunpack.c.l.b16 %v1974
        %v1983 = vunpack.c.l.b16 %v1975
        %v1984 = vpack.c.b16 %v1981, %v1980
        %v1985 = vpack.c.b16 %v1983, %v1982
        %v1989 = vsel %vm494, %v1967, 0
        %v1992 = vsel %vm494, %v1968, 0
        %v1995 = vsel %vm494, %v1969, 0
        %v1998 = vsel %vm494, %v1970, 0
        %2000 = vmatprep.subr.bf16.mxu0 0
        %2001 = vmatpush1.bf16.msra.mxu0 %v1984
        %2002 = vmatprep.subr.bf16.mxu0 0
        %2003 = vmatpush1.bf16.msra.mxu0 %v1985
        %2004 = vmatprep.subr.bf16.mxu0 0
        %2005 = vmatpush1.bf16.msra.mxu0 0
        %2006 = vmatprep.subr.bf16.mxu0 0
        %2007 = vmatpush1.bf16.msra.mxu0 0
        %2008 = vmatprep.subr.bf16.mxu0 0
        %2009 = vmatpush1.bf16.msra.mxu0 0
        %2010 = vmatprep.subr.bf16.mxu0 0
        %2011 = vmatpush1.bf16.msra.mxu0 0
        %2012 = vmatprep.subr.bf16.mxu0 0
        %2013 = vmatpush1.bf16.msra.mxu0 0
        %2014 = vmatprep.subr.bf16.mxu0 0
        %2015 = vmatpush1.bf16.msra.mxu0 0
        %2016 = vmatprep.subr.bf16.mxu0 0
        %2017 = vmatpush1.bf16.msra.mxu0 0
        %2018 = vmatprep.subr.bf16.mxu0 0
        %2019 = vmatpush1.bf16.msra.mxu0 0
        %2020 = vmatprep.subr.bf16.mxu0 0
        %2021 = vmatpush1.bf16.msra.mxu0 0
        %2022 = vmatprep.subr.bf16.mxu0 0
        %2023 = vmatpush1.bf16.msra.mxu0 0
        %2024 = vmatprep.subr.bf16.mxu0 0
        %2025 = vmatpush1.bf16.msra.mxu0 0
        %2026 = vmatprep.subr.bf16.mxu0 0
        %2027 = vmatpush1.bf16.msra.mxu0 0
        %2028 = vmatprep.subr.bf16.mxu0 0
        %2029 = vmatpush1.bf16.msra.mxu0 0
        %2030 = vmatprep.subr.bf16.mxu0 0
        %2031 = vmatpush1.bf16.msra.mxu0 0
        %2032 = vmatprep.mubr.bf16.mxu0 0
        %2033 = vmatmul.mubr.bf16.gmra.mrb[0].mxu0 %v1989
        %v2034 = vpop.f32.mrb[0].mxu0
        %v2035 = vadd.f32 0.0, %v2034
        %v2036 = vpop.f32.mrb[0].mxu0
        %v2037 = vpop.f32.mrb[0].mxu0
        %v2038 = vadd.f32 0.0, %v2037
        %v2039 = vpop.f32.mrb[0].mxu0
        %2040 = vmatprep.mubr.bf16.mxu0 0
        %2041 = vmatmul.mubr.bf16.gmra.mrb[0].mxu0 %v1992
        %v2042 = vpop.f32.mrb[0].mxu0
        %v2043 = vadd.f32 0.0, %v2042
        %v2044 = vpop.f32.mrb[0].mxu0
        %v2045 = vpop.f32.mrb[0].mxu0
        %v2046 = vadd.f32 0.0, %v2045
        %v2047 = vpop.f32.mrb[0].mxu0
        %2048 = vmatprep.mubr.bf16.mxu0 0
        %2049 = vmatmul.mubr.bf16.gmra.mrb[0].mxu0 %v1995
        %v2050 = vpop.f32.mrb[0].mxu0
        %v2051 = vadd.f32 0.0, %v2050
        %v2052 = vpop.f32.mrb[0].mxu0
        %v2053 = vpop.f32.mrb[0].mxu0
        %v2054 = vadd.f32 0.0, %v2053
        %v2055 = vpop.f32.mrb[0].mxu0
        %2056 = vmatprep.mubr.bf16.mxu0 0
        %2057 = vmatmul.mubr.bf16.gmra.mrb[0].mxu0 %v1998
        %v2058 = vpop.f32.mrb[0].mxu0
        %v2059 = vadd.f32 0.0, %v2058
        %v2060 = vpop.f32.mrb[0].mxu0
        %v2061 = vpop.f32.mrb[0].mxu0
        %v2062 = vadd.f32 0.0, %v2061
        %v2063 = vpop.f32.mrb[0].mxu0
        %2064 = vdwg.mxu0
        %v2065 = vadd.f32 %v1951, %v2035
        %v2066 = vadd.f32 %v1952, %v2038
        %v2067 = vadd.f32 %v1953, %v2043
        %v2068 = vadd.f32 %v1954, %v2046
        %v2069 = vadd.f32 %v1955, %v2051
        %v2070 = vadd.f32 %v1956, %v2054
        %v2071 = vadd.f32 %v1957, %v2059
        %v2072 = vadd.f32 %v1958, %v2062
        %v2073 = vld [vmem:[#allocation2 + $0x19] sm:$0xff]
        %v2074 = vld [vmem:[#allocation2 + $0x21] sm:$0xff]
        %v2075 = vld [vmem:[#allocation2 + $0x29] sm:$0xff]
        %v2076 = vld [vmem:[#allocation2 + $0x31] sm:$0xff]
        %v2077 = vld [vmem:[#allocation2 + $0x39] sm:$0xff]
        %v2078 = vld [vmem:[#allocation2 + $0x41] sm:$0xff]
        %v2079 = vld [vmem:[#allocation2 + $0x49] sm:$0xff]
        %v2080 = vld [vmem:[#allocation2 + $0x51] sm:$0xff]
        %v2081 = vmul.f32 %v2073, %v649
        %v2082 = vmul.f32 %v2074, %v650
        %v2083 = vmul.f32 %v2075, %v651
        %v2084 = vmul.f32 %v2076, %v652
        %v2085 = vmul.f32 %v2077, %v653
        %v2086 = vmul.f32 %v2078, %v654
        %v2087 = vmul.f32 %v2079, %v655
        %v2088 = vmul.f32 %v2080, %v656
        %v2089 = vpack.c.bf16 %v2082, %v2081
        %v2090 = vpack.c.bf16 %v2084, %v2083
        %v2091 = vpack.c.bf16 %v2086, %v2085
        %v2092 = vpack.c.bf16 %v2088, %v2087
        %s2093 = scalar_lea.vmem %s5, 128
        %v2094 = vld [vmem:[%s2093] sm:$0xf]
        %v2095 = vld [vmem:[%s2093 + $0x4] sm:$0xf]
        %v2096 = vld [vmem:[%s2093 + $0x8] sm:$0xf]
        %v2097 = vld [vmem:[%s2093 + $0xc] sm:$0xf]
        %v2102 = vunpack.c.l.b16 %v2094
        %v2103 = vunpack.c.l.b16 %v2095
        %v2104 = vunpack.c.l.b16 %v2096
        %v2105 = vunpack.c.l.b16 %v2097
        %v2106 = vpack.c.b16 %v2103, %v2102
        %v2107 = vpack.c.b16 %v2105, %v2104
        %v2111 = vsel %vm494, %v2089, 0
        %v2114 = vsel %vm494, %v2090, 0
        %v2117 = vsel %vm494, %v2091, 0
        %v2120 = vsel %vm494, %v2092, 0
        %2122 = vmatprep.subr.bf16.mxu0 0
        %2123 = vmatpush1.bf16.msra.mxu0 %v2106
        %2124 = vmatprep.subr.bf16.mxu0 0
        %2125 = vmatpush1.bf16.msra.mxu0 %v2107
        %2126 = vmatprep.subr.bf16.mxu0 0
        %2127 = vmatpush1.bf16.msra.mxu0 0
        %2128 = vmatprep.subr.bf16.mxu0 0
        %2129 = vmatpush1.bf16.msra.mxu0 0
        %2130 = vmatprep.subr.bf16.mxu0 0
        %2131 = vmatpush1.bf16.msra.mxu0 0
        %2132 = vmatprep.subr.bf16.mxu0 0
        %2133 = vmatpush1.bf16.msra.mxu0 0
        %2134 = vmatprep.subr.bf16.mxu0 0
        %2135 = vmatpush1.bf16.msra.mxu0 0
        %2136 = vmatprep.subr.bf16.mxu0 0
        %2137 = vmatpush1.bf16.msra.mxu0 0
        %2138 = vmatprep.subr.bf16.mxu0 0
        %2139 = vmatpush1.bf16.msra.mxu0 0
        %2140 = vmatprep.subr.bf16.mxu0 0
        %2141 = vmatpush1.bf16.msra.mxu0 0
        %2142 = vmatprep.subr.bf16.mxu0 0
        %2143 = vmatpush1.bf16.msra.mxu0 0
        %2144 = vmatprep.subr.bf16.mxu0 0
        %2145 = vmatpush1.bf16.msra.mxu0 0
        %2146 = vmatprep.subr.bf16.mxu0 0
        %2147 = vmatpush1.bf16.msra.mxu0 0
        %2148 = vmatprep.subr.bf16.mxu0 0
        %2149 = vmatpush1.bf16.msra.mxu0 0
        %2150 = vmatprep.subr.bf16.mxu0 0
        %2151 = vmatpush1.bf16.msra.mxu0 0
        %2152 = vmatprep.subr.bf16.mxu0 0
        %2153 = vmatpush1.bf16.msra.mxu0 0
        %2154 = vmatprep.mubr.bf16.mxu0 0
        %2155 = vmatmul.mubr.bf16.gmra.mrb[0].mxu0 %v2111
        %v2156 = vpop.f32.mrb[0].mxu0
        %v2157 = vadd.f32 0.0, %v2156
        %v2158 = vpop.f32.mrb[0].mxu0
        %v2159 = vpop.f32.mrb[0].mxu0
        %v2160 = vadd.f32 0.0, %v2159
        %v2161 = vpop.f32.mrb[0].mxu0
        %2162 = vmatprep.mubr.bf16.mxu0 0
        %2163 = vmatmul.mubr.bf16.gmra.mrb[0].mxu0 %v2114
        %v2164 = vpop.f32.mrb[0].mxu0
        %v2165 = vadd.f32 0.0, %v2164
        %v2166 = vpop.f32.mrb[0].mxu0
        %v2167 = vpop.f32.mrb[0].mxu0
        %v2168 = vadd.f32 0.0, %v2167
        %v2169 = vpop.f32.mrb[0].mxu0
        %2170 = vmatprep.mubr.bf16.mxu0 0
        %2171 = vmatmul.mubr.bf16.gmra.mrb[0].mxu0 %v2117
        %v2172 = vpop.f32.mrb[0].mxu0
        %v2173 = vadd.f32 0.0, %v2172
        %v2174 = vpop.f32.mrb[0].mxu0
        %v2175 = vpop.f32.mrb[0].mxu0
        %v2176 = vadd.f32 0.0, %v2175
        %v2177 = vpop.f32.mrb[0].mxu0
        %2178 = vmatprep.mubr.bf16.mxu0 0
        %2179 = vmatmul.mubr.bf16.gmra.mrb[0].mxu0 %v2120
        %v2180 = vpop.f32.mrb[0].mxu0
        %v2181 = vadd.f32 0.0, %v2180
        %v2182 = vpop.f32.mrb[0].mxu0
        %v2183 = vpop.f32.mrb[0].mxu0
        %v2184 = vadd.f32 0.0, %v2183
        %v2185 = vpop.f32.mrb[0].mxu0
        %2186 = vdwg.mxu0
        %v2187 = vadd.f32 %v2065, %v2157
        %v2188 = vadd.f32 %v2066, %v2160
        %v2189 = vadd.f32 %v2067, %v2165
        %v2190 = vadd.f32 %v2068, %v2168
        %v2191 = vadd.f32 %v2069, %v2173
        %v2192 = vadd.f32 %v2070, %v2176
        %v2193 = vadd.f32 %v2071, %v2181
        %v2194 = vadd.f32 %v2072, %v2184
        %v2195 = vld [vmem:[%s6] sm:$0x1]
        %v2197 = vlaneseq
        %v2198 = vshrl.u32 %v2197, 7
        %v2199 = vsub.s32 0, %v2198
        %v2200 = vrot.slane %v2195, %v2199
        %v2202 = vadd.f32 %v2187, %v2200
        %v2203 = vadd.f32 %v2188, %v2200
        %v2204 = vadd.f32 %v2189, %v2200
        %v2205 = vadd.f32 %v2190, %v2200
        %v2206 = vadd.f32 %v2191, %v2200
        %v2207 = vadd.f32 %v2192, %v2200
        %v2208 = vadd.f32 %v2193, %v2200
        %v2209 = vadd.f32 %v2194, %v2200
        %v2210 = vld [vmem:[%s7] sm:$0x1]
        %v2211 = vld [vmem:[%s8] sm:$0x1]
        %v2212 = vld [vmem:[%s9] sm:$0xff]
        %v2213 = vld [vmem:[%s9 + $0x8] sm:$0xff]
        %v2214 = vld [vmem:[%s9 + $0x10] sm:$0xff]
        %v2215 = vld [vmem:[%s9 + $0x18] sm:$0xff]
        %v2216 = vld [vmem:[%s9 + $0x20] sm:$0xff]
        %v2217 = vld [vmem:[%s9 + $0x28] sm:$0xff]
        %v2218 = vld [vmem:[%s9 + $0x30] sm:$0xff]
        %v2219 = vld [vmem:[%s9 + $0x38] sm:$0xff]
        %v2220 = vld [vmem:[%s10] sm:$0xff]
        %v2221 = vld [vmem:[%s10 + $0x8] sm:$0xff]
        %v2222 = vld [vmem:[%s10 + $0x10] sm:$0xff]
        %v2223 = vld [vmem:[%s10 + $0x18] sm:$0xff]
        %v2224 = vsel %vm499, %v2202, 0.0
        %v2225 = vsel %vm499, %v2203, 0.0
        %v2226 = vadd.f32 %v2224, %v2225
        %v2227 = vsel %vm499, %v2204, 0.0
        %v2228 = vadd.f32 %v2226, %v2227
        %v2229 = vsel %vm499, %v2205, 0.0
        %v2230 = vadd.f32 %v2228, %v2229
        %v2231 = vsel %vm499, %v2206, 0.0
        %v2232 = vadd.f32 %v2230, %v2231
        %v2233 = vsel %vm499, %v2207, 0.0
        %v2234 = vadd.f32 %v2232, %v2233
        %v2235 = vsel %vm499, %v2208, 0.0
        %v2236 = vadd.f32 %v2234, %v2235
        %v2237 = vsel %vm499, %v2209, 0.0
        %v2238 = vadd.f32 %v2236, %v2237
        %v2239 = vrot.slane %v2238, 4
        %v2240 = vadd.f32 %v2238, %v2239
        %v2241 = vrot.slane %v2240, 2
        %v2242 = vadd.f32 %v2240, %v2241
        %v2243 = vrot.slane %v2242, 1
        %v2244 = vadd.f32 %v2242, %v2243
        %v2246 = vsel %vm499, %v2244, 0
        %2248 = vmatprep.subr.mxu0 0.0
        %2249 = vmatpush1.msra.mxu0 %v2212
        %2250 = vmatprep.subr.mxu0 0.0
        %2251 = vmatpush1.msra.mxu0 %v2213
        %2252 = vmatprep.subr.mxu0 0.0
        %2253 = vmatpush1.msra.mxu0 %v2214
        %2254 = vmatprep.subr.mxu0 0.0
        %2255 = vmatpush1.msra.mxu0 %v2215
        %2256 = vmatprep.subr.mxu0 0.0
        %2257 = vmatpush1.msra.mxu0 %v2216
        %2258 = vmatprep.subr.mxu0 0.0
        %2259 = vmatpush1.msra.mxu0 %v2217
        %2260 = vmatprep.subr.mxu0 0.0
        %2261 = vmatpush1.msra.mxu0 %v2218
        %2262 = vmatprep.subr.mxu0 0.0
        %2263 = vmatpush1.msra.mxu0 %v2219
        %2264 = vmatprep.subr.mxu0 0.0
        %2265 = vmatpush1.msra.mxu0 0.0
        %2266 = vmatprep.subr.mxu0 0.0
        %2267 = vmatpush1.msra.mxu0 0.0
        %2268 = vmatprep.subr.mxu0 0.0
        %2269 = vmatpush1.msra.mxu0 0.0
        %2270 = vmatprep.subr.mxu0 0.0
        %2271 = vmatpush1.msra.mxu0 0.0
        %2272 = vmatprep.subr.mxu0 0.0
        %2273 = vmatpush1.msra.mxu0 0.0
        %2274 = vmatprep.subr.mxu0 0.0
        %2275 = vmatpush1.msra.mxu0 0.0
        %2276 = vmatprep.subr.mxu0 0.0
        %2277 = vmatpush1.msra.mxu0 0.0
        %2278 = vmatprep.subr.mxu0 0.0
        %2279 = vmatpush1.msra.mxu0 0.0
        %2280 = vmatprep.subr.mxu0 0.0
        %2281 = vmatpush1.msra.mxu0 0.0
        %2282 = vmatprep.subr.mxu0 0.0
        %2283 = vmatpush1.msra.mxu0 0.0
        %2284 = vmatprep.subr.mxu0 0.0
        %2285 = vmatpush1.msra.mxu0 0.0
        %2286 = vmatprep.subr.mxu0 0.0
        %2287 = vmatpush1.msra.mxu0 0.0
        %2288 = vmatprep.subr.mxu0 0.0
        %2289 = vmatpush1.msra.mxu0 0.0
        %2290 = vmatprep.subr.mxu0 0.0
        %2291 = vmatpush1.msra.mxu0 0.0
        %2292 = vmatprep.subr.mxu0 0.0
        %2293 = vmatpush1.msra.mxu0 0.0
        %2294 = vmatprep.subr.mxu0 0.0
        %2295 = vmatpush1.msra.mxu0 0.0
        %2296 = vmatprep.subr.mxu0 0.0
        %2297 = vmatpush1.msra.mxu0 0.0
        %2298 = vmatprep.subr.mxu0 0.0
        %2299 = vmatpush1.msra.mxu0 0.0
        %2300 = vmatprep.subr.mxu0 0.0
        %2301 = vmatpush1.msra.mxu0 0.0
        %2302 = vmatprep.subr.mxu0 0.0
        %2303 = vmatpush1.msra.mxu0 0.0
        %2304 = vmatprep.subr.mxu0 0.0
        %2305 = vmatpush1.msra.mxu0 0.0
        %2306 = vmatprep.subr.mxu0 0.0
        %2307 = vmatpush1.msra.mxu0 0.0
        %2308 = vmatprep.subr.mxu0 0.0
        %2309 = vmatpush1.msra.mxu0 0.0
        %2310 = vmatprep.subr.mxu0 0.0
        %2311 = vmatpush1.msra.mxu0 0.0
        %2312 = vmatprep.mubr.f32.mxu0 0.0
        %2313 = vmatmul.mubr.f32.gmra.mrb[0].mxu0 %v2246
        %v2314 = vpop.f32.mrb[0].mxu0
        %v2315 = vadd.f32 0.0, %v2314
        %v2316 = vpop.f32.mrb[0].mxu0
        %2317 = vdwg.mxu0
        %v2318 = vrcp.pop 128.0
        %v2319 = vmul.f32 %v2315, %v2318
        %v2321 = vsel %vm494, %v2319, 0
        %2323 = vmatprep.subr.mxu0 0.0
        %2324 = vmatpush1.msra.mxu0 %v2220
        %2325 = vmatprep.subr.mxu0 0.0
        %2326 = vmatpush1.msra.mxu0 %v2221
        %2327 = vmatprep.subr.mxu0 0.0
        %2328 = vmatpush1.msra.mxu0 %v2222
        %2329 = vmatprep.subr.mxu0 0.0
        %2330 = vmatpush1.msra.mxu0 %v2223
        %2331 = vmatprep.subr.mxu0 0.0
        %2332 = vmatpush1.msra.mxu0 0.0
        %2333 = vmatprep.subr.mxu0 0.0
        %2334 = vmatpush1.msra.mxu0 0.0
        %2335 = vmatprep.subr.mxu0 0.0
        %2336 = vmatpush1.msra.mxu0 0.0
        %2337 = vmatprep.subr.mxu0 0.0
        %2338 = vmatpush1.msra.mxu0 0.0
        %2339 = vmatprep.subr.mxu0 0.0
        %2340 = vmatpush1.msra.mxu0 0.0
        %2341 = vmatprep.subr.mxu0 0.0
        %2342 = vmatpush1.msra.mxu0 0.0
        %2343 = vmatprep.subr.mxu0 0.0
        %2344 = vmatpush1.msra.mxu0 0.0
        %2345 = vmatprep.subr.mxu0 0.0
        %2346 = vmatpush1.msra.mxu0 0.0
        %2347 = vmatprep.subr.mxu0 0.0
        %2348 = vmatpush1.msra.mxu0 0.0
        %2349 = vmatprep.subr.mxu0 0.0
        %2350 = vmatpush1.msra.mxu0 0.0
        %2351 = vmatprep.subr.mxu0 0.0
        %2352 = vmatpush1.msra.mxu0 0.0
        %2353 = vmatprep.subr.mxu0 0.0
        %2354 = vmatpush1.msra.mxu0 0.0
        %2355 = vmatprep.subr.mxu0 0.0
        %2356 = vmatpush1.msra.mxu0 0.0
        %2357 = vmatprep.subr.mxu0 0.0
        %2358 = vmatpush1.msra.mxu0 0.0
        %2359 = vmatprep.subr.mxu0 0.0
        %2360 = vmatpush1.msra.mxu0 0.0
        %2361 = vmatprep.subr.mxu0 0.0
        %2362 = vmatpush1.msra.mxu0 0.0
        %2363 = vmatprep.subr.mxu0 0.0
        %2364 = vmatpush1.msra.mxu0 0.0
        %2365 = vmatprep.subr.mxu0 0.0
        %2366 = vmatpush1.msra.mxu0 0.0
        %2367 = vmatprep.subr.mxu0 0.0
        %2368 = vmatpush1.msra.mxu0 0.0
        %2369 = vmatprep.subr.mxu0 0.0
        %2370 = vmatpush1.msra.mxu0 0.0
        %2371 = vmatprep.subr.mxu0 0.0
        %2372 = vmatpush1.msra.mxu0 0.0
        %2373 = vmatprep.subr.mxu0 0.0
        %2374 = vmatpush1.msra.mxu0 0.0
        %2375 = vmatprep.subr.mxu0 0.0
        %2376 = vmatpush1.msra.mxu0 0.0
        %2377 = vmatprep.subr.mxu0 0.0
        %2378 = vmatpush1.msra.mxu0 0.0
        %2379 = vmatprep.subr.mxu0 0.0
        %2380 = vmatpush1.msra.mxu0 0.0
        %2381 = vmatprep.subr.mxu0 0.0
        %2382 = vmatpush1.msra.mxu0 0.0
        %2383 = vmatprep.subr.mxu0 0.0
        %2384 = vmatpush1.msra.mxu0 0.0
        %2385 = vmatprep.subr.mxu0 0.0
        %2386 = vmatpush1.msra.mxu0 0.0
        %2387 = vmatprep.mubr.f32.mxu0 0.0
        %2388 = vmatmul.mubr.f32.gmra.mrb[0].mxu0 %v2321
        %v2389 = vpop.f32.mrb[0].mxu0
        %v2390 = vadd.f32 0.0, %v2389
        %v2391 = vpop.f32.mrb[0].mxu0
        %2392 = vdwg.mxu0
        %v2393 = vlaneseq
        %v2394 = vshrl.u32 %v2393, 7
        %v2395 = vsub.s32 0, %v2394
        %v2396 = vrot.slane %v2390, %v2395
        %v2397 = vsub.f32 %v2202, %v2396
        %v2398 = vsub.f32 %v2203, %v2396
        %v2399 = vsub.f32 %v2204, %v2396
        %v2400 = vsub.f32 %v2205, %v2396
        %v2401 = vsub.f32 %v2206, %v2396
        %v2402 = vsub.f32 %v2207, %v2396
        %v2403 = vsub.f32 %v2208, %v2396
        %v2404 = vsub.f32 %v2209, %v2396
        %v2405 = vmul.f32 %v2397, %v2397
        %v2406 = vmul.f32 %v2398, %v2398
        %v2407 = vmul.f32 %v2399, %v2399
        %v2408 = vmul.f32 %v2400, %v2400
        %v2409 = vmul.f32 %v2401, %v2401
        %v2410 = vmul.f32 %v2402, %v2402
        %v2411 = vmul.f32 %v2403, %v2403
        %v2412 = vmul.f32 %v2404, %v2404
        %v2413 = vsel %vm499, %v2405, 0.0
        %v2414 = vsel %vm499, %v2406, 0.0
        %v2415 = vadd.f32 %v2413, %v2414
        %v2416 = vsel %vm499, %v2407, 0.0
        %v2417 = vadd.f32 %v2415, %v2416
        %v2418 = vsel %vm499, %v2408, 0.0
        %v2419 = vadd.f32 %v2417, %v2418
        %v2420 = vsel %vm499, %v2409, 0.0
        %v2421 = vadd.f32 %v2419, %v2420
        %v2422 = vsel %vm499, %v2410, 0.0
        %v2423 = vadd.f32 %v2421, %v2422
        %v2424 = vsel %vm499, %v2411, 0.0
        %v2425 = vadd.f32 %v2423, %v2424
        %v2426 = vsel %vm499, %v2412, 0.0
        %v2427 = vadd.f32 %v2425, %v2426
        %v2428 = vrot.slane %v2427, 4
        %v2429 = vadd.f32 %v2427, %v2428
        %v2430 = vrot.slane %v2429, 2
        %v2431 = vadd.f32 %v2429, %v2430
        %v2432 = vrot.slane %v2431, 1
        %v2433 = vadd.f32 %v2431, %v2432
        %v2435 = vsel %vm499, %v2433, 0
        %2437 = vmatprep.subr.mxu0 0.0
        %2438 = vmatpush1.msra.mxu0 %v2212
        %2439 = vmatprep.subr.mxu0 0.0
        %2440 = vmatpush1.msra.mxu0 %v2213
        %2441 = vmatprep.subr.mxu0 0.0
        %2442 = vmatpush1.msra.mxu0 %v2214
        %2443 = vmatprep.subr.mxu0 0.0
        %2444 = vmatpush1.msra.mxu0 %v2215
        %2445 = vmatprep.subr.mxu0 0.0
        %2446 = vmatpush1.msra.mxu0 %v2216
        %2447 = vmatprep.subr.mxu0 0.0
        %2448 = vmatpush1.msra.mxu0 %v2217
        %2449 = vmatprep.subr.mxu0 0.0
        %2450 = vmatpush1.msra.mxu0 %v2218
        %2451 = vmatprep.subr.mxu0 0.0
        %2452 = vmatpush1.msra.mxu0 %v2219
        %2453 = vmatprep.subr.mxu0 0.0
        %2454 = vmatpush1.msra.mxu0 0.0
        %2455 = vmatprep.subr.mxu0 0.0
        %2456 = vmatpush1.msra.mxu0 0.0
        %2457 = vmatprep.subr.mxu0 0.0
        %2458 = vmatpush1.msra.mxu0 0.0
        %2459 = vmatprep.subr.mxu0 0.0
        %2460 = vmatpush1.msra.mxu0 0.0
        %2461 = vmatprep.subr.mxu0 0.0
        %2462 = vmatpush1.msra.mxu0 0.0
        %2463 = vmatprep.subr.mxu0 0.0
        %2464 = vmatpush1.msra.mxu0 0.0
        %2465 = vmatprep.subr.mxu0 0.0
        %2466 = vmatpush1.msra.mxu0 0.0
        %2467 = vmatprep.subr.mxu0 0.0
        %2468 = vmatpush1.msra.mxu0 0.0
        %2469 = vmatprep.subr.mxu0 0.0
        %2470 = vmatpush1.msra.mxu0 0.0
        %2471 = vmatprep.subr.mxu0 0.0
        %2472 = vmatpush1.msra.mxu0 0.0
        %2473 = vmatprep.subr.mxu0 0.0
        %2474 = vmatpush1.msra.mxu0 0.0
        %2475 = vmatprep.subr.mxu0 0.0
        %2476 = vmatpush1.msra.mxu0 0.0
        %2477 = vmatprep.subr.mxu0 0.0
        %2478 = vmatpush1.msra.mxu0 0.0
        %2479 = vmatprep.subr.mxu0 0.0
        %2480 = vmatpush1.msra.mxu0 0.0
        %2481 = vmatprep.subr.mxu0 0.0
        %2482 = vmatpush1.msra.mxu0 0.0
        %2483 = vmatprep.subr.mxu0 0.0
        %2484 = vmatpush1.msra.mxu0 0.0
        %2485 = vmatprep.subr.mxu0 0.0
        %2486 = vmatpush1.msra.mxu0 0.0
        %2487 = vmatprep.subr.mxu0 0.0
        %2488 = vmatpush1.msra.mxu0 0.0
        %2489 = vmatprep.subr.mxu0 0.0
        %2490 = vmatpush1.msra.mxu0 0.0
        %2491 = vmatprep.subr.mxu0 0.0
        %2492 = vmatpush1.msra.mxu0 0.0
        %2493 = vmatprep.subr.mxu0 0.0
        %2494 = vmatpush1.msra.mxu0 0.0
        %2495 = vmatprep.subr.mxu0 0.0
        %2496 = vmatpush1.msra.mxu0 0.0
        %2497 = vmatprep.subr.mxu0 0.0
        %2498 = vmatpush1.msra.mxu0 0.0
        %2499 = vmatprep.subr.mxu0 0.0
        %2500 = vmatpush1.msra.mxu0 0.0
        %2501 = vmatprep.mubr.f32.mxu0 0.0
        %2502 = vmatmul.mubr.f32.gmra.mrb[0].mxu0 %v2435
        %v2503 = vpop.f32.mrb[0].mxu0
        %v2504 = vadd.f32 0.0, %v2503
        %v2505 = vpop.f32.mrb[0].mxu0
        %2506 = vdwg.mxu0
        %v2507 = vmul.f32 %v2504, %v2318
        %v2508 = vmax.f32 %v2507, 0.0
        %v2510 = vsel %vm494, %v2508, 0
        %2512 = vmatprep.subr.mxu0 0.0
        %2513 = vmatpush1.msra.mxu0 %v2220
        %2514 = vmatprep.subr.mxu0 0.0
        %2515 = vmatpush1.msra.mxu0 %v2221
        %2516 = vmatprep.subr.mxu0 0.0
        %2517 = vmatpush1.msra.mxu0 %v2222
        %2518 = vmatprep.subr.mxu0 0.0
        %2519 = vmatpush1.msra.mxu0 %v2223
        %2520 = vmatprep.subr.mxu0 0.0
        %2521 = vmatpush1.msra.mxu0 0.0
        %2522 = vmatprep.subr.mxu0 0.0
        %2523 = vmatpush1.msra.mxu0 0.0
        %2524 = vmatprep.subr.mxu0 0.0
        %2525 = vmatpush1.msra.mxu0 0.0
        %2526 = vmatprep.subr.mxu0 0.0
        %2527 = vmatpush1.msra.mxu0 0.0
        %2528 = vmatprep.subr.mxu0 0.0
        %2529 = vmatpush1.msra.mxu0 0.0
        %2530 = vmatprep.subr.mxu0 0.0
        %2531 = vmatpush1.msra.mxu0 0.0
        %2532 = vmatprep.subr.mxu0 0.0
        %2533 = vmatpush1.msra.mxu0 0.0
        %2534 = vmatprep.subr.mxu0 0.0
        %2535 = vmatpush1.msra.mxu0 0.0
        %2536 = vmatprep.subr.mxu0 0.0
        %2537 = vmatpush1.msra.mxu0 0.0
        %2538 = vmatprep.subr.mxu0 0.0
        %2539 = vmatpush1.msra.mxu0 0.0
        %2540 = vmatprep.subr.mxu0 0.0
        %2541 = vmatpush1.msra.mxu0 0.0
        %2542 = vmatprep.subr.mxu0 0.0
        %2543 = vmatpush1.msra.mxu0 0.0
        %2544 = vmatprep.subr.mxu0 0.0
        %2545 = vmatpush1.msra.mxu0 0.0
        %2546 = vmatprep.subr.mxu0 0.0
        %2547 = vmatpush1.msra.mxu0 0.0
        %2548 = vmatprep.subr.mxu0 0.0
        %2549 = vmatpush1.msra.mxu0 0.0
        %2550 = vmatprep.subr.mxu0 0.0
        %2551 = vmatpush1.msra.mxu0 0.0
        %2552 = vmatprep.subr.mxu0 0.0
        %2553 = vmatpush1.msra.mxu0 0.0
        %2554 = vmatprep.subr.mxu0 0.0
        %2555 = vmatpush1.msra.mxu0 0.0
        %2556 = vmatprep.subr.mxu0 0.0
        %2557 = vmatpush1.msra.mxu0 0.0
        %2558 = vmatprep.subr.mxu0 0.0
        %2559 = vmatpush1.msra.mxu0 0.0
        %2560 = vmatprep.subr.mxu0 0.0
        %2561 = vmatpush1.msra.mxu0 0.0
        %2562 = vmatprep.subr.mxu0 0.0
        %2563 = vmatpush1.msra.mxu0 0.0
        %2564 = vmatprep.subr.mxu0 0.0
        %2565 = vmatpush1.msra.mxu0 0.0
        %2566 = vmatprep.subr.mxu0 0.0
        %2567 = vmatpush1.msra.mxu0 0.0
        %2568 = vmatprep.subr.mxu0 0.0
        %2569 = vmatpush1.msra.mxu0 0.0
        %2570 = vmatprep.subr.mxu0 0.0
        %2571 = vmatpush1.msra.mxu0 0.0
        %2572 = vmatprep.subr.mxu0 0.0
        %2573 = vmatpush1.msra.mxu0 0.0
        %2574 = vmatprep.subr.mxu0 0.0
        %2575 = vmatpush1.msra.mxu0 0.0
        %2576 = vmatprep.mubr.f32.mxu0 0.0
        %2577 = vmatmul.mubr.f32.gmra.mrb[0].mxu0 %v2510
        %v2578 = vpop.f32.mrb[0].mxu0
        %v2579 = vadd.f32 1e-05, %v2578
        %v2580 = vpop.f32.mrb[0].mxu0
        %2581 = vdwg.mxu0
        %v2582 = vrsqrt.pop %v2579
        %v2583 = vlaneseq
        %v2584 = vshrl.u32 %v2583, 7
        %v2585 = vsub.s32 0, %v2584
        %v2586 = vrot.slane %v2582, %v2585
        %v2587 = vmul.f32 %v2397, %v2586
        %v2588 = vmul.f32 %v2398, %v2586
        %v2589 = vmul.f32 %v2399, %v2586
        %v2590 = vmul.f32 %v2400, %v2586
        %v2591 = vmul.f32 %v2401, %v2586
        %v2592 = vmul.f32 %v2402, %v2586
        %v2593 = vmul.f32 %v2403, %v2586
        %v2594 = vmul.f32 %v2404, %v2586
        %v2596 = vlaneseq
        %v2597 = vshrl.u32 %v2596, 7
        %v2598 = vsub.s32 0, %v2597
        %v2599 = vrot.slane %v2210, %v2598
        %v2601 = vmul.f32 %v2587, %v2599
        %v2602 = vmul.f32 %v2588, %v2599
        %v2603 = vmul.f32 %v2589, %v2599
        %v2604 = vmul.f32 %v2590, %v2599
        %v2605 = vmul.f32 %v2591, %v2599
        %v2606 = vmul.f32 %v2592, %v2599
        %v2607 = vmul.f32 %v2593, %v2599
        %v2608 = vmul.f32 %v2594, %v2599
        %v2610 = vlaneseq
        %v2611 = vshrl.u32 %v2610, 7
        %v2612 = vsub.s32 0, %v2611
        %v2613 = vrot.slane %v2211, %v2612
        %v2615 = vadd.f32 %v2601, %v2613
        %v2616 = vadd.f32 %v2602, %v2613
        %v2617 = vadd.f32 %v2603, %v2613
        %v2618 = vadd.f32 %v2604, %v2613
        %v2619 = vadd.f32 %v2605, %v2613
        %v2620 = vadd.f32 %v2606, %v2613
        %v2621 = vadd.f32 %v2607, %v2613
        %v2622 = vadd.f32 %v2608, %v2613
        %v2623 = vxor.u32 %v2615, 2147483648
        %v2624 = vxor.u32 %v2616, 2147483648
        %v2625 = vxor.u32 %v2617, 2147483648
        %v2626 = vxor.u32 %v2618, 2147483648
        %v2627 = vxor.u32 %v2619, 2147483648
        %v2628 = vxor.u32 %v2620, 2147483648
        %v2629 = vxor.u32 %v2621, 2147483648
        %v2630 = vxor.u32 %v2622, 2147483648
        %v2631 = vmul.f32 %v2623, 1.442695
        %v2632 = vpow.pop %v2631
        %v2633 = vmul.f32 %v2624, 1.442695
        %v2634 = vpow.pop %v2633
        %v2635 = vmul.f32 %v2625, 1.442695
        %v2636 = vpow.pop %v2635
        %v2637 = vmul.f32 %v2626, 1.442695
        %v2638 = vpow.pop %v2637
        %v2639 = vmul.f32 %v2627, 1.442695
        %v2640 = vpow.pop %v2639
        %v2641 = vmul.f32 %v2628, 1.442695
        %v2642 = vpow.pop %v2641
        %v2643 = vmul.f32 %v2629, 1.442695
        %v2644 = vpow.pop %v2643
        %v2645 = vmul.f32 %v2630, 1.442695
        %v2646 = vpow.pop %v2645
        %v2647 = vadd.f32 %v2632, 1.0
        %v2648 = vadd.f32 %v2634, 1.0
        %v2649 = vadd.f32 %v2636, 1.0
        %v2650 = vadd.f32 %v2638, 1.0
        %v2651 = vadd.f32 %v2640, 1.0
        %v2652 = vadd.f32 %v2642, 1.0
        %v2653 = vadd.f32 %v2644, 1.0
        %v2654 = vadd.f32 %v2646, 1.0
        %v2655 = vrcp.pop %v2647
        %v2656 = vmul.f32 1.0, %v2655
        %v2657 = vrcp.pop %v2648
        %v2658 = vmul.f32 1.0, %v2657
        %v2659 = vrcp.pop %v2649
        %v2660 = vmul.f32 1.0, %v2659
        %v2661 = vrcp.pop %v2650
        %v2662 = vmul.f32 1.0, %v2661
        %v2663 = vrcp.pop %v2651
        %v2664 = vmul.f32 1.0, %v2663
        %v2665 = vrcp.pop %v2652
        %v2666 = vmul.f32 1.0, %v2665
        %v2667 = vrcp.pop %v2653
        %v2668 = vmul.f32 1.0, %v2667
        %v2669 = vrcp.pop %v2654
        %v2670 = vmul.f32 1.0, %v2669
        %v2671 = vmul.f32 %v2615, %v2656
        %v2672 = vmul.f32 %v2616, %v2658
        %v2673 = vmul.f32 %v2617, %v2660
        %v2674 = vmul.f32 %v2618, %v2662
        %v2675 = vmul.f32 %v2619, %v2664
        %v2676 = vmul.f32 %v2620, %v2666
        %v2677 = vmul.f32 %v2621, %v2668
        %v2678 = vmul.f32 %v2622, %v2670
        %2679 = vst.msk [vmem:[#allocation3 + $0x10] sm:$0xff] %vm499, %v2671
        %2680 = vst.msk [vmem:[#allocation3 + $0x18] sm:$0xff] %vm499, %v2672
        %2681 = vst.msk [vmem:[#allocation3 + $0x20] sm:$0xff] %vm499, %v2673
        %2682 = vst.msk [vmem:[#allocation3 + $0x28] sm:$0xff] %vm499, %v2674
        %2683 = vst.msk [vmem:[#allocation3 + $0x30] sm:$0xff] %vm499, %v2675
        %2684 = vst.msk [vmem:[#allocation3 + $0x38] sm:$0xff] %vm499, %v2676
        %2685 = vst.msk [vmem:[#allocation3 + $0x40] sm:$0xff] %vm499, %v2677
        %2686 = vst.msk [vmem:[#allocation3 + $0x48] sm:$0xff] %vm499, %v2678
        %v2687 = vld [vmem:[#allocation3 + $0x7] sm:$0xff]
        %v2688 = vld [vmem:[#allocation3 + $0xf] sm:$0xff]
        %v2689 = vld [vmem:[#allocation3 + $0x17] sm:$0xff]
        %v2690 = vld [vmem:[#allocation3 + $0x1f] sm:$0xff]
        %v2691 = vld [vmem:[#allocation3 + $0x27] sm:$0xff]
        %v2692 = vld [vmem:[#allocation3 + $0x2f] sm:$0xff]
        %v2693 = vld [vmem:[#allocation3 + $0x37] sm:$0xff]
        %v2694 = vld [vmem:[#allocation3 + $0x3f] sm:$0xff]
        %v2695 = vmul.f32 %v2687, %v625
        %v2696 = vmul.f32 %v2688, %v626
        %v2697 = vmul.f32 %v2689, %v627
        %v2698 = vmul.f32 %v2690, %v628
        %v2699 = vmul.f32 %v2691, %v629
        %v2700 = vmul.f32 %v2692, %v630
        %v2701 = vmul.f32 %v2693, %v631
        %v2702 = vmul.f32 %v2694, %v632
        %v2703 = vpack.c.bf16 %v2696, %v2695
        %v2704 = vpack.c.bf16 %v2698, %v2697
        %v2705 = vpack.c.bf16 %v2700, %v2699
        %v2706 = vpack.c.bf16 %v2702, %v2701
        %v2707 = vld [vmem:[%s11] sm:$0xf]
        %v2708 = vld [vmem:[%s11 + $0x4] sm:$0xf]
        %v2709 = vld [vmem:[%s11 + $0x8] sm:$0xf]
        %v2710 = vld [vmem:[%s11 + $0xc] sm:$0xf]
        %v2711 = vld [vmem:[%s11 + $0x10] sm:$0xf]
        %v2712 = vld [vmem:[%s11 + $0x14] sm:$0xf]
        %v2713 = vld [vmem:[%s11 + $0x18] sm:$0xf]
        %v2714 = vld [vmem:[%s11 + $0x1c] sm:$0xf]
        %v2715 = vld [vmem:[#allocation3 + $0x8] sm:$0xff]
        %v2716 = vld [vmem:[#allocation3 + $0x10] sm:$0xff]
        %v2717 = vld [vmem:[#allocation3 + $0x18] sm:$0xff]
        %v2718 = vld [vmem:[#allocation3 + $0x20] sm:$0xff]
        %v2719 = vld [vmem:[#allocation3 + $0x28] sm:$0xff]
        %v2720 = vld [vmem:[#allocation3 + $0x30] sm:$0xff]
        %v2721 = vld [vmem:[#allocation3 + $0x38] sm:$0xff]
        %v2722 = vld [vmem:[#allocation3 + $0x40] sm:$0xff]
        %v2723 = vpack.c.bf16 %v2716, %v2715
        %v2724 = vpack.c.bf16 %v2718, %v2717
        %v2725 = vpack.c.bf16 %v2720, %v2719
        %v2726 = vpack.c.bf16 %v2722, %v2721
        %s2727 = scalar_lea.vmem %s11, 32
        %v2728 = vld [vmem:[%s2727] sm:$0xf]
        %v2729 = vld [vmem:[%s2727 + $0x4] sm:$0xf]
        %v2730 = vld [vmem:[%s2727 + $0x8] sm:$0xf]
        %v2731 = vld [vmem:[%s2727 + $0xc] sm:$0xf]
        %v2732 = vld [vmem:[%s2727 + $0x10] sm:$0xf]
        %v2733 = vld [vmem:[%s2727 + $0x14] sm:$0xf]
        %v2734 = vld [vmem:[%s2727 + $0x18] sm:$0xf]
        %v2735 = vld [vmem:[%s2727 + $0x1c] sm:$0xf]
        %v2744 = vunpack.c.l.b16 %v2728
        %v2745 = vunpack.c.l.b16 %v2729
        %v2746 = vunpack.c.l.b16 %v2730
        %v2747 = vunpack.c.l.b16 %v2731
        %v2748 = vunpack.c.l.b16 %v2732
        %v2749 = vunpack.c.l.b16 %v2733
        %v2750 = vunpack.c.l.b16 %v2734
        %v2751 = vunpack.c.l.b16 %v2735
        %v2752 = vpack.c.b16 %v2745, %v2744
        %v2753 = vpack.c.b16 %v2747, %v2746
        %v2754 = vpack.c.b16 %v2749, %v2748
        %v2755 = vpack.c.b16 %v2751, %v2750
        %v2761 = vsel %vm499, %v2723, 0
        %v2764 = vsel %vm499, %v2724, 0
        %v2767 = vsel %vm499, %v2725, 0
        %v2770 = vsel %vm499, %v2726, 0
        %2772 = vmatprep.subr.bf16.mxu0 0
        %2773 = vmatpush1.bf16.msra.mxu0 %v2752
        %2774 = vmatprep.subr.bf16.mxu0 0
        %2775 = vmatpush1.bf16.msra.mxu0 %v2753
        %2776 = vmatprep.subr.bf16.mxu0 0
        %2777 = vmatpush1.bf16.msra.mxu0 %v2754
        %2778 = vmatprep.subr.bf16.mxu0 0
        %2779 = vmatpush1.bf16.msra.mxu0 %v2755
        %2780 = vmatprep.subr.bf16.mxu0 0
        %2781 = vmatpush1.bf16.msra.mxu0 0
        %2782 = vmatprep.subr.bf16.mxu0 0
        %2783 = vmatpush1.bf16.msra.mxu0 0
        %2784 = vmatprep.subr.bf16.mxu0 0
        %2785 = vmatpush1.bf16.msra.mxu0 0
        %2786 = vmatprep.subr.bf16.mxu0 0
        %2787 = vmatpush1.bf16.msra.mxu0 0
        %2788 = vmatprep.subr.bf16.mxu0 0
        %2789 = vmatpush1.bf16.msra.mxu0 0
        %2790 = vmatprep.subr.bf16.mxu0 0
        %2791 = vmatpush1.bf16.msra.mxu0 0
        %2792 = vmatprep.subr.bf16.mxu0 0
        %2793 = vmatpush1.bf16.msra.mxu0 0
        %2794 = vmatprep.subr.bf16.mxu0 0
        %2795 = vmatpush1.bf16.msra.mxu0 0
        %2796 = vmatprep.subr.bf16.mxu0 0
        %2797 = vmatpush1.bf16.msra.mxu0 0
        %2798 = vmatprep.subr.bf16.mxu0 0
        %2799 = vmatpush1.bf16.msra.mxu0 0
        %2800 = vmatprep.subr.bf16.mxu0 0
        %2801 = vmatpush1.bf16.msra.mxu0 0
        %2802 = vmatprep.subr.bf16.mxu0 0
        %2803 = vmatpush1.bf16.msra.mxu0 0
        %2804 = vmatprep.mubr.bf16.mxu0 0
        %2805 = vmatmul.mubr.bf16.gmra.mrb[0].mxu0 %v2761
        %v2806 = vpop.f32.mrb[0].mxu0
        %v2807 = vadd.f32 0.0, %v2806
        %v2808 = vpop.f32.mrb[0].mxu0
        %v2809 = vpop.f32.mrb[0].mxu0
        %v2810 = vadd.f32 0.0, %v2809
        %v2811 = vpop.f32.mrb[0].mxu0
        %2812 = vmatprep.mubr.bf16.mxu0 0
        %2813 = vmatmul.mubr.bf16.gmra.mrb[0].mxu0 %v2764
        %v2814 = vpop.f32.mrb[0].mxu0
        %v2815 = vadd.f32 0.0, %v2814
        %v2816 = vpop.f32.mrb[0].mxu0
        %v2817 = vpop.f32.mrb[0].mxu0
        %v2818 = vadd.f32 0.0, %v2817
        %v2819 = vpop.f32.mrb[0].mxu0
        %2820 = vmatprep.mubr.bf16.mxu0 0
        %2821 = vmatmul.mubr.bf16.gmra.mrb[0].mxu0 %v2767
        %v2822 = vpop.f32.mrb[0].mxu0
        %v2823 = vadd.f32 0.0, %v2822
        %v2824 = vpop.f32.mrb[0].mxu0
        %v2825 = vpop.f32.mrb[0].mxu0
        %v2826 = vadd.f32 0.0, %v2825
        %v2827 = vpop.f32.mrb[0].mxu0
        %2828 = vmatprep.mubr.bf16.mxu0 0
        %2829 = vmatmul.mubr.bf16.gmra.mrb[0].mxu0 %v2770
        %v2830 = vpop.f32.mrb[0].mxu0
        %v2831 = vadd.f32 0.0, %v2830
        %v2832 = vpop.f32.mrb[0].mxu0
        %v2833 = vpop.f32.mrb[0].mxu0
        %v2834 = vadd.f32 0.0, %v2833
        %v2835 = vpop.f32.mrb[0].mxu0
        %2836 = vdwg.mxu0
        %v2845 = vunpack.c.l.b16 %v2707
        %v2846 = vunpack.c.l.b16 %v2708
        %v2847 = vunpack.c.l.b16 %v2709
        %v2848 = vunpack.c.l.b16 %v2710
        %v2849 = vunpack.c.l.b16 %v2711
        %v2850 = vunpack.c.l.b16 %v2712
        %v2851 = vunpack.c.l.b16 %v2713
        %v2852 = vunpack.c.l.b16 %v2714
        %v2853 = vpack.c.b16 %v2846, %v2845
        %v2854 = vpack.c.b16 %v2848, %v2847
        %v2855 = vpack.c.b16 %v2850, %v2849
        %v2856 = vpack.c.b16 %v2852, %v2851
        %v2862 = vsel %vm499, %v2703, 0
        %v2865 = vsel %vm499, %v2704, 0
        %v2868 = vsel %vm499, %v2705, 0
        %v2871 = vsel %vm499, %v2706, 0
        %2873 = vmatprep.subr.bf16.mxu0 0
        %2874 = vmatpush1.bf16.msra.mxu0 %v2853
        %2875 = vmatprep.subr.bf16.mxu0 0
        %2876 = vmatpush1.bf16.msra.mxu0 %v2854
        %2877 = vmatprep.subr.bf16.mxu0 0
        %2878 = vmatpush1.bf16.msra.mxu0 %v2855
        %2879 = vmatprep.subr.bf16.mxu0 0
        %2880 = vmatpush1.bf16.msra.mxu0 %v2856
        %2881 = vmatprep.subr.bf16.mxu0 0
        %2882 = vmatpush1.bf16.msra.mxu0 0
        %2883 = vmatprep.subr.bf16.mxu0 0
        %2884 = vmatpush1.bf16.msra.mxu0 0
        %2885 = vmatprep.subr.bf16.mxu0 0
        %2886 = vmatpush1.bf16.msra.mxu0 0
        %2887 = vmatprep.subr.bf16.mxu0 0
        %2888 = vmatpush1.bf16.msra.mxu0 0
        %2889 = vmatprep.subr.bf16.mxu0 0
        %2890 = vmatpush1.bf16.msra.mxu0 0
        %2891 = vmatprep.subr.bf16.mxu0 0
        %2892 = vmatpush1.bf16.msra.mxu0 0
        %2893 = vmatprep.subr.bf16.mxu0 0
        %2894 = vmatpush1.bf16.msra.mxu0 0
        %2895 = vmatprep.subr.bf16.mxu0 0
        %2896 = vmatpush1.bf16.msra.mxu0 0
        %2897 = vmatprep.subr.bf16.mxu0 0
        %2898 = vmatpush1.bf16.msra.mxu0 0
        %2899 = vmatprep.subr.bf16.mxu0 0
        %2900 = vmatpush1.bf16.msra.mxu0 0
        %2901 = vmatprep.subr.bf16.mxu0 0
        %2902 = vmatpush1.bf16.msra.mxu0 0
        %2903 = vmatprep.subr.bf16.mxu0 0
        %2904 = vmatpush1.bf16.msra.mxu0 0
        %2905 = vmatprep.mubr.bf16.mxu0 0
        %2906 = vmatmul.mubr.bf16.gmra.mrb[0].mxu0 %v2862
        %v2907 = vpop.f32.mrb[0].mxu0
        %v2908 = vadd.f32 %v2807, %v2907
        %v2909 = vpop.f32.mrb[0].mxu0
        %v2910 = vpop.f32.mrb[0].mxu0
        %v2911 = vadd.f32 %v2810, %v2910
        %v2912 = vpop.f32.mrb[0].mxu0
        %2913 = vmatprep.mubr.bf16.mxu0 0
        %2914 = vmatmul.mubr.bf16.gmra.mrb[0].mxu0 %v2865
        %v2915 = vpop.f32.mrb[0].mxu0
        %v2916 = vadd.f32 %v2815, %v2915
        %v2917 = vpop.f32.mrb[0].mxu0
        %v2918 = vpop.f32.mrb[0].mxu0
        %v2919 = vadd.f32 %v2818, %v2918
        %v2920 = vpop.f32.mrb[0].mxu0
        %2921 = vmatprep.mubr.bf16.mxu0 0
        %2922 = vmatmul.mubr.bf16.gmra.mrb[0].mxu0 %v2868
        %v2923 = vpop.f32.mrb[0].mxu0
        %v2924 = vadd.f32 %v2823, %v2923
        %v2925 = vpop.f32.mrb[0].mxu0
        %v2926 = vpop.f32.mrb[0].mxu0
        %v2927 = vadd.f32 %v2826, %v2926
        %v2928 = vpop.f32.mrb[0].mxu0
        %2929 = vmatprep.mubr.bf16.mxu0 0
        %2930 = vmatmul.mubr.bf16.gmra.mrb[0].mxu0 %v2871
        %v2931 = vpop.f32.mrb[0].mxu0
        %v2932 = vadd.f32 %v2831, %v2931
        %v2933 = vpop.f32.mrb[0].mxu0
        %v2934 = vpop.f32.mrb[0].mxu0
        %v2935 = vadd.f32 %v2834, %v2934
        %v2936 = vpop.f32.mrb[0].mxu0
        %2937 = vdwg.mxu0
        %v2938 = vld [vmem:[#allocation3 + $0x9] sm:$0xff]
        %v2939 = vld [vmem:[#allocation3 + $0x11] sm:$0xff]
        %v2940 = vld [vmem:[#allocation3 + $0x19] sm:$0xff]
        %v2941 = vld [vmem:[#allocation3 + $0x21] sm:$0xff]
        %v2942 = vld [vmem:[#allocation3 + $0x29] sm:$0xff]
        %v2943 = vld [vmem:[#allocation3 + $0x31] sm:$0xff]
        %v2944 = vld [vmem:[#allocation3 + $0x39] sm:$0xff]
        %v2945 = vld [vmem:[#allocation3 + $0x41] sm:$0xff]
        %v2946 = vmul.f32 %v2938, %v649
        %v2947 = vmul.f32 %v2939, %v650
        %v2948 = vmul.f32 %v2940, %v651
        %v2949 = vmul.f32 %v2941, %v652
        %v2950 = vmul.f32 %v2942, %v653
        %v2951 = vmul.f32 %v2943, %v654
        %v2952 = vmul.f32 %v2944, %v655
        %v2953 = vmul.f32 %v2945, %v656
        %v2954 = vpack.c.bf16 %v2947, %v2946
        %v2955 = vpack.c.bf16 %v2949, %v2948
        %v2956 = vpack.c.bf16 %v2951, %v2950
        %v2957 = vpack.c.bf16 %v2953, %v2952
        %s2958 = scalar_lea.vmem %s11, 64
        %v2959 = vld [vmem:[%s2958] sm:$0xf]
        %v2960 = vld [vmem:[%s2958 + $0x4] sm:$0xf]
        %v2961 = vld [vmem:[%s2958 + $0x8] sm:$0xf]
        %v2962 = vld [vmem:[%s2958 + $0xc] sm:$0xf]
        %v2963 = vld [vmem:[%s2958 + $0x10] sm:$0xf]
        %v2964 = vld [vmem:[%s2958 + $0x14] sm:$0xf]
        %v2965 = vld [vmem:[%s2958 + $0x18] sm:$0xf]
        %v2966 = vld [vmem:[%s2958 + $0x1c] sm:$0xf]
        %v2975 = vunpack.c.l.b16 %v2959
        %v2976 = vunpack.c.l.b16 %v2960
        %v2977 = vunpack.c.l.b16 %v2961
        %v2978 = vunpack.c.l.b16 %v2962
        %v2979 = vunpack.c.l.b16 %v2963
        %v2980 = vunpack.c.l.b16 %v2964
        %v2981 = vunpack.c.l.b16 %v2965
        %v2982 = vunpack.c.l.b16 %v2966
        %v2983 = vpack.c.b16 %v2976, %v2975
        %v2984 = vpack.c.b16 %v2978, %v2977
        %v2985 = vpack.c.b16 %v2980, %v2979
        %v2986 = vpack.c.b16 %v2982, %v2981
        %v2992 = vsel %vm499, %v2954, 0
        %v2995 = vsel %vm499, %v2955, 0
        %v2998 = vsel %vm499, %v2956, 0
        %v3001 = vsel %vm499, %v2957, 0
        %3003 = vmatprep.subr.bf16.mxu0 0
        %3004 = vmatpush1.bf16.msra.mxu0 %v2983
        %3005 = vmatprep.subr.bf16.mxu0 0
        %3006 = vmatpush1.bf16.msra.mxu0 %v2984
        %3007 = vmatprep.subr.bf16.mxu0 0
        %3008 = vmatpush1.bf16.msra.mxu0 %v2985
        %3009 = vmatprep.subr.bf16.mxu0 0
        %3010 = vmatpush1.bf16.msra.mxu0 %v2986
        %3011 = vmatprep.subr.bf16.mxu0 0
        %3012 = vmatpush1.bf16.msra.mxu0 0
        %3013 = vmatprep.subr.bf16.mxu0 0
        %3014 = vmatpush1.bf16.msra.mxu0 0
        %3015 = vmatprep.subr.bf16.mxu0 0
        %3016 = vmatpush1.bf16.msra.mxu0 0
        %3017 = vmatprep.subr.bf16.mxu0 0
        %3018 = vmatpush1.bf16.msra.mxu0 0
        %3019 = vmatprep.subr.bf16.mxu0 0
        %3020 = vmatpush1.bf16.msra.mxu0 0
        %3021 = vmatprep.subr.bf16.mxu0 0
        %3022 = vmatpush1.bf16.msra.mxu0 0
        %3023 = vmatprep.subr.bf16.mxu0 0
        %3024 = vmatpush1.bf16.msra.mxu0 0
        %3025 = vmatprep.subr.bf16.mxu0 0
        %3026 = vmatpush1.bf16.msra.mxu0 0
        %3027 = vmatprep.subr.bf16.mxu0 0
        %3028 = vmatpush1.bf16.msra.mxu0 0
        %3029 = vmatprep.subr.bf16.mxu0 0
        %3030 = vmatpush1.bf16.msra.mxu0 0
        %3031 = vmatprep.subr.bf16.mxu0 0
        %3032 = vmatpush1.bf16.msra.mxu0 0
        %3033 = vmatprep.subr.bf16.mxu0 0
        %3034 = vmatpush1.bf16.msra.mxu0 0
        %3035 = vmatprep.mubr.bf16.mxu0 0
        %3036 = vmatmul.mubr.bf16.gmra.mrb[0].mxu0 %v2992
        %v3037 = vpop.f32.mrb[0].mxu0
        %v3038 = vadd.f32 0.0, %v3037
        %v3039 = vpop.f32.mrb[0].mxu0
        %v3040 = vpop.f32.mrb[0].mxu0
        %v3041 = vadd.f32 0.0, %v3040
        %v3042 = vpop.f32.mrb[0].mxu0
        %3043 = vmatprep.mubr.bf16.mxu0 0
        %3044 = vmatmul.mubr.bf16.gmra.mrb[0].mxu0 %v2995
        %v3045 = vpop.f32.mrb[0].mxu0
        %v3046 = vadd.f32 0.0, %v3045
        %v3047 = vpop.f32.mrb[0].mxu0
        %v3048 = vpop.f32.mrb[0].mxu0
        %v3049 = vadd.f32 0.0, %v3048
        %v3050 = vpop.f32.mrb[0].mxu0
        %3051 = vmatprep.mubr.bf16.mxu0 0
        %3052 = vmatmul.mubr.bf16.gmra.mrb[0].mxu0 %v2998
        %v3053 = vpop.f32.mrb[0].mxu0
        %v3054 = vadd.f32 0.0, %v3053
        %v3055 = vpop.f32.mrb[0].mxu0
        %v3056 = vpop.f32.mrb[0].mxu0
        %v3057 = vadd.f32 0.0, %v3056
        %v3058 = vpop.f32.mrb[0].mxu0
        %3059 = vmatprep.mubr.bf16.mxu0 0
        %3060 = vmatmul.mubr.bf16.gmra.mrb[0].mxu0 %v3001
        %v3061 = vpop.f32.mrb[0].mxu0
        %v3062 = vadd.f32 0.0, %v3061
        %v3063 = vpop.f32.mrb[0].mxu0
        %v3064 = vpop.f32.mrb[0].mxu0
        %v3065 = vadd.f32 0.0, %v3064
        %v3066 = vpop.f32.mrb[0].mxu0
        %3067 = vdwg.mxu0
        %v3068 = vadd.f32 %v2908, %v3038
        %v3069 = vadd.f32 %v2911, %v3041
        %v3070 = vadd.f32 %v2916, %v3046
        %v3071 = vadd.f32 %v2919, %v3049
        %v3072 = vadd.f32 %v2924, %v3054
        %v3073 = vadd.f32 %v2927, %v3057
        %v3074 = vadd.f32 %v2932, %v3062
        %v3075 = vadd.f32 %v2935, %v3065
        %v3076 = vld [vmem:[#allocation3 + $0xf] sm:$0xff]
        %v3077 = vld [vmem:[#allocation3 + $0x17] sm:$0xff]
        %v3078 = vld [vmem:[#allocation3 + $0x1f] sm:$0xff]
        %v3079 = vld [vmem:[#allocation3 + $0x27] sm:$0xff]
        %v3080 = vld [vmem:[#allocation3 + $0x2f] sm:$0xff]
        %v3081 = vld [vmem:[#allocation3 + $0x37] sm:$0xff]
        %v3082 = vld [vmem:[#allocation3 + $0x3f] sm:$0xff]
        %v3083 = vld [vmem:[#allocation3 + $0x47] sm:$0xff]
        %v3084 = vmul.f32 %v3076, %v625
        %v3085 = vmul.f32 %v3077, %v626
        %v3086 = vmul.f32 %v3078, %v627
        %v3087 = vmul.f32 %v3079, %v628
        %v3088 = vmul.f32 %v3080, %v629
        %v3089 = vmul.f32 %v3081, %v630
        %v3090 = vmul.f32 %v3082, %v631
        %v3091 = vmul.f32 %v3083, %v632
        %v3092 = vpack.c.bf16 %v3085, %v3084
        %v3093 = vpack.c.bf16 %v3087, %v3086
        %v3094 = vpack.c.bf16 %v3089, %v3088
        %v3095 = vpack.c.bf16 %v3091, %v3090
        %s3096 = scalar_lea.vmem %s11, 96
        %v3097 = vld [vmem:[%s3096] sm:$0xf]
        %v3098 = vld [vmem:[%s3096 + $0x4] sm:$0xf]
        %v3099 = vld [vmem:[%s3096 + $0x8] sm:$0xf]
        %v3100 = vld [vmem:[%s3096 + $0xc] sm:$0xf]
        %v3101 = vld [vmem:[%s3096 + $0x10] sm:$0xf]
        %v3102 = vld [vmem:[%s3096 + $0x14] sm:$0xf]
        %v3103 = vld [vmem:[%s3096 + $0x18] sm:$0xf]
        %v3104 = vld [vmem:[%s3096 + $0x1c] sm:$0xf]
        %v3113 = vunpack.c.l.b16 %v3097
        %v3114 = vunpack.c.l.b16 %v3098
        %v3115 = vunpack.c.l.b16 %v3099
        %v3116 = vunpack.c.l.b16 %v3100
        %v3117 = vunpack.c.l.b16 %v3101
        %v3118 = vunpack.c.l.b16 %v3102
        %v3119 = vunpack.c.l.b16 %v3103
        %v3120 = vunpack.c.l.b16 %v3104
        %v3121 = vpack.c.b16 %v3114, %v3113
        %v3122 = vpack.c.b16 %v3116, %v3115
        %v3123 = vpack.c.b16 %v3118, %v3117
        %v3124 = vpack.c.b16 %v3120, %v3119
        %v3130 = vsel %vm499, %v3092, 0
        %v3133 = vsel %vm499, %v3093, 0
        %v3136 = vsel %vm499, %v3094, 0
        %v3139 = vsel %vm499, %v3095, 0
        %3141 = vmatprep.subr.bf16.mxu0 0
        %3142 = vmatpush1.bf16.msra.mxu0 %v3121
        %3143 = vmatprep.subr.bf16.mxu0 0
        %3144 = vmatpush1.bf16.msra.mxu0 %v3122
        %3145 = vmatprep.subr.bf16.mxu0 0
        %3146 = vmatpush1.bf16.msra.mxu0 %v3123
        %3147 = vmatprep.subr.bf16.mxu0 0
        %3148 = vmatpush1.bf16.msra.mxu0 %v3124
        %3149 = vmatprep.subr.bf16.mxu0 0
        %3150 = vmatpush1.bf16.msra.mxu0 0
        %3151 = vmatprep.subr.bf16.mxu0 0
        %3152 = vmatpush1.bf16.msra.mxu0 0
        %3153 = vmatprep.subr.bf16.mxu0 0
        %3154 = vmatpush1.bf16.msra.mxu0 0
        %3155 = vmatprep.subr.bf16.mxu0 0
        %3156 = vmatpush1.bf16.msra.mxu0 0
        %3157 = vmatprep.subr.bf16.mxu0 0
        %3158 = vmatpush1.bf16.msra.mxu0 0
        %3159 = vmatprep.subr.bf16.mxu0 0
        %3160 = vmatpush1.bf16.msra.mxu0 0
        %3161 = vmatprep.subr.bf16.mxu0 0
        %3162 = vmatpush1.bf16.msra.mxu0 0
        %3163 = vmatprep.subr.bf16.mxu0 0
        %3164 = vmatpush1.bf16.msra.mxu0 0
        %3165 = vmatprep.subr.bf16.mxu0 0
        %3166 = vmatpush1.bf16.msra.mxu0 0
        %3167 = vmatprep.subr.bf16.mxu0 0
        %3168 = vmatpush1.bf16.msra.mxu0 0
        %3169 = vmatprep.subr.bf16.mxu0 0
        %3170 = vmatpush1.bf16.msra.mxu0 0
        %3171 = vmatprep.subr.bf16.mxu0 0
        %3172 = vmatpush1.bf16.msra.mxu0 0
        %3173 = vmatprep.mubr.bf16.mxu0 0
        %3174 = vmatmul.mubr.bf16.gmra.mrb[0].mxu0 %v3130
        %v3175 = vpop.f32.mrb[0].mxu0
        %v3176 = vadd.f32 0.0, %v3175
        %v3177 = vpop.f32.mrb[0].mxu0
        %v3178 = vpop.f32.mrb[0].mxu0
        %v3179 = vadd.f32 0.0, %v3178
        %v3180 = vpop.f32.mrb[0].mxu0
        %3181 = vmatprep.mubr.bf16.mxu0 0
        %3182 = vmatmul.mubr.bf16.gmra.mrb[0].mxu0 %v3133
        %v3183 = vpop.f32.mrb[0].mxu0
        %v3184 = vadd.f32 0.0, %v3183
        %v3185 = vpop.f32.mrb[0].mxu0
        %v3186 = vpop.f32.mrb[0].mxu0
        %v3187 = vadd.f32 0.0, %v3186
        %v3188 = vpop.f32.mrb[0].mxu0
        %3189 = vmatprep.mubr.bf16.mxu0 0
        %3190 = vmatmul.mubr.bf16.gmra.mrb[0].mxu0 %v3136
        %v3191 = vpop.f32.mrb[0].mxu0
        %v3192 = vadd.f32 0.0, %v3191
        %v3193 = vpop.f32.mrb[0].mxu0
        %v3194 = vpop.f32.mrb[0].mxu0
        %v3195 = vadd.f32 0.0, %v3194
        %v3196 = vpop.f32.mrb[0].mxu0
        %3197 = vmatprep.mubr.bf16.mxu0 0
        %3198 = vmatmul.mubr.bf16.gmra.mrb[0].mxu0 %v3139
        %v3199 = vpop.f32.mrb[0].mxu0
        %v3200 = vadd.f32 0.0, %v3199
        %v3201 = vpop.f32.mrb[0].mxu0
        %v3202 = vpop.f32.mrb[0].mxu0
        %v3203 = vadd.f32 0.0, %v3202
        %v3204 = vpop.f32.mrb[0].mxu0
        %3205 = vdwg.mxu0
        %v3206 = vadd.f32 %v3068, %v3176
        %v3207 = vadd.f32 %v3069, %v3179
        %v3208 = vadd.f32 %v3070, %v3184
        %v3209 = vadd.f32 %v3071, %v3187
        %v3210 = vadd.f32 %v3072, %v3192
        %v3211 = vadd.f32 %v3073, %v3195
        %v3212 = vadd.f32 %v3074, %v3200
        %v3213 = vadd.f32 %v3075, %v3203
        %v3214 = vld [vmem:[#allocation3 + $0x10] sm:$0xff]
        %v3215 = vld [vmem:[#allocation3 + $0x18] sm:$0xff]
        %v3216 = vld [vmem:[#allocation3 + $0x20] sm:$0xff]
        %v3217 = vld [vmem:[#allocation3 + $0x28] sm:$0xff]
        %v3218 = vld [vmem:[#allocation3 + $0x30] sm:$0xff]
        %v3219 = vld [vmem:[#allocation3 + $0x38] sm:$0xff]
        %v3220 = vld [vmem:[#allocation3 + $0x40] sm:$0xff]
        %v3221 = vld [vmem:[#allocation3 + $0x48] sm:$0xff]
        %v3222 = vpack.c.bf16 %v3215, %v3214
        %v3223 = vpack.c.bf16 %v3217, %v3216
        %v3224 = vpack.c.bf16 %v3219, %v3218
        %v3225 = vpack.c.bf16 %v3221, %v3220
        %s3226 = scalar_lea.vmem %s11, 128
        %v3227 = vld [vmem:[%s3226] sm:$0xf]
        %v3228 = vld [vmem:[%s3226 + $0x4] sm:$0xf]
        %v3229 = vld [vmem:[%s3226 + $0x8] sm:$0xf]
        %v3230 = vld [vmem:[%s3226 + $0xc] sm:$0xf]
        %v3231 = vld [vmem:[%s3226 + $0x10] sm:$0xf]
        %v3232 = vld [vmem:[%s3226 + $0x14] sm:$0xf]
        %v3233 = vld [vmem:[%s3226 + $0x18] sm:$0xf]
        %v3234 = vld [vmem:[%s3226 + $0x1c] sm:$0xf]
        %v3243 = vunpack.c.l.b16 %v3227
        %v3244 = vunpack.c.l.b16 %v3228
        %v3245 = vunpack.c.l.b16 %v3229
        %v3246 = vunpack.c.l.b16 %v3230
        %v3247 = vunpack.c.l.b16 %v3231
        %v3248 = vunpack.c.l.b16 %v3232
        %v3249 = vunpack.c.l.b16 %v3233
        %v3250 = vunpack.c.l.b16 %v3234
        %v3251 = vpack.c.b16 %v3244, %v3243
        %v3252 = vpack.c.b16 %v3246, %v3245
        %v3253 = vpack.c.b16 %v3248, %v3247
        %v3254 = vpack.c.b16 %v3250, %v3249
        %v3260 = vsel %vm499, %v3222, 0
        %v3263 = vsel %vm499, %v3223, 0
        %v3266 = vsel %vm499, %v3224, 0
        %v3269 = vsel %vm499, %v3225, 0
        %3271 = vmatprep.subr.bf16.mxu0 0
        %3272 = vmatpush1.bf16.msra.mxu0 %v3251
        %3273 = vmatprep.subr.bf16.mxu0 0
        %3274 = vmatpush1.bf16.msra.mxu0 %v3252
        %3275 = vmatprep.subr.bf16.mxu0 0
        %3276 = vmatpush1.bf16.msra.mxu0 %v3253
        %3277 = vmatprep.subr.bf16.mxu0 0
        %3278 = vmatpush1.bf16.msra.mxu0 %v3254
        %3279 = vmatprep.subr.bf16.mxu0 0
        %3280 = vmatpush1.bf16.msra.mxu0 0
        %3281 = vmatprep.subr.bf16.mxu0 0
        %3282 = vmatpush1.bf16.msra.mxu0 0
        %3283 = vmatprep.subr.bf16.mxu0 0
        %3284 = vmatpush1.bf16.msra.mxu0 0
        %3285 = vmatprep.subr.bf16.mxu0 0
        %3286 = vmatpush1.bf16.msra.mxu0 0
        %3287 = vmatprep.subr.bf16.mxu0 0
        %3288 = vmatpush1.bf16.msra.mxu0 0
        %3289 = vmatprep.subr.bf16.mxu0 0
        %3290 = vmatpush1.bf16.msra.mxu0 0
        %3291 = vmatprep.subr.bf16.mxu0 0
        %3292 = vmatpush1.bf16.msra.mxu0 0
        %3293 = vmatprep.subr.bf16.mxu0 0
        %3294 = vmatpush1.bf16.msra.mxu0 0
        %3295 = vmatprep.subr.bf16.mxu0 0
        %3296 = vmatpush1.bf16.msra.mxu0 0
        %3297 = vmatprep.subr.bf16.mxu0 0
        %3298 = vmatpush1.bf16.msra.mxu0 0
        %3299 = vmatprep.subr.bf16.mxu0 0
        %3300 = vmatpush1.bf16.msra.mxu0 0
        %3301 = vmatprep.subr.bf16.mxu0 0
        %3302 = vmatpush1.bf16.msra.mxu0 0
        %3303 = vmatprep.mubr.bf16.mxu0 0
        %3304 = vmatmul.mubr.bf16.gmra.mrb[0].mxu0 %v3260
        %v3305 = vpop.f32.mrb[0].mxu0
        %v3306 = vadd.f32 0.0, %v3305
        %v3307 = vpop.f32.mrb[0].mxu0
        %v3308 = vpop.f32.mrb[0].mxu0
        %v3309 = vadd.f32 0.0, %v3308
        %v3310 = vpop.f32.mrb[0].mxu0
        %3311 = vmatprep.mubr.bf16.mxu0 0
        %3312 = vmatmul.mubr.bf16.gmra.mrb[0].mxu0 %v3263
        %v3313 = vpop.f32.mrb[0].mxu0
        %v3314 = vadd.f32 0.0, %v3313
        %v3315 = vpop.f32.mrb[0].mxu0
        %v3316 = vpop.f32.mrb[0].mxu0
        %v3317 = vadd.f32 0.0, %v3316
        %v3318 = vpop.f32.mrb[0].mxu0
        %3319 = vmatprep.mubr.bf16.mxu0 0
        %3320 = vmatmul.mubr.bf16.gmra.mrb[0].mxu0 %v3266
        %v3321 = vpop.f32.mrb[0].mxu0
        %v3322 = vadd.f32 0.0, %v3321
        %v3323 = vpop.f32.mrb[0].mxu0
        %v3324 = vpop.f32.mrb[0].mxu0
        %v3325 = vadd.f32 0.0, %v3324
        %v3326 = vpop.f32.mrb[0].mxu0
        %3327 = vmatprep.mubr.bf16.mxu0 0
        %3328 = vmatmul.mubr.bf16.gmra.mrb[0].mxu0 %v3269
        %v3329 = vpop.f32.mrb[0].mxu0
        %v3330 = vadd.f32 0.0, %v3329
        %v3331 = vpop.f32.mrb[0].mxu0
        %v3332 = vpop.f32.mrb[0].mxu0
        %v3333 = vadd.f32 0.0, %v3332
        %v3334 = vpop.f32.mrb[0].mxu0
        %3335 = vdwg.mxu0
        %v3336 = vadd.f32 %v3206, %v3306
        %v3337 = vadd.f32 %v3207, %v3309
        %v3338 = vadd.f32 %v3208, %v3314
        %v3339 = vadd.f32 %v3209, %v3317
        %v3340 = vadd.f32 %v3210, %v3322
        %v3341 = vadd.f32 %v3211, %v3325
        %v3342 = vadd.f32 %v3212, %v3330
        %v3343 = vadd.f32 %v3213, %v3333
        %v3344 = vld [vmem:[#allocation3 + $0x11] sm:$0xff]
        %v3345 = vld [vmem:[#allocation3 + $0x19] sm:$0xff]
        %v3346 = vld [vmem:[#allocation3 + $0x21] sm:$0xff]
        %v3347 = vld [vmem:[#allocation3 + $0x29] sm:$0xff]
        %v3348 = vld [vmem:[#allocation3 + $0x31] sm:$0xff]
        %v3349 = vld [vmem:[#allocation3 + $0x39] sm:$0xff]
        %v3350 = vld [vmem:[#allocation3 + $0x41] sm:$0xff]
        %v3351 = vld [vmem:[#allocation3 + $0x49] sm:$0xff]
        %v3352 = vmul.f32 %v3344, %v649
        %v3353 = vmul.f32 %v3345, %v650
        %v3354 = vmul.f32 %v3346, %v651
        %v3355 = vmul.f32 %v3347, %v652
        %v3356 = vmul.f32 %v3348, %v653
        %v3357 = vmul.f32 %v3349, %v654
        %v3358 = vmul.f32 %v3350, %v655
        %v3359 = vmul.f32 %v3351, %v656
        %v3360 = vpack.c.bf16 %v3353, %v3352
        %v3361 = vpack.c.bf16 %v3355, %v3354
        %v3362 = vpack.c.bf16 %v3357, %v3356
        %v3363 = vpack.c.bf16 %v3359, %v3358
        %s3364 = scalar_lea.vmem %s11, 160
        %v3365 = vld [vmem:[%s3364] sm:$0xf]
        %v3366 = vld [vmem:[%s3364 + $0x4] sm:$0xf]
        %v3367 = vld [vmem:[%s3364 + $0x8] sm:$0xf]
        %v3368 = vld [vmem:[%s3364 + $0xc] sm:$0xf]
        %v3369 = vld [vmem:[%s3364 + $0x10] sm:$0xf]
        %v3370 = vld [vmem:[%s3364 + $0x14] sm:$0xf]
        %v3371 = vld [vmem:[%s3364 + $0x18] sm:$0xf]
        %v3372 = vld [vmem:[%s3364 + $0x1c] sm:$0xf]
        %v3381 = vunpack.c.l.b16 %v3365
        %v3382 = vunpack.c.l.b16 %v3366
        %v3383 = vunpack.c.l.b16 %v3367
        %v3384 = vunpack.c.l.b16 %v3368
        %v3385 = vunpack.c.l.b16 %v3369
        %v3386 = vunpack.c.l.b16 %v3370
        %v3387 = vunpack.c.l.b16 %v3371
        %v3388 = vunpack.c.l.b16 %v3372
        %v3389 = vpack.c.b16 %v3382, %v3381
        %v3390 = vpack.c.b16 %v3384, %v3383
        %v3391 = vpack.c.b16 %v3386, %v3385
        %v3392 = vpack.c.b16 %v3388, %v3387
        %v3398 = vsel %vm499, %v3360, 0
        %v3401 = vsel %vm499, %v3361, 0
        %v3404 = vsel %vm499, %v3362, 0
        %v3407 = vsel %vm499, %v3363, 0
        %3409 = vmatprep.subr.bf16.mxu0 0
        %3410 = vmatpush1.bf16.msra.mxu0 %v3389
        %3411 = vmatprep.subr.bf16.mxu0 0
        %3412 = vmatpush1.bf16.msra.mxu0 %v3390
        %3413 = vmatprep.subr.bf16.mxu0 0
        %3414 = vmatpush1.bf16.msra.mxu0 %v3391
        %3415 = vmatprep.subr.bf16.mxu0 0
        %3416 = vmatpush1.bf16.msra.mxu0 %v3392
        %3417 = vmatprep.subr.bf16.mxu0 0
        %3418 = vmatpush1.bf16.msra.mxu0 0
        %3419 = vmatprep.subr.bf16.mxu0 0
        %3420 = vmatpush1.bf16.msra.mxu0 0
        %3421 = vmatprep.subr.bf16.mxu0 0
        %3422 = vmatpush1.bf16.msra.mxu0 0
        %3423 = vmatprep.subr.bf16.mxu0 0
        %3424 = vmatpush1.bf16.msra.mxu0 0
        %3425 = vmatprep.subr.bf16.mxu0 0
        %3426 = vmatpush1.bf16.msra.mxu0 0
        %3427 = vmatprep.subr.bf16.mxu0 0
        %3428 = vmatpush1.bf16.msra.mxu0 0
        %3429 = vmatprep.subr.bf16.mxu0 0
        %3430 = vmatpush1.bf16.msra.mxu0 0
        %3431 = vmatprep.subr.bf16.mxu0 0
        %3432 = vmatpush1.bf16.msra.mxu0 0
        %3433 = vmatprep.subr.bf16.mxu0 0
        %3434 = vmatpush1.bf16.msra.mxu0 0
        %3435 = vmatprep.subr.bf16.mxu0 0
        %3436 = vmatpush1.bf16.msra.mxu0 0
        %3437 = vmatprep.subr.bf16.mxu0 0
        %3438 = vmatpush1.bf16.msra.mxu0 0
        %3439 = vmatprep.subr.bf16.mxu0 0
        %3440 = vmatpush1.bf16.msra.mxu0 0
        %3441 = vmatprep.mubr.bf16.mxu0 0
        %3442 = vmatmul.mubr.bf16.gmra.mrb[0].mxu0 %v3398
        %v3443 = vpop.f32.mrb[0].mxu0
        %v3444 = vadd.f32 0.0, %v3443
        %v3445 = vpop.f32.mrb[0].mxu0
        %v3446 = vpop.f32.mrb[0].mxu0
        %v3447 = vadd.f32 0.0, %v3446
        %v3448 = vpop.f32.mrb[0].mxu0
        %3449 = vmatprep.mubr.bf16.mxu0 0
        %3450 = vmatmul.mubr.bf16.gmra.mrb[0].mxu0 %v3401
        %v3451 = vpop.f32.mrb[0].mxu0
        %v3452 = vadd.f32 0.0, %v3451
        %v3453 = vpop.f32.mrb[0].mxu0
        %v3454 = vpop.f32.mrb[0].mxu0
        %v3455 = vadd.f32 0.0, %v3454
        %v3456 = vpop.f32.mrb[0].mxu0
        %3457 = vmatprep.mubr.bf16.mxu0 0
        %3458 = vmatmul.mubr.bf16.gmra.mrb[0].mxu0 %v3404
        %v3459 = vpop.f32.mrb[0].mxu0
        %v3460 = vadd.f32 0.0, %v3459
        %v3461 = vpop.f32.mrb[0].mxu0
        %v3462 = vpop.f32.mrb[0].mxu0
        %v3463 = vadd.f32 0.0, %v3462
        %v3464 = vpop.f32.mrb[0].mxu0
        %3465 = vmatprep.mubr.bf16.mxu0 0
        %3466 = vmatmul.mubr.bf16.gmra.mrb[0].mxu0 %v3407
        %v3467 = vpop.f32.mrb[0].mxu0
        %v3468 = vadd.f32 0.0, %v3467
        %v3469 = vpop.f32.mrb[0].mxu0
        %v3470 = vpop.f32.mrb[0].mxu0
        %v3471 = vadd.f32 0.0, %v3470
        %v3472 = vpop.f32.mrb[0].mxu0
        %3473 = vdwg.mxu0
        %v3474 = vadd.f32 %v3336, %v3444
        %v3475 = vadd.f32 %v3337, %v3447
        %v3476 = vadd.f32 %v3338, %v3452
        %v3477 = vadd.f32 %v3339, %v3455
        %v3478 = vadd.f32 %v3340, %v3460
        %v3479 = vadd.f32 %v3341, %v3463
        %v3480 = vadd.f32 %v3342, %v3468
        %v3481 = vadd.f32 %v3343, %v3471
        %v3482 = vld [vmem:[#allocation3 + $0x17] sm:$0xff]
        %v3483 = vld [vmem:[#allocation3 + $0x1f] sm:$0xff]
        %v3484 = vld [vmem:[#allocation3 + $0x27] sm:$0xff]
        %v3485 = vld [vmem:[#allocation3 + $0x2f] sm:$0xff]
        %v3486 = vld [vmem:[#allocation3 + $0x37] sm:$0xff]
        %v3487 = vld [vmem:[#allocation3 + $0x3f] sm:$0xff]
        %v3488 = vld [vmem:[#allocation3 + $0x47] sm:$0xff]
        %v3489 = vld [vmem:[#allocation3 + $0x4f] sm:$0xff]
        %v3490 = vmul.f32 %v3482, %v625
        %v3491 = vmul.f32 %v3483, %v626
        %v3492 = vmul.f32 %v3484, %v627
        %v3493 = vmul.f32 %v3485, %v628
        %v3494 = vmul.f32 %v3486, %v629
        %v3495 = vmul.f32 %v3487, %v630
        %v3496 = vmul.f32 %v3488, %v631
        %v3497 = vmul.f32 %v3489, %v632
        %v3498 = vpack.c.bf16 %v3491, %v3490
        %v3499 = vpack.c.bf16 %v3493, %v3492
        %v3500 = vpack.c.bf16 %v3495, %v3494
        %v3501 = vpack.c.bf16 %v3497, %v3496
        %s3502 = scalar_lea.vmem %s11, 192
        %v3503 = vld [vmem:[%s3502] sm:$0xf]
        %v3504 = vld [vmem:[%s3502 + $0x4] sm:$0xf]
        %v3505 = vld [vmem:[%s3502 + $0x8] sm:$0xf]
        %v3506 = vld [vmem:[%s3502 + $0xc] sm:$0xf]
        %v3507 = vld [vmem:[%s3502 + $0x10] sm:$0xf]
        %v3508 = vld [vmem:[%s3502 + $0x14] sm:$0xf]
        %v3509 = vld [vmem:[%s3502 + $0x18] sm:$0xf]
        %v3510 = vld [vmem:[%s3502 + $0x1c] sm:$0xf]
        %v3519 = vunpack.c.l.b16 %v3503
        %v3520 = vunpack.c.l.b16 %v3504
        %v3521 = vunpack.c.l.b16 %v3505
        %v3522 = vunpack.c.l.b16 %v3506
        %v3523 = vunpack.c.l.b16 %v3507
        %v3524 = vunpack.c.l.b16 %v3508
        %v3525 = vunpack.c.l.b16 %v3509
        %v3526 = vunpack.c.l.b16 %v3510
        %v3527 = vpack.c.b16 %v3520, %v3519
        %v3528 = vpack.c.b16 %v3522, %v3521
        %v3529 = vpack.c.b16 %v3524, %v3523
        %v3530 = vpack.c.b16 %v3526, %v3525
        %v3536 = vsel %vm499, %v3498, 0
        %v3539 = vsel %vm499, %v3499, 0
        %v3542 = vsel %vm499, %v3500, 0
        %v3545 = vsel %vm499, %v3501, 0
        %3547 = vmatprep.subr.bf16.mxu0 0
        %3548 = vmatpush1.bf16.msra.mxu0 %v3527
        %3549 = vmatprep.subr.bf16.mxu0 0
        %3550 = vmatpush1.bf16.msra.mxu0 %v3528
        %3551 = vmatprep.subr.bf16.mxu0 0
        %3552 = vmatpush1.bf16.msra.mxu0 %v3529
        %3553 = vmatprep.subr.bf16.mxu0 0
        %3554 = vmatpush1.bf16.msra.mxu0 %v3530
        %3555 = vmatprep.subr.bf16.mxu0 0
        %3556 = vmatpush1.bf16.msra.mxu0 0
        %3557 = vmatprep.subr.bf16.mxu0 0
        %3558 = vmatpush1.bf16.msra.mxu0 0
        %3559 = vmatprep.subr.bf16.mxu0 0
        %3560 = vmatpush1.bf16.msra.mxu0 0
        %3561 = vmatprep.subr.bf16.mxu0 0
        %3562 = vmatpush1.bf16.msra.mxu0 0
        %3563 = vmatprep.subr.bf16.mxu0 0
        %3564 = vmatpush1.bf16.msra.mxu0 0
        %3565 = vmatprep.subr.bf16.mxu0 0
        %3566 = vmatpush1.bf16.msra.mxu0 0
        %3567 = vmatprep.subr.bf16.mxu0 0
        %3568 = vmatpush1.bf16.msra.mxu0 0
        %3569 = vmatprep.subr.bf16.mxu0 0
        %3570 = vmatpush1.bf16.msra.mxu0 0
        %3571 = vmatprep.subr.bf16.mxu0 0
        %3572 = vmatpush1.bf16.msra.mxu0 0
        %3573 = vmatprep.subr.bf16.mxu0 0
        %3574 = vmatpush1.bf16.msra.mxu0 0
        %3575 = vmatprep.subr.bf16.mxu0 0
        %3576 = vmatpush1.bf16.msra.mxu0 0
        %3577 = vmatprep.subr.bf16.mxu0 0
        %3578 = vmatpush1.bf16.msra.mxu0 0
        %3579 = vmatprep.mubr.bf16.mxu0 0
        %3580 = vmatmul.mubr.bf16.gmra.mrb[0].mxu0 %v3536
        %v3581 = vpop.f32.mrb[0].mxu0
        %v3582 = vadd.f32 0.0, %v3581
        %v3583 = vpop.f32.mrb[0].mxu0
        %v3584 = vpop.f32.mrb[0].mxu0
        %v3585 = vadd.f32 0.0, %v3584
        %v3586 = vpop.f32.mrb[0].mxu0
        %3587 = vmatprep.mubr.bf16.mxu0 0
        %3588 = vmatmul.mubr.bf16.gmra.mrb[0].mxu0 %v3539
        %v3589 = vpop.f32.mrb[0].mxu0
        %v3590 = vadd.f32 0.0, %v3589
        %v3591 = vpop.f32.mrb[0].mxu0
        %v3592 = vpop.f32.mrb[0].mxu0
        %v3593 = vadd.f32 0.0, %v3592
        %v3594 = vpop.f32.mrb[0].mxu0
        %3595 = vmatprep.mubr.bf16.mxu0 0
        %3596 = vmatmul.mubr.bf16.gmra.mrb[0].mxu0 %v3542
        %v3597 = vpop.f32.mrb[0].mxu0
        %v3598 = vadd.f32 0.0, %v3597
        %v3599 = vpop.f32.mrb[0].mxu0
        %v3600 = vpop.f32.mrb[0].mxu0
        %v3601 = vadd.f32 0.0, %v3600
        %v3602 = vpop.f32.mrb[0].mxu0
        %3603 = vmatprep.mubr.bf16.mxu0 0
        %3604 = vmatmul.mubr.bf16.gmra.mrb[0].mxu0 %v3545
        %v3605 = vpop.f32.mrb[0].mxu0
        %v3606 = vadd.f32 0.0, %v3605
        %v3607 = vpop.f32.mrb[0].mxu0
        %v3608 = vpop.f32.mrb[0].mxu0
        %v3609 = vadd.f32 0.0, %v3608
        %v3610 = vpop.f32.mrb[0].mxu0
        %3611 = vdwg.mxu0
        %v3612 = vadd.f32 %v3474, %v3582
        %v3613 = vadd.f32 %v3475, %v3585
        %v3614 = vadd.f32 %v3476, %v3590
        %v3615 = vadd.f32 %v3477, %v3593
        %v3616 = vadd.f32 %v3478, %v3598
        %v3617 = vadd.f32 %v3479, %v3601
        %v3618 = vadd.f32 %v3480, %v3606
        %v3619 = vadd.f32 %v3481, %v3609
        %v3620 = vld [vmem:[#allocation3 + $0x18] sm:$0xff]
        %v3621 = vld [vmem:[#allocation3 + $0x20] sm:$0xff]
        %v3622 = vld [vmem:[#allocation3 + $0x28] sm:$0xff]
        %v3623 = vld [vmem:[#allocation3 + $0x30] sm:$0xff]
        %v3624 = vld [vmem:[#allocation3 + $0x38] sm:$0xff]
        %v3625 = vld [vmem:[#allocation3 + $0x40] sm:$0xff]
        %v3626 = vld [vmem:[#allocation3 + $0x48] sm:$0xff]
        %v3627 = vld [vmem:[#allocation3 + $0x50] sm:$0xff]
        %v3628 = vpack.c.bf16 %v3621, %v3620
        %v3629 = vpack.c.bf16 %v3623, %v3622
        %v3630 = vpack.c.bf16 %v3625, %v3624
        %v3631 = vpack.c.bf16 %v3627, %v3626
        %s3632 = scalar_lea.vmem %s11, 224
        %v3633 = vld [vmem:[%s3632] sm:$0xf]
        %v3634 = vld [vmem:[%s3632 + $0x4] sm:$0xf]
        %v3635 = vld [vmem:[%s3632 + $0x8] sm:$0xf]
        %v3636 = vld [vmem:[%s3632 + $0xc] sm:$0xf]
        %v3637 = vld [vmem:[%s3632 + $0x10] sm:$0xf]
        %v3638 = vld [vmem:[%s3632 + $0x14] sm:$0xf]
        %v3639 = vld [vmem:[%s3632 + $0x18] sm:$0xf]
        %v3640 = vld [vmem:[%s3632 + $0x1c] sm:$0xf]
        %v3649 = vunpack.c.l.b16 %v3633
        %v3650 = vunpack.c.l.b16 %v3634
        %v3651 = vunpack.c.l.b16 %v3635
        %v3652 = vunpack.c.l.b16 %v3636
        %v3653 = vunpack.c.l.b16 %v3637
        %v3654 = vunpack.c.l.b16 %v3638
        %v3655 = vunpack.c.l.b16 %v3639
        %v3656 = vunpack.c.l.b16 %v3640
        %v3657 = vpack.c.b16 %v3650, %v3649
        %v3658 = vpack.c.b16 %v3652, %v3651
        %v3659 = vpack.c.b16 %v3654, %v3653
        %v3660 = vpack.c.b16 %v3656, %v3655
        %v3666 = vsel %vm499, %v3628, 0
        %v3669 = vsel %vm499, %v3629, 0
        %v3672 = vsel %vm499, %v3630, 0
        %v3675 = vsel %vm499, %v3631, 0
        %3677 = vmatprep.subr.bf16.mxu0 0
        %3678 = vmatpush1.bf16.msra.mxu0 %v3657
        %3679 = vmatprep.subr.bf16.mxu0 0
        %3680 = vmatpush1.bf16.msra.mxu0 %v3658
        %3681 = vmatprep.subr.bf16.mxu0 0
        %3682 = vmatpush1.bf16.msra.mxu0 %v3659
        %3683 = vmatprep.subr.bf16.mxu0 0
        %3684 = vmatpush1.bf16.msra.mxu0 %v3660
        %3685 = vmatprep.subr.bf16.mxu0 0
        %3686 = vmatpush1.bf16.msra.mxu0 0
        %3687 = vmatprep.subr.bf16.mxu0 0
        %3688 = vmatpush1.bf16.msra.mxu0 0
        %3689 = vmatprep.subr.bf16.mxu0 0
        %3690 = vmatpush1.bf16.msra.mxu0 0
        %3691 = vmatprep.subr.bf16.mxu0 0
        %3692 = vmatpush1.bf16.msra.mxu0 0
        %3693 = vmatprep.subr.bf16.mxu0 0
        %3694 = vmatpush1.bf16.msra.mxu0 0
        %3695 = vmatprep.subr.bf16.mxu0 0
        %3696 = vmatpush1.bf16.msra.mxu0 0
        %3697 = vmatprep.subr.bf16.mxu0 0
        %3698 = vmatpush1.bf16.msra.mxu0 0
        %3699 = vmatprep.subr.bf16.mxu0 0
        %3700 = vmatpush1.bf16.msra.mxu0 0
        %3701 = vmatprep.subr.bf16.mxu0 0
        %3702 = vmatpush1.bf16.msra.mxu0 0
        %3703 = vmatprep.subr.bf16.mxu0 0
        %3704 = vmatpush1.bf16.msra.mxu0 0
        %3705 = vmatprep.subr.bf16.mxu0 0
        %3706 = vmatpush1.bf16.msra.mxu0 0
        %3707 = vmatprep.subr.bf16.mxu0 0
        %3708 = vmatpush1.bf16.msra.mxu0 0
        %3709 = vmatprep.mubr.bf16.mxu0 0
        %3710 = vmatmul.mubr.bf16.gmra.mrb[0].mxu0 %v3666
        %v3711 = vpop.f32.mrb[0].mxu0
        %v3712 = vadd.f32 0.0, %v3711
        %v3713 = vpop.f32.mrb[0].mxu0
        %v3714 = vpop.f32.mrb[0].mxu0
        %v3715 = vadd.f32 0.0, %v3714
        %v3716 = vpop.f32.mrb[0].mxu0
        %3717 = vmatprep.mubr.bf16.mxu0 0
        %3718 = vmatmul.mubr.bf16.gmra.mrb[0].mxu0 %v3669
        %v3719 = vpop.f32.mrb[0].mxu0
        %v3720 = vadd.f32 0.0, %v3719
        %v3721 = vpop.f32.mrb[0].mxu0
        %v3722 = vpop.f32.mrb[0].mxu0
        %v3723 = vadd.f32 0.0, %v3722
        %v3724 = vpop.f32.mrb[0].mxu0
        %3725 = vmatprep.mubr.bf16.mxu0 0
        %3726 = vmatmul.mubr.bf16.gmra.mrb[0].mxu0 %v3672
        %v3727 = vpop.f32.mrb[0].mxu0
        %v3728 = vadd.f32 0.0, %v3727
        %v3729 = vpop.f32.mrb[0].mxu0
        %v3730 = vpop.f32.mrb[0].mxu0
        %v3731 = vadd.f32 0.0, %v3730
        %v3732 = vpop.f32.mrb[0].mxu0
        %3733 = vmatprep.mubr.bf16.mxu0 0
        %3734 = vmatmul.mubr.bf16.gmra.mrb[0].mxu0 %v3675
        %v3735 = vpop.f32.mrb[0].mxu0
        %v3736 = vadd.f32 0.0, %v3735
        %v3737 = vpop.f32.mrb[0].mxu0
        %v3738 = vpop.f32.mrb[0].mxu0
        %v3739 = vadd.f32 0.0, %v3738
        %v3740 = vpop.f32.mrb[0].mxu0
        %3741 = vdwg.mxu0
        %v3742 = vadd.f32 %v3612, %v3712
        %v3743 = vadd.f32 %v3613, %v3715
        %v3744 = vadd.f32 %v3614, %v3720
        %v3745 = vadd.f32 %v3615, %v3723
        %v3746 = vadd.f32 %v3616, %v3728
        %v3747 = vadd.f32 %v3617, %v3731
        %v3748 = vadd.f32 %v3618, %v3736
        %v3749 = vadd.f32 %v3619, %v3739
        %v3750 = vld [vmem:[#allocation3 + $0x19] sm:$0xff]
        %v3751 = vld [vmem:[#allocation3 + $0x21] sm:$0xff]
        %v3752 = vld [vmem:[#allocation3 + $0x29] sm:$0xff]
        %v3753 = vld [vmem:[#allocation3 + $0x31] sm:$0xff]
        %v3754 = vld [vmem:[#allocation3 + $0x39] sm:$0xff]
        %v3755 = vld [vmem:[#allocation3 + $0x41] sm:$0xff]
        %v3756 = vld [vmem:[#allocation3 + $0x49] sm:$0xff]
        %v3757 = vld [vmem:[#allocation3 + $0x51] sm:$0xff]
        %v3758 = vmul.f32 %v3750, %v649
        %v3759 = vmul.f32 %v3751, %v650
        %v3760 = vmul.f32 %v3752, %v651
        %v3761 = vmul.f32 %v3753, %v652
        %v3762 = vmul.f32 %v3754, %v653
        %v3763 = vmul.f32 %v3755, %v654
        %v3764 = vmul.f32 %v3756, %v655
        %v3765 = vmul.f32 %v3757, %v656
        %v3766 = vpack.c.bf16 %v3759, %v3758
        %v3767 = vpack.c.bf16 %v3761, %v3760
        %v3768 = vpack.c.bf16 %v3763, %v3762
        %v3769 = vpack.c.bf16 %v3765, %v3764
        %s3770 = scalar_lea.vmem %s11, 256
        %v3771 = vld [vmem:[%s3770] sm:$0xf]
        %v3772 = vld [vmem:[%s3770 + $0x4] sm:$0xf]
        %v3773 = vld [vmem:[%s3770 + $0x8] sm:$0xf]
        %v3774 = vld [vmem:[%s3770 + $0xc] sm:$0xf]
        %v3775 = vld [vmem:[%s3770 + $0x10] sm:$0xf]
        %v3776 = vld [vmem:[%s3770 + $0x14] sm:$0xf]
        %v3777 = vld [vmem:[%s3770 + $0x18] sm:$0xf]
        %v3778 = vld [vmem:[%s3770 + $0x1c] sm:$0xf]
        %v3787 = vunpack.c.l.b16 %v3771
        %v3788 = vunpack.c.l.b16 %v3772
        %v3789 = vunpack.c.l.b16 %v3773
        %v3790 = vunpack.c.l.b16 %v3774
        %v3791 = vunpack.c.l.b16 %v3775
        %v3792 = vunpack.c.l.b16 %v3776
        %v3793 = vunpack.c.l.b16 %v3777
        %v3794 = vunpack.c.l.b16 %v3778
        %v3795 = vpack.c.b16 %v3788, %v3787
        %v3796 = vpack.c.b16 %v3790, %v3789
        %v3797 = vpack.c.b16 %v3792, %v3791
        %v3798 = vpack.c.b16 %v3794, %v3793
        %v3804 = vsel %vm499, %v3766, 0
        %v3807 = vsel %vm499, %v3767, 0
        %v3810 = vsel %vm499, %v3768, 0
        %v3813 = vsel %vm499, %v3769, 0
        %3815 = vmatprep.subr.bf16.mxu0 0
        %3816 = vmatpush1.bf16.msra.mxu0 %v3795
        %3817 = vmatprep.subr.bf16.mxu0 0
        %3818 = vmatpush1.bf16.msra.mxu0 %v3796
        %3819 = vmatprep.subr.bf16.mxu0 0
        %3820 = vmatpush1.bf16.msra.mxu0 %v3797
        %3821 = vmatprep.subr.bf16.mxu0 0
        %3822 = vmatpush1.bf16.msra.mxu0 %v3798
        %3823 = vmatprep.subr.bf16.mxu0 0
        %3824 = vmatpush1.bf16.msra.mxu0 0
        %3825 = vmatprep.subr.bf16.mxu0 0
        %3826 = vmatpush1.bf16.msra.mxu0 0
        %3827 = vmatprep.subr.bf16.mxu0 0
        %3828 = vmatpush1.bf16.msra.mxu0 0
        %3829 = vmatprep.subr.bf16.mxu0 0
        %3830 = vmatpush1.bf16.msra.mxu0 0
        %3831 = vmatprep.subr.bf16.mxu0 0
        %3832 = vmatpush1.bf16.msra.mxu0 0
        %3833 = vmatprep.subr.bf16.mxu0 0
        %3834 = vmatpush1.bf16.msra.mxu0 0
        %3835 = vmatprep.subr.bf16.mxu0 0
        %3836 = vmatpush1.bf16.msra.mxu0 0
        %3837 = vmatprep.subr.bf16.mxu0 0
        %3838 = vmatpush1.bf16.msra.mxu0 0
        %3839 = vmatprep.subr.bf16.mxu0 0
        %3840 = vmatpush1.bf16.msra.mxu0 0
        %3841 = vmatprep.subr.bf16.mxu0 0
        %3842 = vmatpush1.bf16.msra.mxu0 0
        %3843 = vmatprep.subr.bf16.mxu0 0
        %3844 = vmatpush1.bf16.msra.mxu0 0
        %3845 = vmatprep.subr.bf16.mxu0 0
        %3846 = vmatpush1.bf16.msra.mxu0 0
        %3847 = vmatprep.mubr.bf16.mxu0 0
        %3848 = vmatmul.mubr.bf16.gmra.mrb[0].mxu0 %v3804
        %v3849 = vpop.f32.mrb[0].mxu0
        %v3850 = vadd.f32 0.0, %v3849
        %v3851 = vpop.f32.mrb[0].mxu0
        %v3852 = vpop.f32.mrb[0].mxu0
        %v3853 = vadd.f32 0.0, %v3852
        %v3854 = vpop.f32.mrb[0].mxu0
        %3855 = vmatprep.mubr.bf16.mxu0 0
        %3856 = vmatmul.mubr.bf16.gmra.mrb[0].mxu0 %v3807
        %v3857 = vpop.f32.mrb[0].mxu0
        %v3858 = vadd.f32 0.0, %v3857
        %v3859 = vpop.f32.mrb[0].mxu0
        %v3860 = vpop.f32.mrb[0].mxu0
        %v3861 = vadd.f32 0.0, %v3860
        %v3862 = vpop.f32.mrb[0].mxu0
        %3863 = vmatprep.mubr.bf16.mxu0 0
        %3864 = vmatmul.mubr.bf16.gmra.mrb[0].mxu0 %v3810
        %v3865 = vpop.f32.mrb[0].mxu0
        %v3866 = vadd.f32 0.0, %v3865
        %v3867 = vpop.f32.mrb[0].mxu0
        %v3868 = vpop.f32.mrb[0].mxu0
        %v3869 = vadd.f32 0.0, %v3868
        %v3870 = vpop.f32.mrb[0].mxu0
        %3871 = vmatprep.mubr.bf16.mxu0 0
        %3872 = vmatmul.mubr.bf16.gmra.mrb[0].mxu0 %v3813
        %v3873 = vpop.f32.mrb[0].mxu0
        %v3874 = vadd.f32 0.0, %v3873
        %v3875 = vpop.f32.mrb[0].mxu0
        %v3876 = vpop.f32.mrb[0].mxu0
        %v3877 = vadd.f32 0.0, %v3876
        %v3878 = vpop.f32.mrb[0].mxu0
        %3879 = vdwg.mxu0
        %v3880 = vadd.f32 %v3742, %v3850
        %v3881 = vadd.f32 %v3743, %v3853
        %v3882 = vadd.f32 %v3744, %v3858
        %v3883 = vadd.f32 %v3745, %v3861
        %v3884 = vadd.f32 %v3746, %v3866
        %v3885 = vadd.f32 %v3747, %v3869
        %v3886 = vadd.f32 %v3748, %v3874
        %v3887 = vadd.f32 %v3749, %v3877
        %v3888 = vld [vmem:[%s12] sm:$0x1]
        %v3890 = vlaneseq
        %v3891 = vshrl.u32 %v3890, 7
        %v3892 = vsub.s32 0, %v3891
        %v3893 = vrot.slane %v3888, %v3892
        %v3895 = vadd.f32 %v3880, %v3893
        %v3896 = vadd.f32 %v3881, %v3893
        %v3897 = vadd.f32 %v3882, %v3893
        %v3898 = vadd.f32 %v3883, %v3893
        %v3899 = vadd.f32 %v3884, %v3893
        %v3900 = vadd.f32 %v3885, %v3893
        %v3901 = vadd.f32 %v3886, %v3893
        %v3902 = vadd.f32 %v3887, %v3893
        %v3903 = vpack.c.bf16 %v658, %v657
        %v3904 = vpack.c.bf16 %v660, %v659
        %v3905 = vpack.c.bf16 %v662, %v661
        %v3906 = vpack.c.bf16 %v664, %v663
        %v3907 = vld [vmem:[%s13] sm:$0xf]
        %v3908 = vld [vmem:[%s13 + $0x4] sm:$0xf]
        %v3909 = vld [vmem:[%s13 + $0x8] sm:$0xf]
        %v3910 = vld [vmem:[%s13 + $0xc] sm:$0xf]
        %v3911 = vld [vmem:[%s14] sm:$0x1]
        %v3913 = vlaneseq
        %v3914 = vshrl.u32 %v3913, 7
        %v3915 = vsub.s32 0, %v3914
        %v3916 = vrot.slane %v3911, %v3915
        %v3922 = vunpack.c.l.b16 %v3907
        %v3923 = vunpack.c.l.b16 %v3908
        %v3924 = vunpack.c.l.b16 %v3909
        %v3925 = vunpack.c.l.b16 %v3910
        %v3926 = vpack.c.b16 %v3923, %v3922
        %v3927 = vpack.c.b16 %v3925, %v3924
        %v3931 = vsel %vm494, %v3903, 0
        %v3934 = vsel %vm494, %v3904, 0
        %v3937 = vsel %vm494, %v3905, 0
        %v3940 = vsel %vm494, %v3906, 0
        %3942 = vmatprep.subr.bf16.mxu0 0
        %3943 = vmatpush1.bf16.msra.mxu0 %v3926
        %3944 = vmatprep.subr.bf16.mxu0 0
        %3945 = vmatpush1.bf16.msra.mxu0 %v3927
        %3946 = vmatprep.subr.bf16.mxu0 0
        %3947 = vmatpush1.bf16.msra.mxu0 0
        %3948 = vmatprep.subr.bf16.mxu0 0
        %3949 = vmatpush1.bf16.msra.mxu0 0
        %3950 = vmatprep.subr.bf16.mxu0 0
        %3951 = vmatpush1.bf16.msra.mxu0 0
        %3952 = vmatprep.subr.bf16.mxu0 0
        %3953 = vmatpush1.bf16.msra.mxu0 0
        %3954 = vmatprep.subr.bf16.mxu0 0
        %3955 = vmatpush1.bf16.msra.mxu0 0
        %3956 = vmatprep.subr.bf16.mxu0 0
        %3957 = vmatpush1.bf16.msra.mxu0 0
        %3958 = vmatprep.subr.bf16.mxu0 0
        %3959 = vmatpush1.bf16.msra.mxu0 0
        %3960 = vmatprep.subr.bf16.mxu0 0
        %3961 = vmatpush1.bf16.msra.mxu0 0
        %3962 = vmatprep.subr.bf16.mxu0 0
        %3963 = vmatpush1.bf16.msra.mxu0 0
        %3964 = vmatprep.subr.bf16.mxu0 0
        %3965 = vmatpush1.bf16.msra.mxu0 0
        %3966 = vmatprep.subr.bf16.mxu0 0
        %3967 = vmatpush1.bf16.msra.mxu0 0
        %3968 = vmatprep.subr.bf16.mxu0 0
        %3969 = vmatpush1.bf16.msra.mxu0 0
        %3970 = vmatprep.subr.bf16.mxu0 0
        %3971 = vmatpush1.bf16.msra.mxu0 0
        %3972 = vmatprep.subr.bf16.mxu0 0
        %3973 = vmatpush1.bf16.msra.mxu0 0
        %3974 = vmatprep.mubr.bf16.mxu0 0
        %3975 = vmatmul.mubr.bf16.gmra.mrb[0].mxu0 %v3931
        %v3976 = vpop.f32.mrb[0].mxu0
        %v3977 = vadd.f32 %v3916, %v3976
        %v3978 = vpop.f32.mrb[0].mxu0
        %v3979 = vpop.f32.mrb[0].mxu0
        %v3980 = vadd.f32 %v3916, %v3979
        %v3981 = vpop.f32.mrb[0].mxu0
        %3982 = vmatprep.mubr.bf16.mxu0 0
        %3983 = vmatmul.mubr.bf16.gmra.mrb[0].mxu0 %v3934
        %v3984 = vpop.f32.mrb[0].mxu0
        %v3985 = vadd.f32 %v3916, %v3984
        %v3986 = vpop.f32.mrb[0].mxu0
        %v3987 = vpop.f32.mrb[0].mxu0
        %v3988 = vadd.f32 %v3916, %v3987
        %v3989 = vpop.f32.mrb[0].mxu0
        %3990 = vmatprep.mubr.bf16.mxu0 0
        %3991 = vmatmul.mubr.bf16.gmra.mrb[0].mxu0 %v3937
        %v3992 = vpop.f32.mrb[0].mxu0
        %v3993 = vadd.f32 %v3916, %v3992
        %v3994 = vpop.f32.mrb[0].mxu0
        %v3995 = vpop.f32.mrb[0].mxu0
        %v3996 = vadd.f32 %v3916, %v3995
        %v3997 = vpop.f32.mrb[0].mxu0
        %3998 = vmatprep.mubr.bf16.mxu0 0
        %3999 = vmatmul.mubr.bf16.gmra.mrb[0].mxu0 %v3940
        %v4000 = vpop.f32.mrb[0].mxu0
        %v4001 = vadd.f32 %v3916, %v4000
        %v4002 = vpop.f32.mrb[0].mxu0
        %v4003 = vpop.f32.mrb[0].mxu0
        %v4004 = vadd.f32 %v3916, %v4003
        %v4005 = vpop.f32.mrb[0].mxu0
        %4006 = vdwg.mxu0
        %v4007 = vadd.f32 %v3895, %v3977
        %v4008 = vadd.f32 %v3896, %v3980
        %v4009 = vadd.f32 %v3897, %v3985
        %v4010 = vadd.f32 %v3898, %v3988
        %v4011 = vadd.f32 %v3899, %v3993
        %v4012 = vadd.f32 %v3900, %v3996
        %v4013 = vadd.f32 %v3901, %v4001
        %v4014 = vadd.f32 %v3902, %v4004
        %4015 = vst.msk [vmem:[%s487] sm:$0xff] %vm499, %v4007
        %4016 = vst.msk [vmem:[%s487 + $0x8] sm:$0xff] %vm499, %v4008
        %4017 = vst.msk [vmem:[%s487 + $0x10] sm:$0xff] %vm499, %v4009
        %4018 = vst.msk [vmem:[%s487 + $0x18] sm:$0xff] %vm499, %v4010
        %4019 = vst.msk [vmem:[%s487 + $0x20] sm:$0xff] %vm499, %v4011
        %4020 = vst.msk [vmem:[%s487 + $0x28] sm:$0xff] %vm499, %v4012
        %4021 = vst.msk [vmem:[%s487 + $0x30] sm:$0xff] %vm499, %v4013
        %4022 = vst.msk [vmem:[%s487 + $0x38] sm:$0xff] %vm499, %v4014
        %s4023 = sand.u32 %s357, 1
        %s4024 = scalar_lea.sflag [#allocation5], %s4023
        %s4025 = sand.u32 %s357, 1
        %s4026 = smul.addr %s4025, 64
        %s4027 = scalar_lea.vmem [#allocation4], %s4026
        // Predicated region
        $region81: #{residual_block_forward.1} parent=79 // pred_check
          %p4028 = pneg %p367
        $region82: #{residual_block_forward.1} parent=79 // pred_check_branch
          %4030 = sbr.rel (%p4028) target = $region84
        $region83: #{residual_block_forward.1} parent=79 // pred_region
          %s4032 = ssub.s32 1024, 1024
          %4033 = vsyncadd %s4024, %s4032
          %s4034 = smul.addr %s29, 8
          %s4035 = smul.addr %s4034, 128
          %s4036 = scalar_lea.hbm %s15, %s4035
          %s4037 = sshll.u32 %s4027, 4
          %s4038 = int_to_ptr.vmem [resolvable:$true] %s4037
          %4043 = dma.vmem_to_hbm [thread:$0]  %s4038, 1024, %s4036, %s4024, 128, 128, 8
        $region84: #{residual_block_forward.1} parent=79 // pred_fallthru
          _
      $region80: #{residual_block_forward.1} parent=5 // pred_fallthru
        _
      %p4044 = scmp.le.s32.totalorder 2, %s24
      // Predicated region
      $region85: #{residual_block_forward.1} parent=5 // pred_check
        %p4045 = pneg %p4044
      $region86: #{residual_block_forward.1} parent=5 // pred_check_branch
        %4047 = sbr.rel (%p4045) target = $region88
      $region87: #{residual_block_forward.1} parent=5 // pred_region
        %s4048 = ssub.s32 %s24, 2
        // Predicated region
        $region89: #{residual_block_forward.1} parent=87 // pred_check
          %p4049 = pneg %p373
        $region90: #{residual_block_forward.1} parent=87 // pred_check_branch
          %4051 = sbr.rel (%p4049) target = $region92
        $region91: #{residual_block_forward.1} parent=87 // pred_region
          %s4052 = sand.u32 %s358, 1
          %s4053 = scalar_lea.sflag [#allocation5], %s4052
          %s4054 = sand.u32 %s358, 1
          %s4055 = smul.addr %s4054, 64
          %s4056 = scalar_lea.vmem [#allocation4], %s4055
          %4057 = dma.done %s4053, 1024
        $region92: #{residual_block_forward.1} parent=87 // pred_fallthru
          _
      $region88: #{residual_block_forward.1} parent=5 // pred_fallthru
        _
    $region6: #{residual_block_forward.1} parent=1 // loop_footer
      %s28 = sadd.s32 1, %s24
    $region7: #{residual_block_forward.1} parent=1 // loop_footer_branch
      %23 = sbr.rel target = $region3
    $region8: #{residual_block_forward.1} parent=1 // loop_exit
      _
    %4058 = vsyncpa [#allocation5], 1
    %s4059 = scalar_lea.sflag [#allocation5], 1
    %4060 = vsyncpa %s4059, 1

</llo_original>
